<compile_context>
chip_gen: v5e
topology: v5e:2x2
jax: 0.10.0
libtpu: 0.0.40
codegen_flags: <defaults>
</compile_context>

<pallas_src>
import jax
import jax.numpy as jnp
from jax import lax
from jax.experimental import pallas as pl
from jax.experimental.pallas import tpu as pltpu

GROUP = 8        # feature rows per aligned (8, TM) load of x
TM_MAX = 512     # max batch lanes per grid step (amortizes the serial chain)


def net_kernel(ab_ref, xs_ref, w1t_ref, b1_ref, w2t_ref, b2_ref, out_ref, wmat_ref):
    """One batch tile: DDK recurrence + fc1 + sigmoid + fc (batch on lanes).

    ab_ref   : SMEM (2,)    f32  [alpha, beta]
    xs_ref   : VMEM (N, TM) f32  feature-major, shifted: xs[k] == x[:, k-1]
    w1t_ref  : VMEM (H, N)  f32  fc1 weight (out, in)
    b1_ref   : VMEM (H, 1)  f32
    w2t_ref  : VMEM (C, H)  f32  fc  weight (out, in)
    b2_ref   : VMEM (C, 1)  f32
    out_ref  : VMEM (C, TM) f32  logits^T (lane-dense writeback)
    wmat_ref : VMEM (N, TM) f32  scratch: DDK weight matrix, feature-major
    """
    n_feat, tm = xs_ref.shape
    alpha = ab_ref[0]
    beta = ab_ref[1]

    # W[:, 0] = 1 -- carried in vregs across the whole recurrence; stored once so
    # the fc1 matmul can read the full (N, TM) weight matrix.
    prev = jnp.ones((1, tm), jnp.float32)
    wmat_ref[pl.ds(0, 1), :] = prev

    # Fully unrolled 127-step serial recurrence.  Per step the dependent path is
    #   EUP approx-reciprocal -> (alpha*r, 2 - prev*r) -> mul -> add
    # beta*x is precomputed per group (off the chain) and (prev - bx) runs in
    # parallel with the reciprocal; per-row stores are also off the chain.
    for g in range(n_feat // GROUP):
        base = g * GROUP
        bx_blk = beta * xs_ref[pl.ds(base, GROUP), :]      # aligned (8, TM) load + vmul
        for j in range(GROUP):
            k = base + j
            if k == 0:
                continue                                   # column 0 handled above
            bx_row = bx_blk[j:j + 1, :]                    # == beta * x[:, k-1]
            r = pl.reciprocal(prev, approx=True)           # EUP slot
            t = prev - bx_row                              # parallel with r
            # exact: prev + alpha/prev - beta*x ; 1/prev ~= r*(2 - prev*r) (Newton)
            new = t + (alpha * r) * (2.0 - prev * r)
            wmat_ref[pl.ds(k, 1), :] = new
            prev = new

    # Epilogue with batch on the lane axis: intermediates and output lane-dense.
    h = lax.dot_general(w1t_ref[...], wmat_ref[...], (((1,), (0,)), ((), ())),
                        preferred_element_type=jnp.float32)            # (H, TM)
    h = jax.nn.sigmoid(h + b1_ref[...])
    out_ref[...] = lax.dot_general(w2t_ref[...], h, (((1,), (0,)), ((), ())),
                                   preferred_element_type=jnp.float32) + b2_ref[...]


def _round_up(a, b):
    return ((a + b - 1) // b) * b


@jax.jit
def net_forward(x, target, alpha, beta, w1, b1, w2, b2):
    """x: (M, 128) f32. Returns (logits (M, num_class), target) like Net.forward."""
    M, N = x.shape
    H = w1.shape[1]
    C = w2.shape[1]
    assert N % GROUP == 0

    # Batch tile on the lane axis: one wide tile amortizes the fixed serial-chain
    # latency; larger batches get multiple grid steps, sharded across both
    # TensorCores on v7x via the "parallel" grid axis.
    m128 = _round_up(M, 128)
    tm = min(TM_MAX, m128)
    m_pad = _round_up(M, tm)

    # Feature-major layout so the recurrence walks the sublane axis; shift by one
    # feature so xs[k] == x[:, k-1] and every in-kernel load is (8, TM)-aligned.
    # Padded batch lanes see x == 0; with W0 = 1 and alpha > 0 their W stays >= 1
    # (no divide-by-zero) and they are sliced away below.
    # TODO(synk): the transpose/shift/pad could be folded into the kernel (the XLU
    #             is idle under the serial chain); kept in the wrapper for safety.
    xt = jnp.transpose(x).astype(jnp.float32)                              # (N, M)
    xs = jnp.concatenate([jnp.zeros((1, M), jnp.float32), xt[:-1, :]], axis=0)
    xs = jnp.pad(xs, ((0, 0), (0, m_pad - M)))

    ab = jnp.stack([alpha, beta]).astype(jnp.float32)                      # (2,)
    w1t = jnp.transpose(w1).astype(jnp.float32)                            # (H, N)
    w2t = jnp.transpose(w2).astype(jnp.float32)                            # (C, H)
    b1c = b1.reshape(H, 1).astype(jnp.float32)
    b2c = b2.reshape(C, 1).astype(jnp.float32)

    out_t = pl.pallas_call(
        net_kernel,
        out_shape=jax.ShapeDtypeStruct((C, m_pad), jnp.float32),
        grid=(m_pad // tm,),
        in_specs=[
            pl.BlockSpec(memory_space=pltpu.MemorySpace.SMEM),     # [alpha, beta]
            pl.BlockSpec((N, tm), lambda b: (0, b)),               # xs (feature-major)
            pl.BlockSpec((H, N), lambda b: (0, 0)),                # fc1 weight^T
            pl.BlockSpec((H, 1), lambda b: (0, 0)),                # fc1 bias (column)
            pl.BlockSpec((C, H), lambda b: (0, 0)),                # fc  weight^T
            pl.BlockSpec((C, 1), lambda b: (0, 0)),                # fc  bias (column)
        ],
        out_specs=pl.BlockSpec((C, tm), lambda b: (0, b)),
        scratch_shapes=[pltpu.VMEM((N, tm), jnp.float32)],         # DDK weight matrix
        compiler_params=pltpu.CompilerParams(
            dimension_semantics=("parallel",)),
    )(ab, xs, w1t, b1c, w2t, b2c)

    return jnp.transpose(out_t[:, :M]), target


def net_forward_reference(x, alpha, beta, w1, b1, w2, b2):
    """Pure-JAX reference of the PyTorch forward (for validation)."""
    M, N = x.shape

    def body(k, w):
        temp = 1.0 / w[:, k - 1]
        new = w[:, k - 1] + alpha * temp - beta * x[:, k - 1]
        return w.at[:, k].set(new)

    w = lax.fori_loop(1, N, body, jnp.ones((M, N), jnp.float32))
    h = jax.nn.sigmoid(w @ w1 + b1)
    return h @ w2 + b2


if __name__ == "__main__":
    key = jax.random.PRNGKey(0)
    k_x, k_a, k_b, k_w1, k_b1, k_w2, k_b2 = jax.random.split(key, 7)

    M, N, H, C = 8, 128, 16, 4            # batch, in_features, hidden, num_class

    # Keep the DDK recurrence numerically tame (W stays well away from zero) so
    # the exact-1/W reference and the EUP-reciprocal kernel agree to 1e-3 over
    # the 127 serial steps; near-zero W crossings are chaotic for both.
    x = 0.3 * jax.random.normal(k_x, (M, N), dtype=jnp.float32)
    target = jnp.arange(M, dtype=jnp.int32) % C

    alpha = jax.random.uniform(k_a, (), jnp.float32, 0.2, 0.8)
    beta = jax.random.uniform(k_b, (), jnp.float32, 0.01, 0.2)
    w1 = jax.random.normal(k_w1, (N, H), dtype=jnp.float32) * 0.1   # fc1 (in, out)
    b1 = jax.random.normal(k_b1, (H,), dtype=jnp.float32) * 0.1
    w2 = jax.random.normal(k_w2, (H, C), dtype=jnp.float32) * 0.1   # fc  (in, out)
    b2 = jax.random.normal(k_b2, (C,), dtype=jnp.float32) * 0.1

    out, tgt = net_forward(x, target, alpha, beta, w1, b1, w2, b2)
    out = jax.block_until_ready(out)

    ref = jax.block_until_ready(
        net_forward_reference(x, alpha, beta, w1, b1, w2, b2))

    assert out.shape == (M, C)
    max_diff = float(jnp.max(jnp.abs(out - ref)))
    assert jnp.allclose(out, ref, rtol=1e-3, atol=1e-3), f"max abs diff {max_diff}"
    assert jnp.array_equal(tgt, target)

    print("KERNEL_OK")
</pallas_src>

<mosaic_0001>
module attributes {stable_mosaic.version = 11 : i64} {
  func.func @net_kernel(%arg0: i32, %arg1: memref<2xf32, #tpu.memory_space<smem>>, %arg2: memref<128x128xf32, #tpu.memory_space<vmem>>, %arg3: memref<16x128xf32, #tpu.memory_space<vmem>>, %arg4: memref<16x1xf32, #tpu.memory_space<vmem>>, %arg5: memref<4x16xf32, #tpu.memory_space<vmem>>, %arg6: memref<4x1xf32, #tpu.memory_space<vmem>>, %arg7: memref<4x128xf32, #tpu.memory_space<vmem>>, %arg8: memref<128x128xf32, #tpu.memory_space<vmem>>) attributes {dimension_semantics = [#tpu.dimension_semantics<parallel>], iteration_bounds = array<i64: 1>, scalar_prefetch = 0 : i64, scratch_operands = 1 : i64, tpu.core_type = #tpu.core_type<tc>, window_params = [{transform_indices = @transform_0, window_bounds = array<i64: 2>}, {transform_indices = @transform_1, window_bounds = array<i64: 128, 128>}, {pipeline_mode = #tpu.pipeline_mode<synchronous>, transform_indices = @transform_2, window_bounds = array<i64: 16, 128>}, {pipeline_mode = #tpu.pipeline_mode<synchronous>, transform_indices = @transform_3, window_bounds = array<i64: 16, 1>}, {pipeline_mode = #tpu.pipeline_mode<synchronous>, transform_indices = @transform_4, window_bounds = array<i64: 4, 16>}, {pipeline_mode = #tpu.pipeline_mode<synchronous>, transform_indices = @transform_5, window_bounds = array<i64: 4, 1>}, {transform_indices = @transform_6, window_bounds = array<i64: 4, 128>}]} {
    %c0 = arith.constant 0 : index
    %0 = memref.load %arg1[%c0] : memref<2xf32, #tpu.memory_space<smem>>
    %c1 = arith.constant 1 : index
    %1 = memref.load %arg1[%c1] : memref<2xf32, #tpu.memory_space<smem>>
    %cst = arith.constant 1.000000e+00 : f32
    %2 = vector.broadcast %cst : f32 to vector<1x128xf32>
    %c0_0 = arith.constant 0 : index
    %c0_1 = arith.constant 0 : index
    %3 = vector.load %arg8[%c0_0, %c0_1] : memref<128x128xf32, #tpu.memory_space<vmem>>, vector<1x128xf32>
    tpu.vector_store %arg8[%c0_0, %c0_1], %2 {strides = array<i32>} : memref<128x128xf32, #tpu.memory_space<vmem>>, vector<1x128xf32>,
    %c0_2 = arith.constant 0 : index
    %c0_3 = arith.constant 0 : index
    %4 = vector.load %arg2[%c0_2, %c0_3] : memref<128x128xf32, #tpu.memory_space<vmem>>, vector<8x128xf32>
    %5 = vector.broadcast %1 : f32 to vector<8x128xf32>
    %6 = arith.mulf %5, %4 : vector<8x128xf32>
    %7 = vector.extract_strided_slice %6 {offsets = [1, 0], sizes = [1, 128], strides = [1, 1]} : vector<8x128xf32> to vector<1x128xf32>
    %8 = tpu.reciprocal %2 {approx = true} : vector<1x128xf32> -> vector<1x128xf32>
    %9 = arith.subf %2, %7 : vector<1x128xf32>
    %10 = vector.broadcast %0 : f32 to vector<1x128xf32>
    %11 = arith.mulf %10, %8 : vector<1x128xf32>
    %12 = arith.mulf %2, %8 : vector<1x128xf32>
    %cst_4 = arith.constant 2.000000e+00 : f32
    %13 = vector.broadcast %cst_4 : f32 to vector<1x128xf32>
    %14 = arith.subf %13, %12 : vector<1x128xf32>
    %15 = arith.mulf %11, %14 : vector<1x128xf32>
    %16 = arith.addf %9, %15 : vector<1x128xf32>
    %c1_5 = arith.constant 1 : index
    %c0_6 = arith.constant 0 : index
    %17 = vector.load %arg8[%c1_5, %c0_6] : memref<128x128xf32, #tpu.memory_space<vmem>>, vector<1x128xf32>
    tpu.vector_store %arg8[%c1_5, %c0_6], %16 {strides = array<i32>} : memref<128x128xf32, #tpu.memory_space<vmem>>, vector<1x128xf32>,
    %18 = vector.extract_strided_slice %6 {offsets = [2, 0], sizes = [1, 128], strides = [1, 1]} : vector<8x128xf32> to vector<1x128xf32>
    %19 = tpu.reciprocal %16 {approx = true} : vector<1x128xf32> -> vector<1x128xf32>
    %20 = arith.subf %16, %18 : vector<1x128xf32>
    %21 = vector.broadcast %0 : f32 to vector<1x128xf32>
    %22 = arith.mulf %21, %19 : vector<1x128xf32>
    %23 = arith.mulf %16, %19 : vector<1x128xf32>
    %cst_7 = arith.constant 2.000000e+00 : f32
    %24 = vector.broadcast %cst_7 : f32 to vector<1x128xf32>
    %25 = arith.subf %24, %23 : vector<1x128xf32>
    %26 = arith.mulf %22, %25 : vector<1x128xf32>
    %27 = arith.addf %20, %26 : vector<1x128xf32>
    %c2 = arith.constant 2 : index
    %c0_8 = arith.constant 0 : index
    %28 = vector.load %arg8[%c2, %c0_8] : memref<128x128xf32, #tpu.memory_space<vmem>>, vector<1x128xf32>
    tpu.vector_store %arg8[%c2, %c0_8], %27 {strides = array<i32>} : memref<128x128xf32, #tpu.memory_space<vmem>>, vector<1x128xf32>,
    %29 = vector.extract_strided_slice %6 {offsets = [3, 0], sizes = [1, 128], strides = [1, 1]} : vector<8x128xf32> to vector<1x128xf32>
    %30 = tpu.reciprocal %27 {approx = true} : vector<1x128xf32> -> vector<1x128xf32>
    %31 = arith.subf %27, %29 : vector<1x128xf32>
    %32 = vector.broadcast %0 : f32 to vector<1x128xf32>
    %33 = arith.mulf %32, %30 : vector<1x128xf32>
    %34 = arith.mulf %27, %30 : vector<1x128xf32>
    %cst_9 = arith.constant 2.000000e+00 : f32
    %35 = vector.broadcast %cst_9 : f32 to vector<1x128xf32>
    %36 = arith.subf %35, %34 : vector<1x128xf32>
    %37 = arith.mulf %33, %36 : vector<1x128xf32>
    %38 = arith.addf %31, %37 : vector<1x128xf32>
    %c3 = arith.constant 3 : index
    %c0_10 = arith.constant 0 : index
    %39 = vector.load %arg8[%c3, %c0_10] : memref<128x128xf32, #tpu.memory_space<vmem>>, vector<1x128xf32>
    tpu.vector_store %arg8[%c3, %c0_10], %38 {strides = array<i32>} : memref<128x128xf32, #tpu.memory_space<vmem>>, vector<1x128xf32>,
    %40 = vector.extract_strided_slice %6 {offsets = [4, 0], sizes = [1, 128], strides = [1, 1]} : vector<8x128xf32> to vector<1x128xf32>
    %41 = tpu.reciprocal %38 {approx = true} : vector<1x128xf32> -> vector<1x128xf32>
    %42 = arith.subf %38, %40 : vector<1x128xf32>
    %43 = vector.broadcast %0 : f32 to vector<1x128xf32>
    %44 = arith.mulf %43, %41 : vector<1x128xf32>
    %45 = arith.mulf %38, %41 : vector<1x128xf32>
    %cst_11 = arith.constant 2.000000e+00 : f32
    %46 = vector.broadcast %cst_11 : f32 to vector<1x128xf32>
    %47 = arith.subf %46, %45 : vector<1x128xf32>
    %48 = arith.mulf %44, %47 : vector<1x128xf32>
    %49 = arith.addf %42, %48 : vector<1x128xf32>
    %c4 = arith.constant 4 : index
    %c0_12 = arith.constant 0 : index
    %50 = vector.load %arg8[%c4, %c0_12] : memref<128x128xf32, #tpu.memory_space<vmem>>, vector<1x128xf32>
    tpu.vector_store %arg8[%c4, %c0_12], %49 {strides = array<i32>} : memref<128x128xf32, #tpu.memory_space<vmem>>, vector<1x128xf32>,
    %51 = vector.extract_strided_slice %6 {offsets = [5, 0], sizes = [1, 128], strides = [1, 1]} : vector<8x128xf32> to vector<1x128xf32>
    %52 = tpu.reciprocal %49 {approx = true} : vector<1x128xf32> -> vector<1x128xf32>
    %53 = arith.subf %49, %51 : vector<1x128xf32>
    %54 = vector.broadcast %0 : f32 to vector<1x128xf32>
    %55 = arith.mulf %54, %52 : vector<1x128xf32>
    %56 = arith.mulf %49, %52 : vector<1x128xf32>
    %cst_13 = arith.constant 2.000000e+00 : f32
    %57 = vector.broadcast %cst_13 : f32 to vector<1x128xf32>
    %58 = arith.subf %57, %56 : vector<1x128xf32>
    %59 = arith.mulf %55, %58 : vector<1x128xf32>
    %60 = arith.addf %53, %59 : vector<1x128xf32>
    %c5 = arith.constant 5 : index
    %c0_14 = arith.constant 0 : index
    %61 = vector.load %arg8[%c5, %c0_14] : memref<128x128xf32, #tpu.memory_space<vmem>>, vector<1x128xf32>
    tpu.vector_store %arg8[%c5, %c0_14], %60 {strides = array<i32>} : memref<128x128xf32, #tpu.memory_space<vmem>>, vector<1x128xf32>,
    %62 = vector.extract_strided_slice %6 {offsets = [6, 0], sizes = [1, 128], strides = [1, 1]} : vector<8x128xf32> to vector<1x128xf32>
    %63 = tpu.reciprocal %60 {approx = true} : vector<1x128xf32> -> vector<1x128xf32>
    %64 = arith.subf %60, %62 : vector<1x128xf32>
    %65 = vector.broadcast %0 : f32 to vector<1x128xf32>
    %66 = arith.mulf %65, %63 : vector<1x128xf32>
    %67 = arith.mulf %60, %63 : vector<1x128xf32>
    %cst_15 = arith.constant 2.000000e+00 : f32
    %68 = vector.broadcast %cst_15 : f32 to vector<1x128xf32>
    %69 = arith.subf %68, %67 : vector<1x128xf32>
    %70 = arith.mulf %66, %69 : vector<1x128xf32>
    %71 = arith.addf %64, %70 : vector<1x128xf32>
    %c6 = arith.constant 6 : index
    %c0_16 = arith.constant 0 : index
    %72 = vector.load %arg8[%c6, %c0_16] : memref<128x128xf32, #tpu.memory_space<vmem>>, vector<1x128xf32>
    tpu.vector_store %arg8[%c6, %c0_16], %71 {strides = array<i32>} : memref<128x128xf32, #tpu.memory_space<vmem>>, vector<1x128xf32>,
    %73 = vector.extract_strided_slice %6 {offsets = [7, 0], sizes = [1, 128], strides = [1, 1]} : vector<8x128xf32> to vector<1x128xf32>
    %74 = tpu.reciprocal %71 {approx = true} : vector<1x128xf32> -> vector<1x128xf32>
    %75 = arith.subf %71, %73 : vector<1x128xf32>
    %76 = vector.broadcast %0 : f32 to vector<1x128xf32>
    %77 = arith.mulf %76, %74 : vector<1x128xf32>
    %78 = arith.mulf %71, %74 : vector<1x128xf32>
    %cst_17 = arith.constant 2.000000e+00 : f32
    %79 = vector.broadcast %cst_17 : f32 to vector<1x128xf32>
    %80 = arith.subf %79, %78 : vector<1x128xf32>
    %81 = arith.mulf %77, %80 : vector<1x128xf32>
    %82 = arith.addf %75, %81 : vector<1x128xf32>
    %c7 = arith.constant 7 : index
    %c0_18 = arith.constant 0 : index
    %83 = vector.load %arg8[%c7, %c0_18] : memref<128x128xf32, #tpu.memory_space<vmem>>, vector<1x128xf32>
    tpu.vector_store %arg8[%c7, %c0_18], %82 {strides = array<i32>} : memref<128x128xf32, #tpu.memory_space<vmem>>, vector<1x128xf32>,
    %c8 = arith.constant 8 : index
    %c0_19 = arith.constant 0 : index
    %84 = vector.load %arg2[%c8, %c0_19] : memref<128x128xf32, #tpu.memory_space<vmem>>, vector<8x128xf32>
    %85 = vector.broadcast %1 : f32 to vector<8x128xf32>
    %86 = arith.mulf %85, %84 : vector<8x128xf32>
    %87 = vector.extract_strided_slice %86 {offsets = [0, 0], sizes = [1, 128], strides = [1, 1]} : vector<8x128xf32> to vector<1x128xf32>
    %88 = tpu.reciprocal %82 {approx = true} : vector<1x128xf32> -> vector<1x128xf32>
    %89 = arith.subf %82, %87 : vector<1x128xf32>
    %90 = vector.broadcast %0 : f32 to vector<1x128xf32>
    %91 = arith.mulf %90, %88 : vector<1x128xf32>
    %92 = arith.mulf %82, %88 : vector<1x128xf32>
    %cst_20 = arith.constant 2.000000e+00 : f32
    %93 = vector.broadcast %cst_20 : f32 to vector<1x128xf32>
    %94 = arith.subf %93, %92 : vector<1x128xf32>
    %95 = arith.mulf %91, %94 : vector<1x128xf32>
    %96 = arith.addf %89, %95 : vector<1x128xf32>
    %c8_21 = arith.constant 8 : index
    %c0_22 = arith.constant 0 : index
    %97 = vector.load %arg8[%c8_21, %c0_22] : memref<128x128xf32, #tpu.memory_space<vmem>>, vector<1x128xf32>
    tpu.vector_store %arg8[%c8_21, %c0_22], %96 {strides = array<i32>} : memref<128x128xf32, #tpu.memory_space<vmem>>, vector<1x128xf32>,
    %98 = vector.extract_strided_slice %86 {offsets = [1, 0], sizes = [1, 128], strides = [1, 1]} : vector<8x128xf32> to vector<1x128xf32>
    %99 = tpu.reciprocal %96 {approx = true} : vector<1x128xf32> -> vector<1x128xf32>
    %100 = arith.subf %96, %98 : vector<1x128xf32>
    %101 = vector.broadcast %0 : f32 to vector<1x128xf32>
    %102 = arith.mulf %101, %99 : vector<1x128xf32>
    %103 = arith.mulf %96, %99 : vector<1x128xf32>
    %cst_23 = arith.constant 2.000000e+00 : f32
    %104 = vector.broadcast %cst_23 : f32 to vector<1x128xf32>
    %105 = arith.subf %104, %103 : vector<1x128xf32>
    %106 = arith.mulf %102, %105 : vector<1x128xf32>
    %107 = arith.addf %100, %106 : vector<1x128xf32>
    %c9 = arith.constant 9 : index
    %c0_24 = arith.constant 0 : index
    %108 = vector.load %arg8[%c9, %c0_24] : memref<128x128xf32, #tpu.memory_space<vmem>>, vector<1x128xf32>
    tpu.vector_store %arg8[%c9, %c0_24], %107 {strides = array<i32>} : memref<128x128xf32, #tpu.memory_space<vmem>>, vector<1x128xf32>,
    %109 = vector.extract_strided_slice %86 {offsets = [2, 0], sizes = [1, 128], strides = [1, 1]} : vector<8x128xf32> to vector<1x128xf32>
    %110 = tpu.reciprocal %107 {approx = true} : vector<1x128xf32> -> vector<1x128xf32>
    %111 = arith.subf %107, %109 : vector<1x128xf32>
    %112 = vector.broadcast %0 : f32 to vector<1x128xf32>
    %113 = arith.mulf %112, %110 : vector<1x128xf32>
    %114 = arith.mulf %107, %110 : vector<1x128xf32>
    %cst_25 = arith.constant 2.000000e+00 : f32
    %115 = vector.broadcast %cst_25 : f32 to vector<1x128xf32>
    %116 = arith.subf %115, %114 : vector<1x128xf32>
    %117 = arith.mulf %113, %116 : vector<1x128xf32>
    %118 = arith.addf %111, %117 : vector<1x128xf32>
    %c10 = arith.constant 10 : index
    %c0_26 = arith.constant 0 : index
    %119 = vector.load %arg8[%c10, %c0_26] : memref<128x128xf32, #tpu.memory_space<vmem>>, vector<1x128xf32>
    tpu.vector_store %arg8[%c10, %c0_26], %118 {strides = array<i32>} : memref<128x128xf32, #tpu.memory_space<vmem>>, vector<1x128xf32>,
    %120 = vector.extract_strided_slice %86 {offsets = [3, 0], sizes = [1, 128], strides = [1, 1]} : vector<8x128xf32> to vector<1x128xf32>
    %121 = tpu.reciprocal %118 {approx = true} : vector<1x128xf32> -> vector<1x128xf32>
    %122 = arith.subf %118, %120 : vector<1x128xf32>
    %123 = vector.broadcast %0 : f32 to vector<1x128xf32>
    %124 = arith.mulf %123, %121 : vector<1x128xf32>
    %125 = arith.mulf %118, %121 : vector<1x128xf32>
    %cst_27 = arith.constant 2.000000e+00 : f32
    %126 = vector.broadcast %cst_27 : f32 to vector<1x128xf32>
    %127 = arith.subf %126, %125 : vector<1x128xf32>
    %128 = arith.mulf %124, %127 : vector<1x128xf32>
    %129 = arith.addf %122, %128 : vector<1x128xf32>
    %c11 = arith.constant 11 : index
    %c0_28 = arith.constant 0 : index
    %130 = vector.load %arg8[%c11, %c0_28] : memref<128x128xf32, #tpu.memory_space<vmem>>, vector<1x128xf32>
    tpu.vector_store %arg8[%c11, %c0_28], %129 {strides = array<i32>} : memref<128x128xf32, #tpu.memory_space<vmem>>, vector<1x128xf32>,
    %131 = vector.extract_strided_slice %86 {offsets = [4, 0], sizes = [1, 128], strides = [1, 1]} : vector<8x128xf32> to vector<1x128xf32>
    %132 = tpu.reciprocal %129 {approx = true} : vector<1x128xf32> -> vector<1x128xf32>
    %133 = arith.subf %129, %131 : vector<1x128xf32>
    %134 = vector.broadcast %0 : f32 to vector<1x128xf32>
    %135 = arith.mulf %134, %132 : vector<1x128xf32>
    %136 = arith.mulf %129, %132 : vector<1x128xf32>
    %cst_29 = arith.constant 2.000000e+00 : f32
    %137 = vector.broadcast %cst_29 : f32 to vector<1x128xf32>
    %138 = arith.subf %137, %136 : vector<1x128xf32>
    %139 = arith.mulf %135, %138 : vector<1x128xf32>
    %140 = arith.addf %133, %139 : vector<1x128xf32>
    %c12 = arith.constant 12 : index
    %c0_30 = arith.constant 0 : index
    %141 = vector.load %arg8[%c12, %c0_30] : memref<128x128xf32, #tpu.memory_space<vmem>>, vector<1x128xf32>
    tpu.vector_store %arg8[%c12, %c0_30], %140 {strides = array<i32>} : memref<128x128xf32, #tpu.memory_space<vmem>>, vector<1x128xf32>,
    %142 = vector.extract_strided_slice %86 {offsets = [5, 0], sizes = [1, 128], strides = [1, 1]} : vector<8x128xf32> to vector<1x128xf32>
    %143 = tpu.reciprocal %140 {approx = true} : vector<1x128xf32> -> vector<1x128xf32>
    %144 = arith.subf %140, %142 : vector<1x128xf32>
    %145 = vector.broadcast %0 : f32 to vector<1x128xf32>
    %146 = arith.mulf %145, %143 : vector<1x128xf32>
    %147 = arith.mulf %140, %143 : vector<1x128xf32>
    %cst_31 = arith.constant 2.000000e+00 : f32
    %148 = vector.broadcast %cst_31 : f32 to vector<1x128xf32>
    %149 = arith.subf %148, %147 : vector<1x128xf32>
    %150 = arith.mulf %146, %149 : vector<1x128xf32>
    %151 = arith.addf %144, %150 : vector<1x128xf32>
    %c13 = arith.constant 13 : index
    %c0_32 = arith.constant 0 : index
    %152 = vector.load %arg8[%c13, %c0_32] : memref<128x128xf32, #tpu.memory_space<vmem>>, vector<1x128xf32>
    tpu.vector_store %arg8[%c13, %c0_32], %151 {strides = array<i32>} : memref<128x128xf32, #tpu.memory_space<vmem>>, vector<1x128xf32>,
    %153 = vector.extract_strided_slice %86 {offsets = [6, 0], sizes = [1, 128], strides = [1, 1]} : vector<8x128xf32> to vector<1x128xf32>
    %154 = tpu.reciprocal %151 {approx = true} : vector<1x128xf32> -> vector<1x128xf32>
    %155 = arith.subf %151, %153 : vector<1x128xf32>
    %156 = vector.broadcast %0 : f32 to vector<1x128xf32>
    %157 = arith.mulf %156, %154 : vector<1x128xf32>
    %158 = arith.mulf %151, %154 : vector<1x128xf32>
    %cst_33 = arith.constant 2.000000e+00 : f32
    %159 = vector.broadcast %cst_33 : f32 to vector<1x128xf32>
    %160 = arith.subf %159, %158 : vector<1x128xf32>
    %161 = arith.mulf %157, %160 : vector<1x128xf32>
    %162 = arith.addf %155, %161 : vector<1x128xf32>
    %c14 = arith.constant 14 : index
    %c0_34 = arith.constant 0 : index
    %163 = vector.load %arg8[%c14, %c0_34] : memref<128x128xf32, #tpu.memory_space<vmem>>, vector<1x128xf32>
    tpu.vector_store %arg8[%c14, %c0_34], %162 {strides = array<i32>} : memref<128x128xf32, #tpu.memory_space<vmem>>, vector<1x128xf32>,
    %164 = vector.extract_strided_slice %86 {offsets = [7, 0], sizes = [1, 128], strides = [1, 1]} : vector<8x128xf32> to vector<1x128xf32>
    %165 = tpu.reciprocal %162 {approx = true} : vector<1x128xf32> -> vector<1x128xf32>
    %166 = arith.subf %162, %164 : vector<1x128xf32>
    %167 = vector.broadcast %0 : f32 to vector<1x128xf32>
    %168 = arith.mulf %167, %165 : vector<1x128xf32>
    %169 = arith.mulf %162, %165 : vector<1x128xf32>
    %cst_35 = arith.constant 2.000000e+00 : f32
    %170 = vector.broadcast %cst_35 : f32 to vector<1x128xf32>
    %171 = arith.subf %170, %169 : vector<1x128xf32>
    %172 = arith.mulf %168, %171 : vector<1x128xf32>
    %173 = arith.addf %166, %172 : vector<1x128xf32>
    %c15 = arith.constant 15 : index
    %c0_36 = arith.constant 0 : index
    %174 = vector.load %arg8[%c15, %c0_36] : memref<128x128xf32, #tpu.memory_space<vmem>>, vector<1x128xf32>
    tpu.vector_store %arg8[%c15, %c0_36], %173 {strides = array<i32>} : memref<128x128xf32, #tpu.memory_space<vmem>>, vector<1x128xf32>,
    %c16 = arith.constant 16 : index
    %c0_37 = arith.constant 0 : index
    %175 = vector.load %arg2[%c16, %c0_37] : memref<128x128xf32, #tpu.memory_space<vmem>>, vector<8x128xf32>
    %176 = vector.broadcast %1 : f32 to vector<8x128xf32>
    %177 = arith.mulf %176, %175 : vector<8x128xf32>
    %178 = vector.extract_strided_slice %177 {offsets = [0, 0], sizes = [1, 128], strides = [1, 1]} : vector<8x128xf32> to vector<1x128xf32>
    %179 = tpu.reciprocal %173 {approx = true} : vector<1x128xf32> -> vector<1x128xf32>
    %180 = arith.subf %173, %178 : vector<1x128xf32>
    %181 = vector.broadcast %0 : f32 to vector<1x128xf32>
    %182 = arith.mulf %181, %179 : vector<1x128xf32>
    %183 = arith.mulf %173, %179 : vector<1x128xf32>
    %cst_38 = arith.constant 2.000000e+00 : f32
    %184 = vector.broadcast %cst_38 : f32 to vector<1x128xf32>
    %185 = arith.subf %184, %183 : vector<1x128xf32>
    %186 = arith.mulf %182, %185 : vector<1x128xf32>
    %187 = arith.addf %180, %186 : vector<1x128xf32>
    %c16_39 = arith.constant 16 : index
    %c0_40 = arith.constant 0 : index
    %188 = vector.load %arg8[%c16_39, %c0_40] : memref<128x128xf32, #tpu.memory_space<vmem>>, vector<1x128xf32>
    tpu.vector_store %arg8[%c16_39, %c0_40], %187 {strides = array<i32>} : memref<128x128xf32, #tpu.memory_space<vmem>>, vector<1x128xf32>,
    %189 = vector.extract_strided_slice %177 {offsets = [1, 0], sizes = [1, 128], strides = [1, 1]} : vector<8x128xf32> to vector<1x128xf32>
    %190 = tpu.reciprocal %187 {approx = true} : vector<1x128xf32> -> vector<1x128xf32>
    %191 = arith.subf %187, %189 : vector<1x128xf32>
    %192 = vector.broadcast %0 : f32 to vector<1x128xf32>
    %193 = arith.mulf %192, %190 : vector<1x128xf32>
    %194 = arith.mulf %187, %190 : vector<1x128xf32>
    %cst_41 = arith.constant 2.000000e+00 : f32
    %195 = vector.broadcast %cst_41 : f32 to vector<1x128xf32>
    %196 = arith.subf %195, %194 : vector<1x128xf32>
    %197 = arith.mulf %193, %196 : vector<1x128xf32>
    %198 = arith.addf %191, %197 : vector<1x128xf32>
    %c17 = arith.constant 17 : index
    %c0_42 = arith.constant 0 : index
    %199 = vector.load %arg8[%c17, %c0_42] : memref<128x128xf32, #tpu.memory_space<vmem>>, vector<1x128xf32>
    tpu.vector_store %arg8[%c17, %c0_42], %198 {strides = array<i32>} : memref<128x128xf32, #tpu.memory_space<vmem>>, vector<1x128xf32>,
    %200 = vector.extract_strided_slice %177 {offsets = [2, 0], sizes = [1, 128], strides = [1, 1]} : vector<8x128xf32> to vector<1x128xf32>
    %201 = tpu.reciprocal %198 {approx = true} : vector<1x128xf32> -> vector<1x128xf32>
    %202 = arith.subf %198, %200 : vector<1x128xf32>
    %203 = vector.broadcast %0 : f32 to vector<1x128xf32>
    %204 = arith.mulf %203, %201 : vector<1x128xf32>
    %205 = arith.mulf %198, %201 : vector<1x128xf32>
    %cst_43 = arith.constant 2.000000e+00 : f32
    %206 = vector.broadcast %cst_43 : f32 to vector<1x128xf32>
    %207 = arith.subf %206, %205 : vector<1x128xf32>
    %208 = arith.mulf %204, %207 : vector<1x128xf32>
    %209 = arith.addf %202, %208 : vector<1x128xf32>
    %c18 = arith.constant 18 : index
    %c0_44 = arith.constant 0 : index
    %210 = vector.load %arg8[%c18, %c0_44] : memref<128x128xf32, #tpu.memory_space<vmem>>, vector<1x128xf32>
    tpu.vector_store %arg8[%c18, %c0_44], %209 {strides = array<i32>} : memref<128x128xf32, #tpu.memory_space<vmem>>, vector<1x128xf32>,
    %211 = vector.extract_strided_slice %177 {offsets = [3, 0], sizes = [1, 128], strides = [1, 1]} : vector<8x128xf32> to vector<1x128xf32>
    %212 = tpu.reciprocal %209 {approx = true} : vector<1x128xf32> -> vector<1x128xf32>
    %213 = arith.subf %209, %211 : vector<1x128xf32>
    %214 = vector.broadcast %0 : f32 to vector<1x128xf32>
    %215 = arith.mulf %214, %212 : vector<1x128xf32>
    %216 = arith.mulf %209, %212 : vector<1x128xf32>
    %cst_45 = arith.constant 2.000000e+00 : f32
    %217 = vector.broadcast %cst_45 : f32 to vector<1x128xf32>
    %218 = arith.subf %217, %216 : vector<1x128xf32>
    %219 = arith.mulf %215, %218 : vector<1x128xf32>
    %220 = arith.addf %213, %219 : vector<1x128xf32>
    %c19 = arith.constant 19 : index
    %c0_46 = arith.constant 0 : index
    %221 = vector.load %arg8[%c19, %c0_46] : memref<128x128xf32, #tpu.memory_space<vmem>>, vector<1x128xf32>
    tpu.vector_store %arg8[%c19, %c0_46], %220 {strides = array<i32>} : memref<128x128xf32, #tpu.memory_space<vmem>>, vector<1x128xf32>,
    %222 = vector.extract_strided_slice %177 {offsets = [4, 0], sizes = [1, 128], strides = [1, 1]} : vector<8x128xf32> to vector<1x128xf32>
    %223 = tpu.reciprocal %220 {approx = true} : vector<1x128xf32> -> vector<1x128xf32>
    %224 = arith.subf %220, %222 : vector<1x128xf32>
    %225 = vector.broadcast %0 : f32 to vector<1x128xf32>
    %226 = arith.mulf %225, %223 : vector<1x128xf32>
    %227 = arith.mulf %220, %223 : vector<1x128xf32>
    %cst_47 = arith.constant 2.000000e+00 : f32
    %228 = vector.broadcast %cst_47 : f32 to vector<1x128xf32>
    %229 = arith.subf %228, %227 : vector<1x128xf32>
    %230 = arith.mulf %226, %229 : vector<1x128xf32>
    %231 = arith.addf %224, %230 : vector<1x128xf32>
    %c20 = arith.constant 20 : index
    %c0_48 = arith.constant 0 : index
    %232 = vector.load %arg8[%c20, %c0_48] : memref<128x128xf32, #tpu.memory_space<vmem>>, vector<1x128xf32>
    tpu.vector_store %arg8[%c20, %c0_48], %231 {strides = array<i32>} : memref<128x128xf32, #tpu.memory_space<vmem>>, vector<1x128xf32>,
    %233 = vector.extract_strided_slice %177 {offsets = [5, 0], sizes = [1, 128], strides = [1, 1]} : vector<8x128xf32> to vector<1x128xf32>
    %234 = tpu.reciprocal %231 {approx = true} : vector<1x128xf32> -> vector<1x128xf32>
    %235 = arith.subf %231, %233 : vector<1x128xf32>
    %236 = vector.broadcast %0 : f32 to vector<1x128xf32>
    %237 = arith.mulf %236, %234 : vector<1x128xf32>
    %238 = arith.mulf %231, %234 : vector<1x128xf32>
    %cst_49 = arith.constant 2.000000e+00 : f32
    %239 = vector.broadcast %cst_49 : f32 to vector<1x128xf32>
    %240 = arith.subf %239, %238 : vector<1x128xf32>
    %241 = arith.mulf %237, %240 : vector<1x128xf32>
    %242 = arith.addf %235, %241 : vector<1x128xf32>
    %c21 = arith.constant 21 : index
    %c0_50 = arith.constant 0 : index
    %243 = vector.load %arg8[%c21, %c0_50] : memref<128x128xf32, #tpu.memory_space<vmem>>, vector<1x128xf32>
    tpu.vector_store %arg8[%c21, %c0_50], %242 {strides = array<i32>} : memref<128x128xf32, #tpu.memory_space<vmem>>, vector<1x128xf32>,
    %244 = vector.extract_strided_slice %177 {offsets = [6, 0], sizes = [1, 128], strides = [1, 1]} : vector<8x128xf32> to vector<1x128xf32>
    %245 = tpu.reciprocal %242 {approx = true} : vector<1x128xf32> -> vector<1x128xf32>
    %246 = arith.subf %242, %244 : vector<1x128xf32>
    %247 = vector.broadcast %0 : f32 to vector<1x128xf32>
    %248 = arith.mulf %247, %245 : vector<1x128xf32>
    %249 = arith.mulf %242, %245 : vector<1x128xf32>
    %cst_51 = arith.constant 2.000000e+00 : f32
    %250 = vector.broadcast %cst_51 : f32 to vector<1x128xf32>
    %251 = arith.subf %250, %249 : vector<1x128xf32>
    %252 = arith.mulf %248, %251 : vector<1x128xf32>
    %253 = arith.addf %246, %252 : vector<1x128xf32>
    %c22 = arith.constant 22 : index
    %c0_52 = arith.constant 0 : index
    %254 = vector.load %arg8[%c22, %c0_52] : memref<128x128xf32, #tpu.memory_space<vmem>>, vector<1x128xf32>
    tpu.vector_store %arg8[%c22, %c0_52], %253 {strides = array<i32>} : memref<128x128xf32, #tpu.memory_space<vmem>>, vector<1x128xf32>,
    %255 = vector.extract_strided_slice %177 {offsets = [7, 0], sizes = [1, 128], strides = [1, 1]} : vector<8x128xf32> to vector<1x128xf32>
    %256 = tpu.reciprocal %253 {approx = true} : vector<1x128xf32> -> vector<1x128xf32>
    %257 = arith.subf %253, %255 : vector<1x128xf32>
    %258 = vector.broadcast %0 : f32 to vector<1x128xf32>
    %259 = arith.mulf %258, %256 : vector<1x128xf32>
    %260 = arith.mulf %253, %256 : vector<1x128xf32>
    %cst_53 = arith.constant 2.000000e+00 : f32
    %261 = vector.broadcast %cst_53 : f32 to vector<1x128xf32>
    %262 = arith.subf %261, %260 : vector<1x128xf32>
    %263 = arith.mulf %259, %262 : vector<1x128xf32>
    %264 = arith.addf %257, %263 : vector<1x128xf32>
    %c23 = arith.constant 23 : index
    %c0_54 = arith.constant 0 : index
    %265 = vector.load %arg8[%c23, %c0_54] : memref<128x128xf32, #tpu.memory_space<vmem>>, vector<1x128xf32>
    tpu.vector_store %arg8[%c23, %c0_54], %264 {strides = array<i32>} : memref<128x128xf32, #tpu.memory_space<vmem>>, vector<1x128xf32>,
    %c24 = arith.constant 24 : index
    %c0_55 = arith.constant 0 : index
    %266 = vector.load %arg2[%c24, %c0_55] : memref<128x128xf32, #tpu.memory_space<vmem>>, vector<8x128xf32>
    %267 = vector.broadcast %1 : f32 to vector<8x128xf32>
    %268 = arith.mulf %267, %266 : vector<8x128xf32>
    %269 = vector.extract_strided_slice %268 {offsets = [0, 0], sizes = [1, 128], strides = [1, 1]} : vector<8x128xf32> to vector<1x128xf32>
    %270 = tpu.reciprocal %264 {approx = true} : vector<1x128xf32> -> vector<1x128xf32>
    %271 = arith.subf %264, %269 : vector<1x128xf32>
    %272 = vector.broadcast %0 : f32 to vector<1x128xf32>
    %273 = arith.mulf %272, %270 : vector<1x128xf32>
    %274 = arith.mulf %264, %270 : vector<1x128xf32>
    %cst_56 = arith.constant 2.000000e+00 : f32
    %275 = vector.broadcast %cst_56 : f32 to vector<1x128xf32>
    %276 = arith.subf %275, %274 : vector<1x128xf32>
    %277 = arith.mulf %273, %276 : vector<1x128xf32>
    %278 = arith.addf %271, %277 : vector<1x128xf32>
    %c24_57 = arith.constant 24 : index
    %c0_58 = arith.constant 0 : index
    %279 = vector.load %arg8[%c24_57, %c0_58] : memref<128x128xf32, #tpu.memory_space<vmem>>, vector<1x128xf32>
    tpu.vector_store %arg8[%c24_57, %c0_58], %278 {strides = array<i32>} : memref<128x128xf32, #tpu.memory_space<vmem>>, vector<1x128xf32>,
    %280 = vector.extract_strided_slice %268 {offsets = [1, 0], sizes = [1, 128], strides = [1, 1]} : vector<8x128xf32> to vector<1x128xf32>
    %281 = tpu.reciprocal %278 {approx = true} : vector<1x128xf32> -> vector<1x128xf32>
    %282 = arith.subf %278, %280 : vector<1x128xf32>
    %283 = vector.broadcast %0 : f32 to vector<1x128xf32>
    %284 = arith.mulf %283, %281 : vector<1x128xf32>
    %285 = arith.mulf %278, %281 : vector<1x128xf32>
    %cst_59 = arith.constant 2.000000e+00 : f32
    %286 = vector.broadcast %cst_59 : f32 to vector<1x128xf32>
    %287 = arith.subf %286, %285 : vector<1x128xf32>
    %288 = arith.mulf %284, %287 : vector<1x128xf32>
    %289 = arith.addf %282, %288 : vector<1x128xf32>
    %c25 = arith.constant 25 : index
    %c0_60 = arith.constant 0 : index
    %290 = vector.load %arg8[%c25, %c0_60] : memref<128x128xf32, #tpu.memory_space<vmem>>, vector<1x128xf32>
    tpu.vector_store %arg8[%c25, %c0_60], %289 {strides = array<i32>} : memref<128x128xf32, #tpu.memory_space<vmem>>, vector<1x128xf32>,
    %291 = vector.extract_strided_slice %268 {offsets = [2, 0], sizes = [1, 128], strides = [1, 1]} : vector<8x128xf32> to vector<1x128xf32>
    %292 = tpu.reciprocal %289 {approx = true} : vector<1x128xf32> -> vector<1x128xf32>
    %293 = arith.subf %289, %291 : vector<1x128xf32>
    %294 = vector.broadcast %0 : f32 to vector<1x128xf32>
    %295 = arith.mulf %294, %292 : vector<1x128xf32>
    %296 = arith.mulf %289, %292 : vector<1x128xf32>
    %cst_61 = arith.constant 2.000000e+00 : f32
    %297 = vector.broadcast %cst_61 : f32 to vector<1x128xf32>
    %298 = arith.subf %297, %296 : vector<1x128xf32>
    %299 = arith.mulf %295, %298 : vector<1x128xf32>
    %300 = arith.addf %293, %299 : vector<1x128xf32>
    %c26 = arith.constant 26 : index
    %c0_62 = arith.constant 0 : index
    %301 = vector.load %arg8[%c26, %c0_62] : memref<128x128xf32, #tpu.memory_space<vmem>>, vector<1x128xf32>
    tpu.vector_store %arg8[%c26, %c0_62], %300 {strides = array<i32>} : memref<128x128xf32, #tpu.memory_space<vmem>>, vector<1x128xf32>,
    %302 = vector.extract_strided_slice %268 {offsets = [3, 0], sizes = [1, 128], strides = [1, 1]} : vector<8x128xf32> to vector<1x128xf32>
    %303 = tpu.reciprocal %300 {approx = true} : vector<1x128xf32> -> vector<1x128xf32>
    %304 = arith.subf %300, %302 : vector<1x128xf32>
    %305 = vector.broadcast %0 : f32 to vector<1x128xf32>
    %306 = arith.mulf %305, %303 : vector<1x128xf32>
    %307 = arith.mulf %300, %303 : vector<1x128xf32>
    %cst_63 = arith.constant 2.000000e+00 : f32
    %308 = vector.broadcast %cst_63 : f32 to vector<1x128xf32>
    %309 = arith.subf %308, %307 : vector<1x128xf32>
    %310 = arith.mulf %306, %309 : vector<1x128xf32>
    %311 = arith.addf %304, %310 : vector<1x128xf32>
    %c27 = arith.constant 27 : index
    %c0_64 = arith.constant 0 : index
    %312 = vector.load %arg8[%c27, %c0_64] : memref<128x128xf32, #tpu.memory_space<vmem>>, vector<1x128xf32>
    tpu.vector_store %arg8[%c27, %c0_64], %311 {strides = array<i32>} : memref<128x128xf32, #tpu.memory_space<vmem>>, vector<1x128xf32>,
    %313 = vector.extract_strided_slice %268 {offsets = [4, 0], sizes = [1, 128], strides = [1, 1]} : vector<8x128xf32> to vector<1x128xf32>
    %314 = tpu.reciprocal %311 {approx = true} : vector<1x128xf32> -> vector<1x128xf32>
    %315 = arith.subf %311, %313 : vector<1x128xf32>
    %316 = vector.broadcast %0 : f32 to vector<1x128xf32>
    %317 = arith.mulf %316, %314 : vector<1x128xf32>
    %318 = arith.mulf %311, %314 : vector<1x128xf32>
    %cst_65 = arith.constant 2.000000e+00 : f32
    %319 = vector.broadcast %cst_65 : f32 to vector<1x128xf32>
    %320 = arith.subf %319, %318 : vector<1x128xf32>
    %321 = arith.mulf %317, %320 : vector<1x128xf32>
    %322 = arith.addf %315, %321 : vector<1x128xf32>
    %c28 = arith.constant 28 : index
    %c0_66 = arith.constant 0 : index
    %323 = vector.load %arg8[%c28, %c0_66] : memref<128x128xf32, #tpu.memory_space<vmem>>, vector<1x128xf32>
    tpu.vector_store %arg8[%c28, %c0_66], %322 {strides = array<i32>} : memref<128x128xf32, #tpu.memory_space<vmem>>, vector<1x128xf32>,
    %324 = vector.extract_strided_slice %268 {offsets = [5, 0], sizes = [1, 128], strides = [1, 1]} : vector<8x128xf32> to vector<1x128xf32>
    %325 = tpu.reciprocal %322 {approx = true} : vector<1x128xf32> -> vector<1x128xf32>
    %326 = arith.subf %322, %324 : vector<1x128xf32>
    %327 = vector.broadcast %0 : f32 to vector<1x128xf32>
    %328 = arith.mulf %327, %325 : vector<1x128xf32>
    %329 = arith.mulf %322, %325 : vector<1x128xf32>
    %cst_67 = arith.constant 2.000000e+00 : f32
    %330 = vector.broadcast %cst_67 : f32 to vector<1x128xf32>
    %331 = arith.subf %330, %329 : vector<1x128xf32>
    %332 = arith.mulf %328, %331 : vector<1x128xf32>
    %333 = arith.addf %326, %332 : vector<1x128xf32>
    %c29 = arith.constant 29 : index
    %c0_68 = arith.constant 0 : index
    %334 = vector.load %arg8[%c29, %c0_68] : memref<128x128xf32, #tpu.memory_space<vmem>>, vector<1x128xf32>
    tpu.vector_store %arg8[%c29, %c0_68], %333 {strides = array<i32>} : memref<128x128xf32, #tpu.memory_space<vmem>>, vector<1x128xf32>,
    %335 = vector.extract_strided_slice %268 {offsets = [6, 0], sizes = [1, 128], strides = [1, 1]} : vector<8x128xf32> to vector<1x128xf32>
    %336 = tpu.reciprocal %333 {approx = true} : vector<1x128xf32> -> vector<1x128xf32>
    %337 = arith.subf %333, %335 : vector<1x128xf32>
    %338 = vector.broadcast %0 : f32 to vector<1x128xf32>
    %339 = arith.mulf %338, %336 : vector<1x128xf32>
    %340 = arith.mulf %333, %336 : vector<1x128xf32>
    %cst_69 = arith.constant 2.000000e+00 : f32
    %341 = vector.broadcast %cst_69 : f32 to vector<1x128xf32>
    %342 = arith.subf %341, %340 : vector<1x128xf32>
    %343 = arith.mulf %339, %342 : vector<1x128xf32>
    %344 = arith.addf %337, %343 : vector<1x128xf32>
    %c30 = arith.constant 30 : index
    %c0_70 = arith.constant 0 : index
    %345 = vector.load %arg8[%c30, %c0_70] : memref<128x128xf32, #tpu.memory_space<vmem>>, vector<1x128xf32>
    tpu.vector_store %arg8[%c30, %c0_70], %344 {strides = array<i32>} : memref<128x128xf32, #tpu.memory_space<vmem>>, vector<1x128xf32>,
    %346 = vector.extract_strided_slice %268 {offsets = [7, 0], sizes = [1, 128], strides = [1, 1]} : vector<8x128xf32> to vector<1x128xf32>
    %347 = tpu.reciprocal %344 {approx = true} : vector<1x128xf32> -> vector<1x128xf32>
    %348 = arith.subf %344, %346 : vector<1x128xf32>
    %349 = vector.broadcast %0 : f32 to vector<1x128xf32>
    %350 = arith.mulf %349, %347 : vector<1x128xf32>
    %351 = arith.mulf %344, %347 : vector<1x128xf32>
    %cst_71 = arith.constant 2.000000e+00 : f32
    %352 = vector.broadcast %cst_71 : f32 to vector<1x128xf32>
    %353 = arith.subf %352, %351 : vector<1x128xf32>
    %354 = arith.mulf %350, %353 : vector<1x128xf32>
    %355 = arith.addf %348, %354 : vector<1x128xf32>
    %c31 = arith.constant 31 : index
    %c0_72 = arith.constant 0 : index
    %356 = vector.load %arg8[%c31, %c0_72] : memref<128x128xf32, #tpu.memory_space<vmem>>, vector<1x128xf32>
    tpu.vector_store %arg8[%c31, %c0_72], %355 {strides = array<i32>} : memref<128x128xf32, #tpu.memory_space<vmem>>, vector<1x128xf32>,
    %c32 = arith.constant 32 : index
    %c0_73 = arith.constant 0 : index
    %357 = vector.load %arg2[%c32, %c0_73] : memref<128x128xf32, #tpu.memory_space<vmem>>, vector<8x128xf32>
    %358 = vector.broadcast %1 : f32 to vector<8x128xf32>
    %359 = arith.mulf %358, %357 : vector<8x128xf32>
    %360 = vector.extract_strided_slice %359 {offsets = [0, 0], sizes = [1, 128], strides = [1, 1]} : vector<8x128xf32> to vector<1x128xf32>
    %361 = tpu.reciprocal %355 {approx = true} : vector<1x128xf32> -> vector<1x128xf32>
    %362 = arith.subf %355, %360 : vector<1x128xf32>
    %363 = vector.broadcast %0 : f32 to vector<1x128xf32>
    %364 = arith.mulf %363, %361 : vector<1x128xf32>
    %365 = arith.mulf %355, %361 : vector<1x128xf32>
    %cst_74 = arith.constant 2.000000e+00 : f32
    %366 = vector.broadcast %cst_74 : f32 to vector<1x128xf32>
    %367 = arith.subf %366, %365 : vector<1x128xf32>
    %368 = arith.mulf %364, %367 : vector<1x128xf32>
    %369 = arith.addf %362, %368 : vector<1x128xf32>
    %c32_75 = arith.constant 32 : index
    %c0_76 = arith.constant 0 : index
    %370 = vector.load %arg8[%c32_75, %c0_76] : memref<128x128xf32, #tpu.memory_space<vmem>>, vector<1x128xf32>
    tpu.vector_store %arg8[%c32_75, %c0_76], %369 {strides = array<i32>} : memref<128x128xf32, #tpu.memory_space<vmem>>, vector<1x128xf32>,
    %371 = vector.extract_strided_slice %359 {offsets = [1, 0], sizes = [1, 128], strides = [1, 1]} : vector<8x128xf32> to vector<1x128xf32>
    %372 = tpu.reciprocal %369 {approx = true} : vector<1x128xf32> -> vector<1x128xf32>
    %373 = arith.subf %369, %371 : vector<1x128xf32>
    %374 = vector.broadcast %0 : f32 to vector<1x128xf32>
    %375 = arith.mulf %374, %372 : vector<1x128xf32>
    %376 = arith.mulf %369, %372 : vector<1x128xf32>
    %cst_77 = arith.constant 2.000000e+00 : f32
    %377 = vector.broadcast %cst_77 : f32 to vector<1x128xf32>
    %378 = arith.subf %377, %376 : vector<1x128xf32>
    %379 = arith.mulf %375, %378 : vector<1x128xf32>
    %380 = arith.addf %373, %379 : vector<1x128xf32>
    %c33 = arith.constant 33 : index
    %c0_78 = arith.constant 0 : index
    %381 = vector.load %arg8[%c33, %c0_78] : memref<128x128xf32, #tpu.memory_space<vmem>>, vector<1x128xf32>
    tpu.vector_store %arg8[%c33, %c0_78], %380 {strides = array<i32>} : memref<128x128xf32, #tpu.memory_space<vmem>>, vector<1x128xf32>,
    %382 = vector.extract_strided_slice %359 {offsets = [2, 0], sizes = [1, 128], strides = [1, 1]} : vector<8x128xf32> to vector<1x128xf32>
    %383 = tpu.reciprocal %380 {approx = true} : vector<1x128xf32> -> vector<1x128xf32>
    %384 = arith.subf %380, %382 : vector<1x128xf32>
    %385 = vector.broadcast %0 : f32 to vector<1x128xf32>
    %386 = arith.mulf %385, %383 : vector<1x128xf32>
    %387 = arith.mulf %380, %383 : vector<1x128xf32>
    %cst_79 = arith.constant 2.000000e+00 : f32
    %388 = vector.broadcast %cst_79 : f32 to vector<1x128xf32>
    %389 = arith.subf %388, %387 : vector<1x128xf32>
    %390 = arith.mulf %386, %389 : vector<1x128xf32>
    %391 = arith.addf %384, %390 : vector<1x128xf32>
    %c34 = arith.constant 34 : index
    %c0_80 = arith.constant 0 : index
    %392 = vector.load %arg8[%c34, %c0_80] : memref<128x128xf32, #tpu.memory_space<vmem>>, vector<1x128xf32>
    tpu.vector_store %arg8[%c34, %c0_80], %391 {strides = array<i32>} : memref<128x128xf32, #tpu.memory_space<vmem>>, vector<1x128xf32>,
    %393 = vector.extract_strided_slice %359 {offsets = [3, 0], sizes = [1, 128], strides = [1, 1]} : vector<8x128xf32> to vector<1x128xf32>
    %394 = tpu.reciprocal %391 {approx = true} : vector<1x128xf32> -> vector<1x128xf32>
    %395 = arith.subf %391, %393 : vector<1x128xf32>
    %396 = vector.broadcast %0 : f32 to vector<1x128xf32>
    %397 = arith.mulf %396, %394 : vector<1x128xf32>
    %398 = arith.mulf %391, %394 : vector<1x128xf32>
    %cst_81 = arith.constant 2.000000e+00 : f32
    %399 = vector.broadcast %cst_81 : f32 to vector<1x128xf32>
    %400 = arith.subf %399, %398 : vector<1x128xf32>
    %401 = arith.mulf %397, %400 : vector<1x128xf32>
    %402 = arith.addf %395, %401 : vector<1x128xf32>
    %c35 = arith.constant 35 : index
    %c0_82 = arith.constant 0 : index
    %403 = vector.load %arg8[%c35, %c0_82] : memref<128x128xf32, #tpu.memory_space<vmem>>, vector<1x128xf32>
    tpu.vector_store %arg8[%c35, %c0_82], %402 {strides = array<i32>} : memref<128x128xf32, #tpu.memory_space<vmem>>, vector<1x128xf32>,
    %404 = vector.extract_strided_slice %359 {offsets = [4, 0], sizes = [1, 128], strides = [1, 1]} : vector<8x128xf32> to vector<1x128xf32>
    %405 = tpu.reciprocal %402 {approx = true} : vector<1x128xf32> -> vector<1x128xf32>
    %406 = arith.subf %402, %404 : vector<1x128xf32>
    %407 = vector.broadcast %0 : f32 to vector<1x128xf32>
    %408 = arith.mulf %407, %405 : vector<1x128xf32>
    %409 = arith.mulf %402, %405 : vector<1x128xf32>
    %cst_83 = arith.constant 2.000000e+00 : f32
    %410 = vector.broadcast %cst_83 : f32 to vector<1x128xf32>
    %411 = arith.subf %410, %409 : vector<1x128xf32>
    %412 = arith.mulf %408, %411 : vector<1x128xf32>
    %413 = arith.addf %406, %412 : vector<1x128xf32>
    %c36 = arith.constant 36 : index
    %c0_84 = arith.constant 0 : index
    %414 = vector.load %arg8[%c36, %c0_84] : memref<128x128xf32, #tpu.memory_space<vmem>>, vector<1x128xf32>
    tpu.vector_store %arg8[%c36, %c0_84], %413 {strides = array<i32>} : memref<128x128xf32, #tpu.memory_space<vmem>>, vector<1x128xf32>,
    %415 = vector.extract_strided_slice %359 {offsets = [5, 0], sizes = [1, 128], strides = [1, 1]} : vector<8x128xf32> to vector<1x128xf32>
    %416 = tpu.reciprocal %413 {approx = true} : vector<1x128xf32> -> vector<1x128xf32>
    %417 = arith.subf %413, %415 : vector<1x128xf32>
    %418 = vector.broadcast %0 : f32 to vector<1x128xf32>
    %419 = arith.mulf %418, %416 : vector<1x128xf32>
    %420 = arith.mulf %413, %416 : vector<1x128xf32>
    %cst_85 = arith.constant 2.000000e+00 : f32
    %421 = vector.broadcast %cst_85 : f32 to vector<1x128xf32>
    %422 = arith.subf %421, %420 : vector<1x128xf32>
    %423 = arith.mulf %419, %422 : vector<1x128xf32>
    %424 = arith.addf %417, %423 : vector<1x128xf32>
    %c37 = arith.constant 37 : index
    %c0_86 = arith.constant 0 : index
    %425 = vector.load %arg8[%c37, %c0_86] : memref<128x128xf32, #tpu.memory_space<vmem>>, vector<1x128xf32>
    tpu.vector_store %arg8[%c37, %c0_86], %424 {strides = array<i32>} : memref<128x128xf32, #tpu.memory_space<vmem>>, vector<1x128xf32>,
    %426 = vector.extract_strided_slice %359 {offsets = [6, 0], sizes = [1, 128], strides = [1, 1]} : vector<8x128xf32> to vector<1x128xf32>
    %427 = tpu.reciprocal %424 {approx = true} : vector<1x128xf32> -> vector<1x128xf32>
    %428 = arith.subf %424, %426 : vector<1x128xf32>
    %429 = vector.broadcast %0 : f32 to vector<1x128xf32>
    %430 = arith.mulf %429, %427 : vector<1x128xf32>
    %431 = arith.mulf %424, %427 : vector<1x128xf32>
    %cst_87 = arith.constant 2.000000e+00 : f32
    %432 = vector.broadcast %cst_87 : f32 to vector<1x128xf32>
    %433 = arith.subf %432, %431 : vector<1x128xf32>
    %434 = arith.mulf %430, %433 : vector<1x128xf32>
    %435 = arith.addf %428, %434 : vector<1x128xf32>
    %c38 = arith.constant 38 : index
    %c0_88 = arith.constant 0 : index
    %436 = vector.load %arg8[%c38, %c0_88] : memref<128x128xf32, #tpu.memory_space<vmem>>, vector<1x128xf32>
    tpu.vector_store %arg8[%c38, %c0_88], %435 {strides = array<i32>} : memref<128x128xf32, #tpu.memory_space<vmem>>, vector<1x128xf32>,
    %437 = vector.extract_strided_slice %359 {offsets = [7, 0], sizes = [1, 128], strides = [1, 1]} : vector<8x128xf32> to vector<1x128xf32>
    %438 = tpu.reciprocal %435 {approx = true} : vector<1x128xf32> -> vector<1x128xf32>
    %439 = arith.subf %435, %437 : vector<1x128xf32>
    %440 = vector.broadcast %0 : f32 to vector<1x128xf32>
    %441 = arith.mulf %440, %438 : vector<1x128xf32>
    %442 = arith.mulf %435, %438 : vector<1x128xf32>
    %cst_89 = arith.constant 2.000000e+00 : f32
    %443 = vector.broadcast %cst_89 : f32 to vector<1x128xf32>
    %444 = arith.subf %443, %442 : vector<1x128xf32>
    %445 = arith.mulf %441, %444 : vector<1x128xf32>
    %446 = arith.addf %439, %445 : vector<1x128xf32>
    %c39 = arith.constant 39 : index
    %c0_90 = arith.constant 0 : index
    %447 = vector.load %arg8[%c39, %c0_90] : memref<128x128xf32, #tpu.memory_space<vmem>>, vector<1x128xf32>
    tpu.vector_store %arg8[%c39, %c0_90], %446 {strides = array<i32>} : memref<128x128xf32, #tpu.memory_space<vmem>>, vector<1x128xf32>,
    %c40 = arith.constant 40 : index
    %c0_91 = arith.constant 0 : index
    %448 = vector.load %arg2[%c40, %c0_91] : memref<128x128xf32, #tpu.memory_space<vmem>>, vector<8x128xf32>
    %449 = vector.broadcast %1 : f32 to vector<8x128xf32>
    %450 = arith.mulf %449, %448 : vector<8x128xf32>
    %451 = vector.extract_strided_slice %450 {offsets = [0, 0], sizes = [1, 128], strides = [1, 1]} : vector<8x128xf32> to vector<1x128xf32>
    %452 = tpu.reciprocal %446 {approx = true} : vector<1x128xf32> -> vector<1x128xf32>
    %453 = arith.subf %446, %451 : vector<1x128xf32>
    %454 = vector.broadcast %0 : f32 to vector<1x128xf32>
    %455 = arith.mulf %454, %452 : vector<1x128xf32>
    %456 = arith.mulf %446, %452 : vector<1x128xf32>
    %cst_92 = arith.constant 2.000000e+00 : f32
    %457 = vector.broadcast %cst_92 : f32 to vector<1x128xf32>
    %458 = arith.subf %457, %456 : vector<1x128xf32>
    %459 = arith.mulf %455, %458 : vector<1x128xf32>
    %460 = arith.addf %453, %459 : vector<1x128xf32>
    %c40_93 = arith.constant 40 : index
    %c0_94 = arith.constant 0 : index
    %461 = vector.load %arg8[%c40_93, %c0_94] : memref<128x128xf32, #tpu.memory_space<vmem>>, vector<1x128xf32>
    tpu.vector_store %arg8[%c40_93, %c0_94], %460 {strides = array<i32>} : memref<128x128xf32, #tpu.memory_space<vmem>>, vector<1x128xf32>,
    %462 = vector.extract_strided_slice %450 {offsets = [1, 0], sizes = [1, 128], strides = [1, 1]} : vector<8x128xf32> to vector<1x128xf32>
    %463 = tpu.reciprocal %460 {approx = true} : vector<1x128xf32> -> vector<1x128xf32>
    %464 = arith.subf %460, %462 : vector<1x128xf32>
    %465 = vector.broadcast %0 : f32 to vector<1x128xf32>
    %466 = arith.mulf %465, %463 : vector<1x128xf32>
    %467 = arith.mulf %460, %463 : vector<1x128xf32>
    %cst_95 = arith.constant 2.000000e+00 : f32
    %468 = vector.broadcast %cst_95 : f32 to vector<1x128xf32>
    %469 = arith.subf %468, %467 : vector<1x128xf32>
    %470 = arith.mulf %466, %469 : vector<1x128xf32>
    %471 = arith.addf %464, %470 : vector<1x128xf32>
    %c41 = arith.constant 41 : index
    %c0_96 = arith.constant 0 : index
    %472 = vector.load %arg8[%c41, %c0_96] : memref<128x128xf32, #tpu.memory_space<vmem>>, vector<1x128xf32>
    tpu.vector_store %arg8[%c41, %c0_96], %471 {strides = array<i32>} : memref<128x128xf32, #tpu.memory_space<vmem>>, vector<1x128xf32>,
    %473 = vector.extract_strided_slice %450 {offsets = [2, 0], sizes = [1, 128], strides = [1, 1]} : vector<8x128xf32> to vector<1x128xf32>
    %474 = tpu.reciprocal %471 {approx = true} : vector<1x128xf32> -> vector<1x128xf32>
    %475 = arith.subf %471, %473 : vector<1x128xf32>
    %476 = vector.broadcast %0 : f32 to vector<1x128xf32>
    %477 = arith.mulf %476, %474 : vector<1x128xf32>
    %478 = arith.mulf %471, %474 : vector<1x128xf32>
    %cst_97 = arith.constant 2.000000e+00 : f32
    %479 = vector.broadcast %cst_97 : f32 to vector<1x128xf32>
    %480 = arith.subf %479, %478 : vector<1x128xf32>
    %481 = arith.mulf %477, %480 : vector<1x128xf32>
    %482 = arith.addf %475, %481 : vector<1x128xf32>
    %c42 = arith.constant 42 : index
    %c0_98 = arith.constant 0 : index
    %483 = vector.load %arg8[%c42, %c0_98] : memref<128x128xf32, #tpu.memory_space<vmem>>, vector<1x128xf32>
    tpu.vector_store %arg8[%c42, %c0_98], %482 {strides = array<i32>} : memref<128x128xf32, #tpu.memory_space<vmem>>, vector<1x128xf32>,
    %484 = vector.extract_strided_slice %450 {offsets = [3, 0], sizes = [1, 128], strides = [1, 1]} : vector<8x128xf32> to vector<1x128xf32>
    %485 = tpu.reciprocal %482 {approx = true} : vector<1x128xf32> -> vector<1x128xf32>
    %486 = arith.subf %482, %484 : vector<1x128xf32>
    %487 = vector.broadcast %0 : f32 to vector<1x128xf32>
    %488 = arith.mulf %487, %485 : vector<1x128xf32>
    %489 = arith.mulf %482, %485 : vector<1x128xf32>
    %cst_99 = arith.constant 2.000000e+00 : f32
    %490 = vector.broadcast %cst_99 : f32 to vector<1x128xf32>
    %491 = arith.subf %490, %489 : vector<1x128xf32>
    %492 = arith.mulf %488, %491 : vector<1x128xf32>
    %493 = arith.addf %486, %492 : vector<1x128xf32>
    %c43 = arith.constant 43 : index
    %c0_100 = arith.constant 0 : index
    %494 = vector.load %arg8[%c43, %c0_100] : memref<128x128xf32, #tpu.memory_space<vmem>>, vector<1x128xf32>
    tpu.vector_store %arg8[%c43, %c0_100], %493 {strides = array<i32>} : memref<128x128xf32, #tpu.memory_space<vmem>>, vector<1x128xf32>,
    %495 = vector.extract_strided_slice %450 {offsets = [4, 0], sizes = [1, 128], strides = [1, 1]} : vector<8x128xf32> to vector<1x128xf32>
    %496 = tpu.reciprocal %493 {approx = true} : vector<1x128xf32> -> vector<1x128xf32>
    %497 = arith.subf %493, %495 : vector<1x128xf32>
    %498 = vector.broadcast %0 : f32 to vector<1x128xf32>
    %499 = arith.mulf %498, %496 : vector<1x128xf32>
    %500 = arith.mulf %493, %496 : vector<1x128xf32>
    %cst_101 = arith.constant 2.000000e+00 : f32
    %501 = vector.broadcast %cst_101 : f32 to vector<1x128xf32>
    %502 = arith.subf %501, %500 : vector<1x128xf32>
    %503 = arith.mulf %499, %502 : vector<1x128xf32>
    %504 = arith.addf %497, %503 : vector<1x128xf32>
    %c44 = arith.constant 44 : index
    %c0_102 = arith.constant 0 : index
    %505 = vector.load %arg8[%c44, %c0_102] : memref<128x128xf32, #tpu.memory_space<vmem>>, vector<1x128xf32>
    tpu.vector_store %arg8[%c44, %c0_102], %504 {strides = array<i32>} : memref<128x128xf32, #tpu.memory_space<vmem>>, vector<1x128xf32>,
    %506 = vector.extract_strided_slice %450 {offsets = [5, 0], sizes = [1, 128], strides = [1, 1]} : vector<8x128xf32> to vector<1x128xf32>
    %507 = tpu.reciprocal %504 {approx = true} : vector<1x128xf32> -> vector<1x128xf32>
    %508 = arith.subf %504, %506 : vector<1x128xf32>
    %509 = vector.broadcast %0 : f32 to vector<1x128xf32>
    %510 = arith.mulf %509, %507 : vector<1x128xf32>
    %511 = arith.mulf %504, %507 : vector<1x128xf32>
    %cst_103 = arith.constant 2.000000e+00 : f32
    %512 = vector.broadcast %cst_103 : f32 to vector<1x128xf32>
    %513 = arith.subf %512, %511 : vector<1x128xf32>
    %514 = arith.mulf %510, %513 : vector<1x128xf32>
    %515 = arith.addf %508, %514 : vector<1x128xf32>
    %c45 = arith.constant 45 : index
    %c0_104 = arith.constant 0 : index
    %516 = vector.load %arg8[%c45, %c0_104] : memref<128x128xf32, #tpu.memory_space<vmem>>, vector<1x128xf32>
    tpu.vector_store %arg8[%c45, %c0_104], %515 {strides = array<i32>} : memref<128x128xf32, #tpu.memory_space<vmem>>, vector<1x128xf32>,
    %517 = vector.extract_strided_slice %450 {offsets = [6, 0], sizes = [1, 128], strides = [1, 1]} : vector<8x128xf32> to vector<1x128xf32>
    %518 = tpu.reciprocal %515 {approx = true} : vector<1x128xf32> -> vector<1x128xf32>
    %519 = arith.subf %515, %517 : vector<1x128xf32>
    %520 = vector.broadcast %0 : f32 to vector<1x128xf32>
    %521 = arith.mulf %520, %518 : vector<1x128xf32>
    %522 = arith.mulf %515, %518 : vector<1x128xf32>
    %cst_105 = arith.constant 2.000000e+00 : f32
    %523 = vector.broadcast %cst_105 : f32 to vector<1x128xf32>
    %524 = arith.subf %523, %522 : vector<1x128xf32>
    %525 = arith.mulf %521, %524 : vector<1x128xf32>
    %526 = arith.addf %519, %525 : vector<1x128xf32>
    %c46 = arith.constant 46 : index
    %c0_106 = arith.constant 0 : index
    %527 = vector.load %arg8[%c46, %c0_106] : memref<128x128xf32, #tpu.memory_space<vmem>>, vector<1x128xf32>
    tpu.vector_store %arg8[%c46, %c0_106], %526 {strides = array<i32>} : memref<128x128xf32, #tpu.memory_space<vmem>>, vector<1x128xf32>,
    %528 = vector.extract_strided_slice %450 {offsets = [7, 0], sizes = [1, 128], strides = [1, 1]} : vector<8x128xf32> to vector<1x128xf32>
    %529 = tpu.reciprocal %526 {approx = true} : vector<1x128xf32> -> vector<1x128xf32>
    %530 = arith.subf %526, %528 : vector<1x128xf32>
    %531 = vector.broadcast %0 : f32 to vector<1x128xf32>
    %532 = arith.mulf %531, %529 : vector<1x128xf32>
    %533 = arith.mulf %526, %529 : vector<1x128xf32>
    %cst_107 = arith.constant 2.000000e+00 : f32
    %534 = vector.broadcast %cst_107 : f32 to vector<1x128xf32>
    %535 = arith.subf %534, %533 : vector<1x128xf32>
    %536 = arith.mulf %532, %535 : vector<1x128xf32>
    %537 = arith.addf %530, %536 : vector<1x128xf32>
    %c47 = arith.constant 47 : index
    %c0_108 = arith.constant 0 : index
    %538 = vector.load %arg8[%c47, %c0_108] : memref<128x128xf32, #tpu.memory_space<vmem>>, vector<1x128xf32>
    tpu.vector_store %arg8[%c47, %c0_108], %537 {strides = array<i32>} : memref<128x128xf32, #tpu.memory_space<vmem>>, vector<1x128xf32>,
    %c48 = arith.constant 48 : index
    %c0_109 = arith.constant 0 : index
    %539 = vector.load %arg2[%c48, %c0_109] : memref<128x128xf32, #tpu.memory_space<vmem>>, vector<8x128xf32>
    %540 = vector.broadcast %1 : f32 to vector<8x128xf32>
    %541 = arith.mulf %540, %539 : vector<8x128xf32>
    %542 = vector.extract_strided_slice %541 {offsets = [0, 0], sizes = [1, 128], strides = [1, 1]} : vector<8x128xf32> to vector<1x128xf32>
    %543 = tpu.reciprocal %537 {approx = true} : vector<1x128xf32> -> vector<1x128xf32>
    %544 = arith.subf %537, %542 : vector<1x128xf32>
    %545 = vector.broadcast %0 : f32 to vector<1x128xf32>
    %546 = arith.mulf %545, %543 : vector<1x128xf32>
    %547 = arith.mulf %537, %543 : vector<1x128xf32>
    %cst_110 = arith.constant 2.000000e+00 : f32
    %548 = vector.broadcast %cst_110 : f32 to vector<1x128xf32>
    %549 = arith.subf %548, %547 : vector<1x128xf32>
    %550 = arith.mulf %546, %549 : vector<1x128xf32>
    %551 = arith.addf %544, %550 : vector<1x128xf32>
    %c48_111 = arith.constant 48 : index
    %c0_112 = arith.constant 0 : index
    %552 = vector.load %arg8[%c48_111, %c0_112] : memref<128x128xf32, #tpu.memory_space<vmem>>, vector<1x128xf32>
    tpu.vector_store %arg8[%c48_111, %c0_112], %551 {strides = array<i32>} : memref<128x128xf32, #tpu.memory_space<vmem>>, vector<1x128xf32>,
    %553 = vector.extract_strided_slice %541 {offsets = [1, 0], sizes = [1, 128], strides = [1, 1]} : vector<8x128xf32> to vector<1x128xf32>
    %554 = tpu.reciprocal %551 {approx = true} : vector<1x128xf32> -> vector<1x128xf32>
    %555 = arith.subf %551, %553 : vector<1x128xf32>
    %556 = vector.broadcast %0 : f32 to vector<1x128xf32>
    %557 = arith.mulf %556, %554 : vector<1x128xf32>
    %558 = arith.mulf %551, %554 : vector<1x128xf32>
    %cst_113 = arith.constant 2.000000e+00 : f32
    %559 = vector.broadcast %cst_113 : f32 to vector<1x128xf32>
    %560 = arith.subf %559, %558 : vector<1x128xf32>
    %561 = arith.mulf %557, %560 : vector<1x128xf32>
    %562 = arith.addf %555, %561 : vector<1x128xf32>
    %c49 = arith.constant 49 : index
    %c0_114 = arith.constant 0 : index
    %563 = vector.load %arg8[%c49, %c0_114] : memref<128x128xf32, #tpu.memory_space<vmem>>, vector<1x128xf32>
    tpu.vector_store %arg8[%c49, %c0_114], %562 {strides = array<i32>} : memref<128x128xf32, #tpu.memory_space<vmem>>, vector<1x128xf32>,
    %564 = vector.extract_strided_slice %541 {offsets = [2, 0], sizes = [1, 128], strides = [1, 1]} : vector<8x128xf32> to vector<1x128xf32>
    %565 = tpu.reciprocal %562 {approx = true} : vector<1x128xf32> -> vector<1x128xf32>
    %566 = arith.subf %562, %564 : vector<1x128xf32>
    %567 = vector.broadcast %0 : f32 to vector<1x128xf32>
    %568 = arith.mulf %567, %565 : vector<1x128xf32>
    %569 = arith.mulf %562, %565 : vector<1x128xf32>
    %cst_115 = arith.constant 2.000000e+00 : f32
    %570 = vector.broadcast %cst_115 : f32 to vector<1x128xf32>
    %571 = arith.subf %570, %569 : vector<1x128xf32>
    %572 = arith.mulf %568, %571 : vector<1x128xf32>
    %573 = arith.addf %566, %572 : vector<1x128xf32>
    %c50 = arith.constant 50 : index
    %c0_116 = arith.constant 0 : index
    %574 = vector.load %arg8[%c50, %c0_116] : memref<128x128xf32, #tpu.memory_space<vmem>>, vector<1x128xf32>
    tpu.vector_store %arg8[%c50, %c0_116], %573 {strides = array<i32>} : memref<128x128xf32, #tpu.memory_space<vmem>>, vector<1x128xf32>,
    %575 = vector.extract_strided_slice %541 {offsets = [3, 0], sizes = [1, 128], strides = [1, 1]} : vector<8x128xf32> to vector<1x128xf32>
    %576 = tpu.reciprocal %573 {approx = true} : vector<1x128xf32> -> vector<1x128xf32>
    %577 = arith.subf %573, %575 : vector<1x128xf32>
    %578 = vector.broadcast %0 : f32 to vector<1x128xf32>
    %579 = arith.mulf %578, %576 : vector<1x128xf32>
    %580 = arith.mulf %573, %576 : vector<1x128xf32>
    %cst_117 = arith.constant 2.000000e+00 : f32
    %581 = vector.broadcast %cst_117 : f32 to vector<1x128xf32>
    %582 = arith.subf %581, %580 : vector<1x128xf32>
    %583 = arith.mulf %579, %582 : vector<1x128xf32>
    %584 = arith.addf %577, %583 : vector<1x128xf32>
    %c51 = arith.constant 51 : index
    %c0_118 = arith.constant 0 : index
    %585 = vector.load %arg8[%c51, %c0_118] : memref<128x128xf32, #tpu.memory_space<vmem>>, vector<1x128xf32>
    tpu.vector_store %arg8[%c51, %c0_118], %584 {strides = array<i32>} : memref<128x128xf32, #tpu.memory_space<vmem>>, vector<1x128xf32>,
    %586 = vector.extract_strided_slice %541 {offsets = [4, 0], sizes = [1, 128], strides = [1, 1]} : vector<8x128xf32> to vector<1x128xf32>
    %587 = tpu.reciprocal %584 {approx = true} : vector<1x128xf32> -> vector<1x128xf32>
    %588 = arith.subf %584, %586 : vector<1x128xf32>
    %589 = vector.broadcast %0 : f32 to vector<1x128xf32>
    %590 = arith.mulf %589, %587 : vector<1x128xf32>
    %591 = arith.mulf %584, %587 : vector<1x128xf32>
    %cst_119 = arith.constant 2.000000e+00 : f32
    %592 = vector.broadcast %cst_119 : f32 to vector<1x128xf32>
    %593 = arith.subf %592, %591 : vector<1x128xf32>
    %594 = arith.mulf %590, %593 : vector<1x128xf32>
    %595 = arith.addf %588, %594 : vector<1x128xf32>
    %c52 = arith.constant 52 : index
    %c0_120 = arith.constant 0 : index
    %596 = vector.load %arg8[%c52, %c0_120] : memref<128x128xf32, #tpu.memory_space<vmem>>, vector<1x128xf32>
    tpu.vector_store %arg8[%c52, %c0_120], %595 {strides = array<i32>} : memref<128x128xf32, #tpu.memory_space<vmem>>, vector<1x128xf32>,
    %597 = vector.extract_strided_slice %541 {offsets = [5, 0], sizes = [1, 128], strides = [1, 1]} : vector<8x128xf32> to vector<1x128xf32>
    %598 = tpu.reciprocal %595 {approx = true} : vector<1x128xf32> -> vector<1x128xf32>
    %599 = arith.subf %595, %597 : vector<1x128xf32>
    %600 = vector.broadcast %0 : f32 to vector<1x128xf32>
    %601 = arith.mulf %600, %598 : vector<1x128xf32>
    %602 = arith.mulf %595, %598 : vector<1x128xf32>
    %cst_121 = arith.constant 2.000000e+00 : f32
    %603 = vector.broadcast %cst_121 : f32 to vector<1x128xf32>
    %604 = arith.subf %603, %602 : vector<1x128xf32>
    %605 = arith.mulf %601, %604 : vector<1x128xf32>
    %606 = arith.addf %599, %605 : vector<1x128xf32>
    %c53 = arith.constant 53 : index
    %c0_122 = arith.constant 0 : index
    %607 = vector.load %arg8[%c53, %c0_122] : memref<128x128xf32, #tpu.memory_space<vmem>>, vector<1x128xf32>
    tpu.vector_store %arg8[%c53, %c0_122], %606 {strides = array<i32>} : memref<128x128xf32, #tpu.memory_space<vmem>>, vector<1x128xf32>,
    %608 = vector.extract_strided_slice %541 {offsets = [6, 0], sizes = [1, 128], strides = [1, 1]} : vector<8x128xf32> to vector<1x128xf32>
    %609 = tpu.reciprocal %606 {approx = true} : vector<1x128xf32> -> vector<1x128xf32>
    %610 = arith.subf %606, %608 : vector<1x128xf32>
    %611 = vector.broadcast %0 : f32 to vector<1x128xf32>
    %612 = arith.mulf %611, %609 : vector<1x128xf32>
    %613 = arith.mulf %606, %609 : vector<1x128xf32>
    %cst_123 = arith.constant 2.000000e+00 : f32
    %614 = vector.broadcast %cst_123 : f32 to vector<1x128xf32>
    %615 = arith.subf %614, %613 : vector<1x128xf32>
    %616 = arith.mulf %612, %615 : vector<1x128xf32>
    %617 = arith.addf %610, %616 : vector<1x128xf32>
    %c54 = arith.constant 54 : index
    %c0_124 = arith.constant 0 : index
    %618 = vector.load %arg8[%c54, %c0_124] : memref<128x128xf32, #tpu.memory_space<vmem>>, vector<1x128xf32>
    tpu.vector_store %arg8[%c54, %c0_124], %617 {strides = array<i32>} : memref<128x128xf32, #tpu.memory_space<vmem>>, vector<1x128xf32>,
    %619 = vector.extract_strided_slice %541 {offsets = [7, 0], sizes = [1, 128], strides = [1, 1]} : vector<8x128xf32> to vector<1x128xf32>
    %620 = tpu.reciprocal %617 {approx = true} : vector<1x128xf32> -> vector<1x128xf32>
    %621 = arith.subf %617, %619 : vector<1x128xf32>
    %622 = vector.broadcast %0 : f32 to vector<1x128xf32>
    %623 = arith.mulf %622, %620 : vector<1x128xf32>
    %624 = arith.mulf %617, %620 : vector<1x128xf32>
    %cst_125 = arith.constant 2.000000e+00 : f32
    %625 = vector.broadcast %cst_125 : f32 to vector<1x128xf32>
    %626 = arith.subf %625, %624 : vector<1x128xf32>
    %627 = arith.mulf %623, %626 : vector<1x128xf32>
    %628 = arith.addf %621, %627 : vector<1x128xf32>
    %c55 = arith.constant 55 : index
    %c0_126 = arith.constant 0 : index
    %629 = vector.load %arg8[%c55, %c0_126] : memref<128x128xf32, #tpu.memory_space<vmem>>, vector<1x128xf32>
    tpu.vector_store %arg8[%c55, %c0_126], %628 {strides = array<i32>} : memref<128x128xf32, #tpu.memory_space<vmem>>, vector<1x128xf32>,
    %c56 = arith.constant 56 : index
    %c0_127 = arith.constant 0 : index
    %630 = vector.load %arg2[%c56, %c0_127] : memref<128x128xf32, #tpu.memory_space<vmem>>, vector<8x128xf32>
    %631 = vector.broadcast %1 : f32 to vector<8x128xf32>
    %632 = arith.mulf %631, %630 : vector<8x128xf32>
    %633 = vector.extract_strided_slice %632 {offsets = [0, 0], sizes = [1, 128], strides = [1, 1]} : vector<8x128xf32> to vector<1x128xf32>
    %634 = tpu.reciprocal %628 {approx = true} : vector<1x128xf32> -> vector<1x128xf32>
    %635 = arith.subf %628, %633 : vector<1x128xf32>
    %636 = vector.broadcast %0 : f32 to vector<1x128xf32>
    %637 = arith.mulf %636, %634 : vector<1x128xf32>
    %638 = arith.mulf %628, %634 : vector<1x128xf32>
    %cst_128 = arith.constant 2.000000e+00 : f32
    %639 = vector.broadcast %cst_128 : f32 to vector<1x128xf32>
    %640 = arith.subf %639, %638 : vector<1x128xf32>
    %641 = arith.mulf %637, %640 : vector<1x128xf32>
    %642 = arith.addf %635, %641 : vector<1x128xf32>
    %c56_129 = arith.constant 56 : index
    %c0_130 = arith.constant 0 : index
    %643 = vector.load %arg8[%c56_129, %c0_130] : memref<128x128xf32, #tpu.memory_space<vmem>>, vector<1x128xf32>
    tpu.vector_store %arg8[%c56_129, %c0_130], %642 {strides = array<i32>} : memref<128x128xf32, #tpu.memory_space<vmem>>, vector<1x128xf32>,
    %644 = vector.extract_strided_slice %632 {offsets = [1, 0], sizes = [1, 128], strides = [1, 1]} : vector<8x128xf32> to vector<1x128xf32>
    %645 = tpu.reciprocal %642 {approx = true} : vector<1x128xf32> -> vector<1x128xf32>
    %646 = arith.subf %642, %644 : vector<1x128xf32>
    %647 = vector.broadcast %0 : f32 to vector<1x128xf32>
    %648 = arith.mulf %647, %645 : vector<1x128xf32>
    %649 = arith.mulf %642, %645 : vector<1x128xf32>
    %cst_131 = arith.constant 2.000000e+00 : f32
    %650 = vector.broadcast %cst_131 : f32 to vector<1x128xf32>
    %651 = arith.subf %650, %649 : vector<1x128xf32>
    %652 = arith.mulf %648, %651 : vector<1x128xf32>
    %653 = arith.addf %646, %652 : vector<1x128xf32>
    %c57 = arith.constant 57 : index
    %c0_132 = arith.constant 0 : index
    %654 = vector.load %arg8[%c57, %c0_132] : memref<128x128xf32, #tpu.memory_space<vmem>>, vector<1x128xf32>
    tpu.vector_store %arg8[%c57, %c0_132], %653 {strides = array<i32>} : memref<128x128xf32, #tpu.memory_space<vmem>>, vector<1x128xf32>,
    %655 = vector.extract_strided_slice %632 {offsets = [2, 0], sizes = [1, 128], strides = [1, 1]} : vector<8x128xf32> to vector<1x128xf32>
    %656 = tpu.reciprocal %653 {approx = true} : vector<1x128xf32> -> vector<1x128xf32>
    %657 = arith.subf %653, %655 : vector<1x128xf32>
    %658 = vector.broadcast %0 : f32 to vector<1x128xf32>
    %659 = arith.mulf %658, %656 : vector<1x128xf32>
    %660 = arith.mulf %653, %656 : vector<1x128xf32>
    %cst_133 = arith.constant 2.000000e+00 : f32
    %661 = vector.broadcast %cst_133 : f32 to vector<1x128xf32>
    %662 = arith.subf %661, %660 : vector<1x128xf32>
    %663 = arith.mulf %659, %662 : vector<1x128xf32>
    %664 = arith.addf %657, %663 : vector<1x128xf32>
    %c58 = arith.constant 58 : index
    %c0_134 = arith.constant 0 : index
    %665 = vector.load %arg8[%c58, %c0_134] : memref<128x128xf32, #tpu.memory_space<vmem>>, vector<1x128xf32>
    tpu.vector_store %arg8[%c58, %c0_134], %664 {strides = array<i32>} : memref<128x128xf32, #tpu.memory_space<vmem>>, vector<1x128xf32>,
    %666 = vector.extract_strided_slice %632 {offsets = [3, 0], sizes = [1, 128], strides = [1, 1]} : vector<8x128xf32> to vector<1x128xf32>
    %667 = tpu.reciprocal %664 {approx = true} : vector<1x128xf32> -> vector<1x128xf32>
    %668 = arith.subf %664, %666 : vector<1x128xf32>
    %669 = vector.broadcast %0 : f32 to vector<1x128xf32>
    %670 = arith.mulf %669, %667 : vector<1x128xf32>
    %671 = arith.mulf %664, %667 : vector<1x128xf32>
    %cst_135 = arith.constant 2.000000e+00 : f32
    %672 = vector.broadcast %cst_135 : f32 to vector<1x128xf32>
    %673 = arith.subf %672, %671 : vector<1x128xf32>
    %674 = arith.mulf %670, %673 : vector<1x128xf32>
    %675 = arith.addf %668, %674 : vector<1x128xf32>
    %c59 = arith.constant 59 : index
    %c0_136 = arith.constant 0 : index
    %676 = vector.load %arg8[%c59, %c0_136] : memref<128x128xf32, #tpu.memory_space<vmem>>, vector<1x128xf32>
    tpu.vector_store %arg8[%c59, %c0_136], %675 {strides = array<i32>} : memref<128x128xf32, #tpu.memory_space<vmem>>, vector<1x128xf32>,
    %677 = vector.extract_strided_slice %632 {offsets = [4, 0], sizes = [1, 128], strides = [1, 1]} : vector<8x128xf32> to vector<1x128xf32>
    %678 = tpu.reciprocal %675 {approx = true} : vector<1x128xf32> -> vector<1x128xf32>
    %679 = arith.subf %675, %677 : vector<1x128xf32>
    %680 = vector.broadcast %0 : f32 to vector<1x128xf32>
    %681 = arith.mulf %680, %678 : vector<1x128xf32>
    %682 = arith.mulf %675, %678 : vector<1x128xf32>
    %cst_137 = arith.constant 2.000000e+00 : f32
    %683 = vector.broadcast %cst_137 : f32 to vector<1x128xf32>
    %684 = arith.subf %683, %682 : vector<1x128xf32>
    %685 = arith.mulf %681, %684 : vector<1x128xf32>
    %686 = arith.addf %679, %685 : vector<1x128xf32>
    %c60 = arith.constant 60 : index
    %c0_138 = arith.constant 0 : index
    %687 = vector.load %arg8[%c60, %c0_138] : memref<128x128xf32, #tpu.memory_space<vmem>>, vector<1x128xf32>
    tpu.vector_store %arg8[%c60, %c0_138], %686 {strides = array<i32>} : memref<128x128xf32, #tpu.memory_space<vmem>>, vector<1x128xf32>,
    %688 = vector.extract_strided_slice %632 {offsets = [5, 0], sizes = [1, 128], strides = [1, 1]} : vector<8x128xf32> to vector<1x128xf32>
    %689 = tpu.reciprocal %686 {approx = true} : vector<1x128xf32> -> vector<1x128xf32>
    %690 = arith.subf %686, %688 : vector<1x128xf32>
    %691 = vector.broadcast %0 : f32 to vector<1x128xf32>
    %692 = arith.mulf %691, %689 : vector<1x128xf32>
    %693 = arith.mulf %686, %689 : vector<1x128xf32>
    %cst_139 = arith.constant 2.000000e+00 : f32
    %694 = vector.broadcast %cst_139 : f32 to vector<1x128xf32>
    %695 = arith.subf %694, %693 : vector<1x128xf32>
    %696 = arith.mulf %692, %695 : vector<1x128xf32>
    %697 = arith.addf %690, %696 : vector<1x128xf32>
    %c61 = arith.constant 61 : index
    %c0_140 = arith.constant 0 : index
    %698 = vector.load %arg8[%c61, %c0_140] : memref<128x128xf32, #tpu.memory_space<vmem>>, vector<1x128xf32>
    tpu.vector_store %arg8[%c61, %c0_140], %697 {strides = array<i32>} : memref<128x128xf32, #tpu.memory_space<vmem>>, vector<1x128xf32>,
    %699 = vector.extract_strided_slice %632 {offsets = [6, 0], sizes = [1, 128], strides = [1, 1]} : vector<8x128xf32> to vector<1x128xf32>
    %700 = tpu.reciprocal %697 {approx = true} : vector<1x128xf32> -> vector<1x128xf32>
    %701 = arith.subf %697, %699 : vector<1x128xf32>
    %702 = vector.broadcast %0 : f32 to vector<1x128xf32>
    %703 = arith.mulf %702, %700 : vector<1x128xf32>
    %704 = arith.mulf %697, %700 : vector<1x128xf32>
    %cst_141 = arith.constant 2.000000e+00 : f32
    %705 = vector.broadcast %cst_141 : f32 to vector<1x128xf32>
    %706 = arith.subf %705, %704 : vector<1x128xf32>
    %707 = arith.mulf %703, %706 : vector<1x128xf32>
    %708 = arith.addf %701, %707 : vector<1x128xf32>
    %c62 = arith.constant 62 : index
    %c0_142 = arith.constant 0 : index
    %709 = vector.load %arg8[%c62, %c0_142] : memref<128x128xf32, #tpu.memory_space<vmem>>, vector<1x128xf32>
    tpu.vector_store %arg8[%c62, %c0_142], %708 {strides = array<i32>} : memref<128x128xf32, #tpu.memory_space<vmem>>, vector<1x128xf32>,
    %710 = vector.extract_strided_slice %632 {offsets = [7, 0], sizes = [1, 128], strides = [1, 1]} : vector<8x128xf32> to vector<1x128xf32>
    %711 = tpu.reciprocal %708 {approx = true} : vector<1x128xf32> -> vector<1x128xf32>
    %712 = arith.subf %708, %710 : vector<1x128xf32>
    %713 = vector.broadcast %0 : f32 to vector<1x128xf32>
    %714 = arith.mulf %713, %711 : vector<1x128xf32>
    %715 = arith.mulf %708, %711 : vector<1x128xf32>
    %cst_143 = arith.constant 2.000000e+00 : f32
    %716 = vector.broadcast %cst_143 : f32 to vector<1x128xf32>
    %717 = arith.subf %716, %715 : vector<1x128xf32>
    %718 = arith.mulf %714, %717 : vector<1x128xf32>
    %719 = arith.addf %712, %718 : vector<1x128xf32>
    %c63 = arith.constant 63 : index
    %c0_144 = arith.constant 0 : index
    %720 = vector.load %arg8[%c63, %c0_144] : memref<128x128xf32, #tpu.memory_space<vmem>>, vector<1x128xf32>
    tpu.vector_store %arg8[%c63, %c0_144], %719 {strides = array<i32>} : memref<128x128xf32, #tpu.memory_space<vmem>>, vector<1x128xf32>,
    %c64 = arith.constant 64 : index
    %c0_145 = arith.constant 0 : index
    %721 = vector.load %arg2[%c64, %c0_145] : memref<128x128xf32, #tpu.memory_space<vmem>>, vector<8x128xf32>
    %722 = vector.broadcast %1 : f32 to vector<8x128xf32>
    %723 = arith.mulf %722, %721 : vector<8x128xf32>
    %724 = vector.extract_strided_slice %723 {offsets = [0, 0], sizes = [1, 128], strides = [1, 1]} : vector<8x128xf32> to vector<1x128xf32>
    %725 = tpu.reciprocal %719 {approx = true} : vector<1x128xf32> -> vector<1x128xf32>
    %726 = arith.subf %719, %724 : vector<1x128xf32>
    %727 = vector.broadcast %0 : f32 to vector<1x128xf32>
    %728 = arith.mulf %727, %725 : vector<1x128xf32>
    %729 = arith.mulf %719, %725 : vector<1x128xf32>
    %cst_146 = arith.constant 2.000000e+00 : f32
    %730 = vector.broadcast %cst_146 : f32 to vector<1x128xf32>
    %731 = arith.subf %730, %729 : vector<1x128xf32>
    %732 = arith.mulf %728, %731 : vector<1x128xf32>
    %733 = arith.addf %726, %732 : vector<1x128xf32>
    %c64_147 = arith.constant 64 : index
    %c0_148 = arith.constant 0 : index
    %734 = vector.load %arg8[%c64_147, %c0_148] : memref<128x128xf32, #tpu.memory_space<vmem>>, vector<1x128xf32>
    tpu.vector_store %arg8[%c64_147, %c0_148], %733 {strides = array<i32>} : memref<128x128xf32, #tpu.memory_space<vmem>>, vector<1x128xf32>,
    %735 = vector.extract_strided_slice %723 {offsets = [1, 0], sizes = [1, 128], strides = [1, 1]} : vector<8x128xf32> to vector<1x128xf32>
    %736 = tpu.reciprocal %733 {approx = true} : vector<1x128xf32> -> vector<1x128xf32>
    %737 = arith.subf %733, %735 : vector<1x128xf32>
    %738 = vector.broadcast %0 : f32 to vector<1x128xf32>
    %739 = arith.mulf %738, %736 : vector<1x128xf32>
    %740 = arith.mulf %733, %736 : vector<1x128xf32>
    %cst_149 = arith.constant 2.000000e+00 : f32
    %741 = vector.broadcast %cst_149 : f32 to vector<1x128xf32>
    %742 = arith.subf %741, %740 : vector<1x128xf32>
    %743 = arith.mulf %739, %742 : vector<1x128xf32>
    %744 = arith.addf %737, %743 : vector<1x128xf32>
    %c65 = arith.constant 65 : index
    %c0_150 = arith.constant 0 : index
    %745 = vector.load %arg8[%c65, %c0_150] : memref<128x128xf32, #tpu.memory_space<vmem>>, vector<1x128xf32>
    tpu.vector_store %arg8[%c65, %c0_150], %744 {strides = array<i32>} : memref<128x128xf32, #tpu.memory_space<vmem>>, vector<1x128xf32>,
    %746 = vector.extract_strided_slice %723 {offsets = [2, 0], sizes = [1, 128], strides = [1, 1]} : vector<8x128xf32> to vector<1x128xf32>
    %747 = tpu.reciprocal %744 {approx = true} : vector<1x128xf32> -> vector<1x128xf32>
    %748 = arith.subf %744, %746 : vector<1x128xf32>
    %749 = vector.broadcast %0 : f32 to vector<1x128xf32>
    %750 = arith.mulf %749, %747 : vector<1x128xf32>
    %751 = arith.mulf %744, %747 : vector<1x128xf32>
    %cst_151 = arith.constant 2.000000e+00 : f32
    %752 = vector.broadcast %cst_151 : f32 to vector<1x128xf32>
    %753 = arith.subf %752, %751 : vector<1x128xf32>
    %754 = arith.mulf %750, %753 : vector<1x128xf32>
    %755 = arith.addf %748, %754 : vector<1x128xf32>
    %c66 = arith.constant 66 : index
    %c0_152 = arith.constant 0 : index
    %756 = vector.load %arg8[%c66, %c0_152] : memref<128x128xf32, #tpu.memory_space<vmem>>, vector<1x128xf32>
    tpu.vector_store %arg8[%c66, %c0_152], %755 {strides = array<i32>} : memref<128x128xf32, #tpu.memory_space<vmem>>, vector<1x128xf32>,
    %757 = vector.extract_strided_slice %723 {offsets = [3, 0], sizes = [1, 128], strides = [1, 1]} : vector<8x128xf32> to vector<1x128xf32>
    %758 = tpu.reciprocal %755 {approx = true} : vector<1x128xf32> -> vector<1x128xf32>
    %759 = arith.subf %755, %757 : vector<1x128xf32>
    %760 = vector.broadcast %0 : f32 to vector<1x128xf32>
    %761 = arith.mulf %760, %758 : vector<1x128xf32>
    %762 = arith.mulf %755, %758 : vector<1x128xf32>
    %cst_153 = arith.constant 2.000000e+00 : f32
    %763 = vector.broadcast %cst_153 : f32 to vector<1x128xf32>
    %764 = arith.subf %763, %762 : vector<1x128xf32>
    %765 = arith.mulf %761, %764 : vector<1x128xf32>
    %766 = arith.addf %759, %765 : vector<1x128xf32>
    %c67 = arith.constant 67 : index
    %c0_154 = arith.constant 0 : index
    %767 = vector.load %arg8[%c67, %c0_154] : memref<128x128xf32, #tpu.memory_space<vmem>>, vector<1x128xf32>
    tpu.vector_store %arg8[%c67, %c0_154], %766 {strides = array<i32>} : memref<128x128xf32, #tpu.memory_space<vmem>>, vector<1x128xf32>,
    %768 = vector.extract_strided_slice %723 {offsets = [4, 0], sizes = [1, 128], strides = [1, 1]} : vector<8x128xf32> to vector<1x128xf32>
    %769 = tpu.reciprocal %766 {approx = true} : vector<1x128xf32> -> vector<1x128xf32>
    %770 = arith.subf %766, %768 : vector<1x128xf32>
    %771 = vector.broadcast %0 : f32 to vector<1x128xf32>
    %772 = arith.mulf %771, %769 : vector<1x128xf32>
    %773 = arith.mulf %766, %769 : vector<1x128xf32>
    %cst_155 = arith.constant 2.000000e+00 : f32
    %774 = vector.broadcast %cst_155 : f32 to vector<1x128xf32>
    %775 = arith.subf %774, %773 : vector<1x128xf32>
    %776 = arith.mulf %772, %775 : vector<1x128xf32>
    %777 = arith.addf %770, %776 : vector<1x128xf32>
    %c68 = arith.constant 68 : index
    %c0_156 = arith.constant 0 : index
    %778 = vector.load %arg8[%c68, %c0_156] : memref<128x128xf32, #tpu.memory_space<vmem>>, vector<1x128xf32>
    tpu.vector_store %arg8[%c68, %c0_156], %777 {strides = array<i32>} : memref<128x128xf32, #tpu.memory_space<vmem>>, vector<1x128xf32>,
    %779 = vector.extract_strided_slice %723 {offsets = [5, 0], sizes = [1, 128], strides = [1, 1]} : vector<8x128xf32> to vector<1x128xf32>
    %780 = tpu.reciprocal %777 {approx = true} : vector<1x128xf32> -> vector<1x128xf32>
    %781 = arith.subf %777, %779 : vector<1x128xf32>
    %782 = vector.broadcast %0 : f32 to vector<1x128xf32>
    %783 = arith.mulf %782, %780 : vector<1x128xf32>
    %784 = arith.mulf %777, %780 : vector<1x128xf32>
    %cst_157 = arith.constant 2.000000e+00 : f32
    %785 = vector.broadcast %cst_157 : f32 to vector<1x128xf32>
    %786 = arith.subf %785, %784 : vector<1x128xf32>
    %787 = arith.mulf %783, %786 : vector<1x128xf32>
    %788 = arith.addf %781, %787 : vector<1x128xf32>
    %c69 = arith.constant 69 : index
    %c0_158 = arith.constant 0 : index
    %789 = vector.load %arg8[%c69, %c0_158] : memref<128x128xf32, #tpu.memory_space<vmem>>, vector<1x128xf32>
    tpu.vector_store %arg8[%c69, %c0_158], %788 {strides = array<i32>} : memref<128x128xf32, #tpu.memory_space<vmem>>, vector<1x128xf32>,
    %790 = vector.extract_strided_slice %723 {offsets = [6, 0], sizes = [1, 128], strides = [1, 1]} : vector<8x128xf32> to vector<1x128xf32>
    %791 = tpu.reciprocal %788 {approx = true} : vector<1x128xf32> -> vector<1x128xf32>
    %792 = arith.subf %788, %790 : vector<1x128xf32>
    %793 = vector.broadcast %0 : f32 to vector<1x128xf32>
    %794 = arith.mulf %793, %791 : vector<1x128xf32>
    %795 = arith.mulf %788, %791 : vector<1x128xf32>
    %cst_159 = arith.constant 2.000000e+00 : f32
    %796 = vector.broadcast %cst_159 : f32 to vector<1x128xf32>
    %797 = arith.subf %796, %795 : vector<1x128xf32>
    %798 = arith.mulf %794, %797 : vector<1x128xf32>
    %799 = arith.addf %792, %798 : vector<1x128xf32>
    %c70 = arith.constant 70 : index
    %c0_160 = arith.constant 0 : index
    %800 = vector.load %arg8[%c70, %c0_160] : memref<128x128xf32, #tpu.memory_space<vmem>>, vector<1x128xf32>
    tpu.vector_store %arg8[%c70, %c0_160], %799 {strides = array<i32>} : memref<128x128xf32, #tpu.memory_space<vmem>>, vector<1x128xf32>,
    %801 = vector.extract_strided_slice %723 {offsets = [7, 0], sizes = [1, 128], strides = [1, 1]} : vector<8x128xf32> to vector<1x128xf32>
    %802 = tpu.reciprocal %799 {approx = true} : vector<1x128xf32> -> vector<1x128xf32>
    %803 = arith.subf %799, %801 : vector<1x128xf32>
    %804 = vector.broadcast %0 : f32 to vector<1x128xf32>
    %805 = arith.mulf %804, %802 : vector<1x128xf32>
    %806 = arith.mulf %799, %802 : vector<1x128xf32>
    %cst_161 = arith.constant 2.000000e+00 : f32
    %807 = vector.broadcast %cst_161 : f32 to vector<1x128xf32>
    %808 = arith.subf %807, %806 : vector<1x128xf32>
    %809 = arith.mulf %805, %808 : vector<1x128xf32>
    %810 = arith.addf %803, %809 : vector<1x128xf32>
    %c71 = arith.constant 71 : index
    %c0_162 = arith.constant 0 : index
    %811 = vector.load %arg8[%c71, %c0_162] : memref<128x128xf32, #tpu.memory_space<vmem>>, vector<1x128xf32>
    tpu.vector_store %arg8[%c71, %c0_162], %810 {strides = array<i32>} : memref<128x128xf32, #tpu.memory_space<vmem>>, vector<1x128xf32>,
    %c72 = arith.constant 72 : index
    %c0_163 = arith.constant 0 : index
    %812 = vector.load %arg2[%c72, %c0_163] : memref<128x128xf32, #tpu.memory_space<vmem>>, vector<8x128xf32>
    %813 = vector.broadcast %1 : f32 to vector<8x128xf32>
    %814 = arith.mulf %813, %812 : vector<8x128xf32>
    %815 = vector.extract_strided_slice %814 {offsets = [0, 0], sizes = [1, 128], strides = [1, 1]} : vector<8x128xf32> to vector<1x128xf32>
    %816 = tpu.reciprocal %810 {approx = true} : vector<1x128xf32> -> vector<1x128xf32>
    %817 = arith.subf %810, %815 : vector<1x128xf32>
    %818 = vector.broadcast %0 : f32 to vector<1x128xf32>
    %819 = arith.mulf %818, %816 : vector<1x128xf32>
    %820 = arith.mulf %810, %816 : vector<1x128xf32>
    %cst_164 = arith.constant 2.000000e+00 : f32
    %821 = vector.broadcast %cst_164 : f32 to vector<1x128xf32>
    %822 = arith.subf %821, %820 : vector<1x128xf32>
    %823 = arith.mulf %819, %822 : vector<1x128xf32>
    %824 = arith.addf %817, %823 : vector<1x128xf32>
    %c72_165 = arith.constant 72 : index
    %c0_166 = arith.constant 0 : index
    %825 = vector.load %arg8[%c72_165, %c0_166] : memref<128x128xf32, #tpu.memory_space<vmem>>, vector<1x128xf32>
    tpu.vector_store %arg8[%c72_165, %c0_166], %824 {strides = array<i32>} : memref<128x128xf32, #tpu.memory_space<vmem>>, vector<1x128xf32>,
    %826 = vector.extract_strided_slice %814 {offsets = [1, 0], sizes = [1, 128], strides = [1, 1]} : vector<8x128xf32> to vector<1x128xf32>
    %827 = tpu.reciprocal %824 {approx = true} : vector<1x128xf32> -> vector<1x128xf32>
    %828 = arith.subf %824, %826 : vector<1x128xf32>
    %829 = vector.broadcast %0 : f32 to vector<1x128xf32>
    %830 = arith.mulf %829, %827 : vector<1x128xf32>
    %831 = arith.mulf %824, %827 : vector<1x128xf32>
    %cst_167 = arith.constant 2.000000e+00 : f32
    %832 = vector.broadcast %cst_167 : f32 to vector<1x128xf32>
    %833 = arith.subf %832, %831 : vector<1x128xf32>
    %834 = arith.mulf %830, %833 : vector<1x128xf32>
    %835 = arith.addf %828, %834 : vector<1x128xf32>
    %c73 = arith.constant 73 : index
    %c0_168 = arith.constant 0 : index
    %836 = vector.load %arg8[%c73, %c0_168] : memref<128x128xf32, #tpu.memory_space<vmem>>, vector<1x128xf32>
    tpu.vector_store %arg8[%c73, %c0_168], %835 {strides = array<i32>} : memref<128x128xf32, #tpu.memory_space<vmem>>, vector<1x128xf32>,
    %837 = vector.extract_strided_slice %814 {offsets = [2, 0], sizes = [1, 128], strides = [1, 1]} : vector<8x128xf32> to vector<1x128xf32>
    %838 = tpu.reciprocal %835 {approx = true} : vector<1x128xf32> -> vector<1x128xf32>
    %839 = arith.subf %835, %837 : vector<1x128xf32>
    %840 = vector.broadcast %0 : f32 to vector<1x128xf32>
    %841 = arith.mulf %840, %838 : vector<1x128xf32>
    %842 = arith.mulf %835, %838 : vector<1x128xf32>
    %cst_169 = arith.constant 2.000000e+00 : f32
    %843 = vector.broadcast %cst_169 : f32 to vector<1x128xf32>
    %844 = arith.subf %843, %842 : vector<1x128xf32>
    %845 = arith.mulf %841, %844 : vector<1x128xf32>
    %846 = arith.addf %839, %845 : vector<1x128xf32>
    %c74 = arith.constant 74 : index
    %c0_170 = arith.constant 0 : index
    %847 = vector.load %arg8[%c74, %c0_170] : memref<128x128xf32, #tpu.memory_space<vmem>>, vector<1x128xf32>
    tpu.vector_store %arg8[%c74, %c0_170], %846 {strides = array<i32>} : memref<128x128xf32, #tpu.memory_space<vmem>>, vector<1x128xf32>,
    %848 = vector.extract_strided_slice %814 {offsets = [3, 0], sizes = [1, 128], strides = [1, 1]} : vector<8x128xf32> to vector<1x128xf32>
    %849 = tpu.reciprocal %846 {approx = true} : vector<1x128xf32> -> vector<1x128xf32>
    %850 = arith.subf %846, %848 : vector<1x128xf32>
    %851 = vector.broadcast %0 : f32 to vector<1x128xf32>
    %852 = arith.mulf %851, %849 : vector<1x128xf32>
    %853 = arith.mulf %846, %849 : vector<1x128xf32>
    %cst_171 = arith.constant 2.000000e+00 : f32
    %854 = vector.broadcast %cst_171 : f32 to vector<1x128xf32>
    %855 = arith.subf %854, %853 : vector<1x128xf32>
    %856 = arith.mulf %852, %855 : vector<1x128xf32>
    %857 = arith.addf %850, %856 : vector<1x128xf32>
    %c75 = arith.constant 75 : index
    %c0_172 = arith.constant 0 : index
    %858 = vector.load %arg8[%c75, %c0_172] : memref<128x128xf32, #tpu.memory_space<vmem>>, vector<1x128xf32>
    tpu.vector_store %arg8[%c75, %c0_172], %857 {strides = array<i32>} : memref<128x128xf32, #tpu.memory_space<vmem>>, vector<1x128xf32>,
    %859 = vector.extract_strided_slice %814 {offsets = [4, 0], sizes = [1, 128], strides = [1, 1]} : vector<8x128xf32> to vector<1x128xf32>
    %860 = tpu.reciprocal %857 {approx = true} : vector<1x128xf32> -> vector<1x128xf32>
    %861 = arith.subf %857, %859 : vector<1x128xf32>
    %862 = vector.broadcast %0 : f32 to vector<1x128xf32>
    %863 = arith.mulf %862, %860 : vector<1x128xf32>
    %864 = arith.mulf %857, %860 : vector<1x128xf32>
    %cst_173 = arith.constant 2.000000e+00 : f32
    %865 = vector.broadcast %cst_173 : f32 to vector<1x128xf32>
    %866 = arith.subf %865, %864 : vector<1x128xf32>
    %867 = arith.mulf %863, %866 : vector<1x128xf32>
    %868 = arith.addf %861, %867 : vector<1x128xf32>
    %c76 = arith.constant 76 : index
    %c0_174 = arith.constant 0 : index
    %869 = vector.load %arg8[%c76, %c0_174] : memref<128x128xf32, #tpu.memory_space<vmem>>, vector<1x128xf32>
    tpu.vector_store %arg8[%c76, %c0_174], %868 {strides = array<i32>} : memref<128x128xf32, #tpu.memory_space<vmem>>, vector<1x128xf32>,
    %870 = vector.extract_strided_slice %814 {offsets = [5, 0], sizes = [1, 128], strides = [1, 1]} : vector<8x128xf32> to vector<1x128xf32>
    %871 = tpu.reciprocal %868 {approx = true} : vector<1x128xf32> -> vector<1x128xf32>
    %872 = arith.subf %868, %870 : vector<1x128xf32>
    %873 = vector.broadcast %0 : f32 to vector<1x128xf32>
    %874 = arith.mulf %873, %871 : vector<1x128xf32>
    %875 = arith.mulf %868, %871 : vector<1x128xf32>
    %cst_175 = arith.constant 2.000000e+00 : f32
    %876 = vector.broadcast %cst_175 : f32 to vector<1x128xf32>
    %877 = arith.subf %876, %875 : vector<1x128xf32>
    %878 = arith.mulf %874, %877 : vector<1x128xf32>
    %879 = arith.addf %872, %878 : vector<1x128xf32>
    %c77 = arith.constant 77 : index
    %c0_176 = arith.constant 0 : index
    %880 = vector.load %arg8[%c77, %c0_176] : memref<128x128xf32, #tpu.memory_space<vmem>>, vector<1x128xf32>
    tpu.vector_store %arg8[%c77, %c0_176], %879 {strides = array<i32>} : memref<128x128xf32, #tpu.memory_space<vmem>>, vector<1x128xf32>,
    %881 = vector.extract_strided_slice %814 {offsets = [6, 0], sizes = [1, 128], strides = [1, 1]} : vector<8x128xf32> to vector<1x128xf32>
    %882 = tpu.reciprocal %879 {approx = true} : vector<1x128xf32> -> vector<1x128xf32>
    %883 = arith.subf %879, %881 : vector<1x128xf32>
    %884 = vector.broadcast %0 : f32 to vector<1x128xf32>
    %885 = arith.mulf %884, %882 : vector<1x128xf32>
    %886 = arith.mulf %879, %882 : vector<1x128xf32>
    %cst_177 = arith.constant 2.000000e+00 : f32
    %887 = vector.broadcast %cst_177 : f32 to vector<1x128xf32>
    %888 = arith.subf %887, %886 : vector<1x128xf32>
    %889 = arith.mulf %885, %888 : vector<1x128xf32>
    %890 = arith.addf %883, %889 : vector<1x128xf32>
    %c78 = arith.constant 78 : index
    %c0_178 = arith.constant 0 : index
    %891 = vector.load %arg8[%c78, %c0_178] : memref<128x128xf32, #tpu.memory_space<vmem>>, vector<1x128xf32>
    tpu.vector_store %arg8[%c78, %c0_178], %890 {strides = array<i32>} : memref<128x128xf32, #tpu.memory_space<vmem>>, vector<1x128xf32>,
    %892 = vector.extract_strided_slice %814 {offsets = [7, 0], sizes = [1, 128], strides = [1, 1]} : vector<8x128xf32> to vector<1x128xf32>
    %893 = tpu.reciprocal %890 {approx = true} : vector<1x128xf32> -> vector<1x128xf32>
    %894 = arith.subf %890, %892 : vector<1x128xf32>
    %895 = vector.broadcast %0 : f32 to vector<1x128xf32>
    %896 = arith.mulf %895, %893 : vector<1x128xf32>
    %897 = arith.mulf %890, %893 : vector<1x128xf32>
    %cst_179 = arith.constant 2.000000e+00 : f32
    %898 = vector.broadcast %cst_179 : f32 to vector<1x128xf32>
    %899 = arith.subf %898, %897 : vector<1x128xf32>
    %900 = arith.mulf %896, %899 : vector<1x128xf32>
    %901 = arith.addf %894, %900 : vector<1x128xf32>
    %c79 = arith.constant 79 : index
    %c0_180 = arith.constant 0 : index
    %902 = vector.load %arg8[%c79, %c0_180] : memref<128x128xf32, #tpu.memory_space<vmem>>, vector<1x128xf32>
    tpu.vector_store %arg8[%c79, %c0_180], %901 {strides = array<i32>} : memref<128x128xf32, #tpu.memory_space<vmem>>, vector<1x128xf32>,
    %c80 = arith.constant 80 : index
    %c0_181 = arith.constant 0 : index
    %903 = vector.load %arg2[%c80, %c0_181] : memref<128x128xf32, #tpu.memory_space<vmem>>, vector<8x128xf32>
    %904 = vector.broadcast %1 : f32 to vector<8x128xf32>
    %905 = arith.mulf %904, %903 : vector<8x128xf32>
    %906 = vector.extract_strided_slice %905 {offsets = [0, 0], sizes = [1, 128], strides = [1, 1]} : vector<8x128xf32> to vector<1x128xf32>
    %907 = tpu.reciprocal %901 {approx = true} : vector<1x128xf32> -> vector<1x128xf32>
    %908 = arith.subf %901, %906 : vector<1x128xf32>
    %909 = vector.broadcast %0 : f32 to vector<1x128xf32>
    %910 = arith.mulf %909, %907 : vector<1x128xf32>
    %911 = arith.mulf %901, %907 : vector<1x128xf32>
    %cst_182 = arith.constant 2.000000e+00 : f32
    %912 = vector.broadcast %cst_182 : f32 to vector<1x128xf32>
    %913 = arith.subf %912, %911 : vector<1x128xf32>
    %914 = arith.mulf %910, %913 : vector<1x128xf32>
    %915 = arith.addf %908, %914 : vector<1x128xf32>
    %c80_183 = arith.constant 80 : index
    %c0_184 = arith.constant 0 : index
    %916 = vector.load %arg8[%c80_183, %c0_184] : memref<128x128xf32, #tpu.memory_space<vmem>>, vector<1x128xf32>
    tpu.vector_store %arg8[%c80_183, %c0_184], %915 {strides = array<i32>} : memref<128x128xf32, #tpu.memory_space<vmem>>, vector<1x128xf32>,
    %917 = vector.extract_strided_slice %905 {offsets = [1, 0], sizes = [1, 128], strides = [1, 1]} : vector<8x128xf32> to vector<1x128xf32>
    %918 = tpu.reciprocal %915 {approx = true} : vector<1x128xf32> -> vector<1x128xf32>
    %919 = arith.subf %915, %917 : vector<1x128xf32>
    %920 = vector.broadcast %0 : f32 to vector<1x128xf32>
    %921 = arith.mulf %920, %918 : vector<1x128xf32>
    %922 = arith.mulf %915, %918 : vector<1x128xf32>
    %cst_185 = arith.constant 2.000000e+00 : f32
    %923 = vector.broadcast %cst_185 : f32 to vector<1x128xf32>
    %924 = arith.subf %923, %922 : vector<1x128xf32>
    %925 = arith.mulf %921, %924 : vector<1x128xf32>
    %926 = arith.addf %919, %925 : vector<1x128xf32>
    %c81 = arith.constant 81 : index
    %c0_186 = arith.constant 0 : index
    %927 = vector.load %arg8[%c81, %c0_186] : memref<128x128xf32, #tpu.memory_space<vmem>>, vector<1x128xf32>
    tpu.vector_store %arg8[%c81, %c0_186], %926 {strides = array<i32>} : memref<128x128xf32, #tpu.memory_space<vmem>>, vector<1x128xf32>,
    %928 = vector.extract_strided_slice %905 {offsets = [2, 0], sizes = [1, 128], strides = [1, 1]} : vector<8x128xf32> to vector<1x128xf32>
    %929 = tpu.reciprocal %926 {approx = true} : vector<1x128xf32> -> vector<1x128xf32>
    %930 = arith.subf %926, %928 : vector<1x128xf32>
    %931 = vector.broadcast %0 : f32 to vector<1x128xf32>
    %932 = arith.mulf %931, %929 : vector<1x128xf32>
    %933 = arith.mulf %926, %929 : vector<1x128xf32>
    %cst_187 = arith.constant 2.000000e+00 : f32
    %934 = vector.broadcast %cst_187 : f32 to vector<1x128xf32>
    %935 = arith.subf %934, %933 : vector<1x128xf32>
    %936 = arith.mulf %932, %935 : vector<1x128xf32>
    %937 = arith.addf %930, %936 : vector<1x128xf32>
    %c82 = arith.constant 82 : index
    %c0_188 = arith.constant 0 : index
    %938 = vector.load %arg8[%c82, %c0_188] : memref<128x128xf32, #tpu.memory_space<vmem>>, vector<1x128xf32>
    tpu.vector_store %arg8[%c82, %c0_188], %937 {strides = array<i32>} : memref<128x128xf32, #tpu.memory_space<vmem>>, vector<1x128xf32>,
    %939 = vector.extract_strided_slice %905 {offsets = [3, 0], sizes = [1, 128], strides = [1, 1]} : vector<8x128xf32> to vector<1x128xf32>
    %940 = tpu.reciprocal %937 {approx = true} : vector<1x128xf32> -> vector<1x128xf32>
    %941 = arith.subf %937, %939 : vector<1x128xf32>
    %942 = vector.broadcast %0 : f32 to vector<1x128xf32>
    %943 = arith.mulf %942, %940 : vector<1x128xf32>
    %944 = arith.mulf %937, %940 : vector<1x128xf32>
    %cst_189 = arith.constant 2.000000e+00 : f32
    %945 = vector.broadcast %cst_189 : f32 to vector<1x128xf32>
    %946 = arith.subf %945, %944 : vector<1x128xf32>
    %947 = arith.mulf %943, %946 : vector<1x128xf32>
    %948 = arith.addf %941, %947 : vector<1x128xf32>
    %c83 = arith.constant 83 : index
    %c0_190 = arith.constant 0 : index
    %949 = vector.load %arg8[%c83, %c0_190] : memref<128x128xf32, #tpu.memory_space<vmem>>, vector<1x128xf32>
    tpu.vector_store %arg8[%c83, %c0_190], %948 {strides = array<i32>} : memref<128x128xf32, #tpu.memory_space<vmem>>, vector<1x128xf32>,
    %950 = vector.extract_strided_slice %905 {offsets = [4, 0], sizes = [1, 128], strides = [1, 1]} : vector<8x128xf32> to vector<1x128xf32>
    %951 = tpu.reciprocal %948 {approx = true} : vector<1x128xf32> -> vector<1x128xf32>
    %952 = arith.subf %948, %950 : vector<1x128xf32>
    %953 = vector.broadcast %0 : f32 to vector<1x128xf32>
    %954 = arith.mulf %953, %951 : vector<1x128xf32>
    %955 = arith.mulf %948, %951 : vector<1x128xf32>
    %cst_191 = arith.constant 2.000000e+00 : f32
    %956 = vector.broadcast %cst_191 : f32 to vector<1x128xf32>
    %957 = arith.subf %956, %955 : vector<1x128xf32>
    %958 = arith.mulf %954, %957 : vector<1x128xf32>
    %959 = arith.addf %952, %958 : vector<1x128xf32>
    %c84 = arith.constant 84 : index
    %c0_192 = arith.constant 0 : index
    %960 = vector.load %arg8[%c84, %c0_192] : memref<128x128xf32, #tpu.memory_space<vmem>>, vector<1x128xf32>
    tpu.vector_store %arg8[%c84, %c0_192], %959 {strides = array<i32>} : memref<128x128xf32, #tpu.memory_space<vmem>>, vector<1x128xf32>,
    %961 = vector.extract_strided_slice %905 {offsets = [5, 0], sizes = [1, 128], strides = [1, 1]} : vector<8x128xf32> to vector<1x128xf32>
    %962 = tpu.reciprocal %959 {approx = true} : vector<1x128xf32> -> vector<1x128xf32>
    %963 = arith.subf %959, %961 : vector<1x128xf32>
    %964 = vector.broadcast %0 : f32 to vector<1x128xf32>
    %965 = arith.mulf %964, %962 : vector<1x128xf32>
    %966 = arith.mulf %959, %962 : vector<1x128xf32>
    %cst_193 = arith.constant 2.000000e+00 : f32
    %967 = vector.broadcast %cst_193 : f32 to vector<1x128xf32>
    %968 = arith.subf %967, %966 : vector<1x128xf32>
    %969 = arith.mulf %965, %968 : vector<1x128xf32>
    %970 = arith.addf %963, %969 : vector<1x128xf32>
    %c85 = arith.constant 85 : index
    %c0_194 = arith.constant 0 : index
    %971 = vector.load %arg8[%c85, %c0_194] : memref<128x128xf32, #tpu.memory_space<vmem>>, vector<1x128xf32>
    tpu.vector_store %arg8[%c85, %c0_194], %970 {strides = array<i32>} : memref<128x128xf32, #tpu.memory_space<vmem>>, vector<1x128xf32>,
    %972 = vector.extract_strided_slice %905 {offsets = [6, 0], sizes = [1, 128], strides = [1, 1]} : vector<8x128xf32> to vector<1x128xf32>
    %973 = tpu.reciprocal %970 {approx = true} : vector<1x128xf32> -> vector<1x128xf32>
    %974 = arith.subf %970, %972 : vector<1x128xf32>
    %975 = vector.broadcast %0 : f32 to vector<1x128xf32>
    %976 = arith.mulf %975, %973 : vector<1x128xf32>
    %977 = arith.mulf %970, %973 : vector<1x128xf32>
    %cst_195 = arith.constant 2.000000e+00 : f32
    %978 = vector.broadcast %cst_195 : f32 to vector<1x128xf32>
    %979 = arith.subf %978, %977 : vector<1x128xf32>
    %980 = arith.mulf %976, %979 : vector<1x128xf32>
    %981 = arith.addf %974, %980 : vector<1x128xf32>
    %c86 = arith.constant 86 : index
    %c0_196 = arith.constant 0 : index
    %982 = vector.load %arg8[%c86, %c0_196] : memref<128x128xf32, #tpu.memory_space<vmem>>, vector<1x128xf32>
    tpu.vector_store %arg8[%c86, %c0_196], %981 {strides = array<i32>} : memref<128x128xf32, #tpu.memory_space<vmem>>, vector<1x128xf32>,
    %983 = vector.extract_strided_slice %905 {offsets = [7, 0], sizes = [1, 128], strides = [1, 1]} : vector<8x128xf32> to vector<1x128xf32>
    %984 = tpu.reciprocal %981 {approx = true} : vector<1x128xf32> -> vector<1x128xf32>
    %985 = arith.subf %981, %983 : vector<1x128xf32>
    %986 = vector.broadcast %0 : f32 to vector<1x128xf32>
    %987 = arith.mulf %986, %984 : vector<1x128xf32>
    %988 = arith.mulf %981, %984 : vector<1x128xf32>
    %cst_197 = arith.constant 2.000000e+00 : f32
    %989 = vector.broadcast %cst_197 : f32 to vector<1x128xf32>
    %990 = arith.subf %989, %988 : vector<1x128xf32>
    %991 = arith.mulf %987, %990 : vector<1x128xf32>
    %992 = arith.addf %985, %991 : vector<1x128xf32>
    %c87 = arith.constant 87 : index
    %c0_198 = arith.constant 0 : index
    %993 = vector.load %arg8[%c87, %c0_198] : memref<128x128xf32, #tpu.memory_space<vmem>>, vector<1x128xf32>
    tpu.vector_store %arg8[%c87, %c0_198], %992 {strides = array<i32>} : memref<128x128xf32, #tpu.memory_space<vmem>>, vector<1x128xf32>,
    %c88 = arith.constant 88 : index
    %c0_199 = arith.constant 0 : index
    %994 = vector.load %arg2[%c88, %c0_199] : memref<128x128xf32, #tpu.memory_space<vmem>>, vector<8x128xf32>
    %995 = vector.broadcast %1 : f32 to vector<8x128xf32>
    %996 = arith.mulf %995, %994 : vector<8x128xf32>
    %997 = vector.extract_strided_slice %996 {offsets = [0, 0], sizes = [1, 128], strides = [1, 1]} : vector<8x128xf32> to vector<1x128xf32>
    %998 = tpu.reciprocal %992 {approx = true} : vector<1x128xf32> -> vector<1x128xf32>
    %999 = arith.subf %992, %997 : vector<1x128xf32>
    %1000 = vector.broadcast %0 : f32 to vector<1x128xf32>
    %1001 = arith.mulf %1000, %998 : vector<1x128xf32>
    %1002 = arith.mulf %992, %998 : vector<1x128xf32>
    %cst_200 = arith.constant 2.000000e+00 : f32
    %1003 = vector.broadcast %cst_200 : f32 to vector<1x128xf32>
    %1004 = arith.subf %1003, %1002 : vector<1x128xf32>
    %1005 = arith.mulf %1001, %1004 : vector<1x128xf32>
    %1006 = arith.addf %999, %1005 : vector<1x128xf32>
    %c88_201 = arith.constant 88 : index
    %c0_202 = arith.constant 0 : index
    %1007 = vector.load %arg8[%c88_201, %c0_202] : memref<128x128xf32, #tpu.memory_space<vmem>>, vector<1x128xf32>
    tpu.vector_store %arg8[%c88_201, %c0_202], %1006 {strides = array<i32>} : memref<128x128xf32, #tpu.memory_space<vmem>>, vector<1x128xf32>,
    %1008 = vector.extract_strided_slice %996 {offsets = [1, 0], sizes = [1, 128], strides = [1, 1]} : vector<8x128xf32> to vector<1x128xf32>
    %1009 = tpu.reciprocal %1006 {approx = true} : vector<1x128xf32> -> vector<1x128xf32>
    %1010 = arith.subf %1006, %1008 : vector<1x128xf32>
    %1011 = vector.broadcast %0 : f32 to vector<1x128xf32>
    %1012 = arith.mulf %1011, %1009 : vector<1x128xf32>
    %1013 = arith.mulf %1006, %1009 : vector<1x128xf32>
    %cst_203 = arith.constant 2.000000e+00 : f32
    %1014 = vector.broadcast %cst_203 : f32 to vector<1x128xf32>
    %1015 = arith.subf %1014, %1013 : vector<1x128xf32>
    %1016 = arith.mulf %1012, %1015 : vector<1x128xf32>
    %1017 = arith.addf %1010, %1016 : vector<1x128xf32>
    %c89 = arith.constant 89 : index
    %c0_204 = arith.constant 0 : index
    %1018 = vector.load %arg8[%c89, %c0_204] : memref<128x128xf32, #tpu.memory_space<vmem>>, vector<1x128xf32>
    tpu.vector_store %arg8[%c89, %c0_204], %1017 {strides = array<i32>} : memref<128x128xf32, #tpu.memory_space<vmem>>, vector<1x128xf32>,
    %1019 = vector.extract_strided_slice %996 {offsets = [2, 0], sizes = [1, 128], strides = [1, 1]} : vector<8x128xf32> to vector<1x128xf32>
    %1020 = tpu.reciprocal %1017 {approx = true} : vector<1x128xf32> -> vector<1x128xf32>
    %1021 = arith.subf %1017, %1019 : vector<1x128xf32>
    %1022 = vector.broadcast %0 : f32 to vector<1x128xf32>
    %1023 = arith.mulf %1022, %1020 : vector<1x128xf32>
    %1024 = arith.mulf %1017, %1020 : vector<1x128xf32>
    %cst_205 = arith.constant 2.000000e+00 : f32
    %1025 = vector.broadcast %cst_205 : f32 to vector<1x128xf32>
    %1026 = arith.subf %1025, %1024 : vector<1x128xf32>
    %1027 = arith.mulf %1023, %1026 : vector<1x128xf32>
    %1028 = arith.addf %1021, %1027 : vector<1x128xf32>
    %c90 = arith.constant 90 : index
    %c0_206 = arith.constant 0 : index
    %1029 = vector.load %arg8[%c90, %c0_206] : memref<128x128xf32, #tpu.memory_space<vmem>>, vector<1x128xf32>
    tpu.vector_store %arg8[%c90, %c0_206], %1028 {strides = array<i32>} : memref<128x128xf32, #tpu.memory_space<vmem>>, vector<1x128xf32>,
    %1030 = vector.extract_strided_slice %996 {offsets = [3, 0], sizes = [1, 128], strides = [1, 1]} : vector<8x128xf32> to vector<1x128xf32>
    %1031 = tpu.reciprocal %1028 {approx = true} : vector<1x128xf32> -> vector<1x128xf32>
    %1032 = arith.subf %1028, %1030 : vector<1x128xf32>
    %1033 = vector.broadcast %0 : f32 to vector<1x128xf32>
    %1034 = arith.mulf %1033, %1031 : vector<1x128xf32>
    %1035 = arith.mulf %1028, %1031 : vector<1x128xf32>
    %cst_207 = arith.constant 2.000000e+00 : f32
    %1036 = vector.broadcast %cst_207 : f32 to vector<1x128xf32>
    %1037 = arith.subf %1036, %1035 : vector<1x128xf32>
    %1038 = arith.mulf %1034, %1037 : vector<1x128xf32>
    %1039 = arith.addf %1032, %1038 : vector<1x128xf32>
    %c91 = arith.constant 91 : index
    %c0_208 = arith.constant 0 : index
    %1040 = vector.load %arg8[%c91, %c0_208] : memref<128x128xf32, #tpu.memory_space<vmem>>, vector<1x128xf32>
    tpu.vector_store %arg8[%c91, %c0_208], %1039 {strides = array<i32>} : memref<128x128xf32, #tpu.memory_space<vmem>>, vector<1x128xf32>,
    %1041 = vector.extract_strided_slice %996 {offsets = [4, 0], sizes = [1, 128], strides = [1, 1]} : vector<8x128xf32> to vector<1x128xf32>
    %1042 = tpu.reciprocal %1039 {approx = true} : vector<1x128xf32> -> vector<1x128xf32>
    %1043 = arith.subf %1039, %1041 : vector<1x128xf32>
    %1044 = vector.broadcast %0 : f32 to vector<1x128xf32>
    %1045 = arith.mulf %1044, %1042 : vector<1x128xf32>
    %1046 = arith.mulf %1039, %1042 : vector<1x128xf32>
    %cst_209 = arith.constant 2.000000e+00 : f32
    %1047 = vector.broadcast %cst_209 : f32 to vector<1x128xf32>
    %1048 = arith.subf %1047, %1046 : vector<1x128xf32>
    %1049 = arith.mulf %1045, %1048 : vector<1x128xf32>
    %1050 = arith.addf %1043, %1049 : vector<1x128xf32>
    %c92 = arith.constant 92 : index
    %c0_210 = arith.constant 0 : index
    %1051 = vector.load %arg8[%c92, %c0_210] : memref<128x128xf32, #tpu.memory_space<vmem>>, vector<1x128xf32>
    tpu.vector_store %arg8[%c92, %c0_210], %1050 {strides = array<i32>} : memref<128x128xf32, #tpu.memory_space<vmem>>, vector<1x128xf32>,
    %1052 = vector.extract_strided_slice %996 {offsets = [5, 0], sizes = [1, 128], strides = [1, 1]} : vector<8x128xf32> to vector<1x128xf32>
    %1053 = tpu.reciprocal %1050 {approx = true} : vector<1x128xf32> -> vector<1x128xf32>
    %1054 = arith.subf %1050, %1052 : vector<1x128xf32>
    %1055 = vector.broadcast %0 : f32 to vector<1x128xf32>
    %1056 = arith.mulf %1055, %1053 : vector<1x128xf32>
    %1057 = arith.mulf %1050, %1053 : vector<1x128xf32>
    %cst_211 = arith.constant 2.000000e+00 : f32
    %1058 = vector.broadcast %cst_211 : f32 to vector<1x128xf32>
    %1059 = arith.subf %1058, %1057 : vector<1x128xf32>
    %1060 = arith.mulf %1056, %1059 : vector<1x128xf32>
    %1061 = arith.addf %1054, %1060 : vector<1x128xf32>
    %c93 = arith.constant 93 : index
    %c0_212 = arith.constant 0 : index
    %1062 = vector.load %arg8[%c93, %c0_212] : memref<128x128xf32, #tpu.memory_space<vmem>>, vector<1x128xf32>
    tpu.vector_store %arg8[%c93, %c0_212], %1061 {strides = array<i32>} : memref<128x128xf32, #tpu.memory_space<vmem>>, vector<1x128xf32>,
    %1063 = vector.extract_strided_slice %996 {offsets = [6, 0], sizes = [1, 128], strides = [1, 1]} : vector<8x128xf32> to vector<1x128xf32>
    %1064 = tpu.reciprocal %1061 {approx = true} : vector<1x128xf32> -> vector<1x128xf32>
    %1065 = arith.subf %1061, %1063 : vector<1x128xf32>
    %1066 = vector.broadcast %0 : f32 to vector<1x128xf32>
    %1067 = arith.mulf %1066, %1064 : vector<1x128xf32>
    %1068 = arith.mulf %1061, %1064 : vector<1x128xf32>
    %cst_213 = arith.constant 2.000000e+00 : f32
    %1069 = vector.broadcast %cst_213 : f32 to vector<1x128xf32>
    %1070 = arith.subf %1069, %1068 : vector<1x128xf32>
    %1071 = arith.mulf %1067, %1070 : vector<1x128xf32>
    %1072 = arith.addf %1065, %1071 : vector<1x128xf32>
    %c94 = arith.constant 94 : index
    %c0_214 = arith.constant 0 : index
    %1073 = vector.load %arg8[%c94, %c0_214] : memref<128x128xf32, #tpu.memory_space<vmem>>, vector<1x128xf32>
    tpu.vector_store %arg8[%c94, %c0_214], %1072 {strides = array<i32>} : memref<128x128xf32, #tpu.memory_space<vmem>>, vector<1x128xf32>,
    %1074 = vector.extract_strided_slice %996 {offsets = [7, 0], sizes = [1, 128], strides = [1, 1]} : vector<8x128xf32> to vector<1x128xf32>
    %1075 = tpu.reciprocal %1072 {approx = true} : vector<1x128xf32> -> vector<1x128xf32>
    %1076 = arith.subf %1072, %1074 : vector<1x128xf32>
    %1077 = vector.broadcast %0 : f32 to vector<1x128xf32>
    %1078 = arith.mulf %1077, %1075 : vector<1x128xf32>
    %1079 = arith.mulf %1072, %1075 : vector<1x128xf32>
    %cst_215 = arith.constant 2.000000e+00 : f32
    %1080 = vector.broadcast %cst_215 : f32 to vector<1x128xf32>
    %1081 = arith.subf %1080, %1079 : vector<1x128xf32>
    %1082 = arith.mulf %1078, %1081 : vector<1x128xf32>
    %1083 = arith.addf %1076, %1082 : vector<1x128xf32>
    %c95 = arith.constant 95 : index
    %c0_216 = arith.constant 0 : index
    %1084 = vector.load %arg8[%c95, %c0_216] : memref<128x128xf32, #tpu.memory_space<vmem>>, vector<1x128xf32>
    tpu.vector_store %arg8[%c95, %c0_216], %1083 {strides = array<i32>} : memref<128x128xf32, #tpu.memory_space<vmem>>, vector<1x128xf32>,
    %c96 = arith.constant 96 : index
    %c0_217 = arith.constant 0 : index
    %1085 = vector.load %arg2[%c96, %c0_217] : memref<128x128xf32, #tpu.memory_space<vmem>>, vector<8x128xf32>
    %1086 = vector.broadcast %1 : f32 to vector<8x128xf32>
    %1087 = arith.mulf %1086, %1085 : vector<8x128xf32>
    %1088 = vector.extract_strided_slice %1087 {offsets = [0, 0], sizes = [1, 128], strides = [1, 1]} : vector<8x128xf32> to vector<1x128xf32>
    %1089 = tpu.reciprocal %1083 {approx = true} : vector<1x128xf32> -> vector<1x128xf32>
    %1090 = arith.subf %1083, %1088 : vector<1x128xf32>
    %1091 = vector.broadcast %0 : f32 to vector<1x128xf32>
    %1092 = arith.mulf %1091, %1089 : vector<1x128xf32>
    %1093 = arith.mulf %1083, %1089 : vector<1x128xf32>
    %cst_218 = arith.constant 2.000000e+00 : f32
    %1094 = vector.broadcast %cst_218 : f32 to vector<1x128xf32>
    %1095 = arith.subf %1094, %1093 : vector<1x128xf32>
    %1096 = arith.mulf %1092, %1095 : vector<1x128xf32>
    %1097 = arith.addf %1090, %1096 : vector<1x128xf32>
    %c96_219 = arith.constant 96 : index
    %c0_220 = arith.constant 0 : index
    %1098 = vector.load %arg8[%c96_219, %c0_220] : memref<128x128xf32, #tpu.memory_space<vmem>>, vector<1x128xf32>
    tpu.vector_store %arg8[%c96_219, %c0_220], %1097 {strides = array<i32>} : memref<128x128xf32, #tpu.memory_space<vmem>>, vector<1x128xf32>,
    %1099 = vector.extract_strided_slice %1087 {offsets = [1, 0], sizes = [1, 128], strides = [1, 1]} : vector<8x128xf32> to vector<1x128xf32>
    %1100 = tpu.reciprocal %1097 {approx = true} : vector<1x128xf32> -> vector<1x128xf32>
    %1101 = arith.subf %1097, %1099 : vector<1x128xf32>
    %1102 = vector.broadcast %0 : f32 to vector<1x128xf32>
    %1103 = arith.mulf %1102, %1100 : vector<1x128xf32>
    %1104 = arith.mulf %1097, %1100 : vector<1x128xf32>
    %cst_221 = arith.constant 2.000000e+00 : f32
    %1105 = vector.broadcast %cst_221 : f32 to vector<1x128xf32>
    %1106 = arith.subf %1105, %1104 : vector<1x128xf32>
    %1107 = arith.mulf %1103, %1106 : vector<1x128xf32>
    %1108 = arith.addf %1101, %1107 : vector<1x128xf32>
    %c97 = arith.constant 97 : index
    %c0_222 = arith.constant 0 : index
    %1109 = vector.load %arg8[%c97, %c0_222] : memref<128x128xf32, #tpu.memory_space<vmem>>, vector<1x128xf32>
    tpu.vector_store %arg8[%c97, %c0_222], %1108 {strides = array<i32>} : memref<128x128xf32, #tpu.memory_space<vmem>>, vector<1x128xf32>,
    %1110 = vector.extract_strided_slice %1087 {offsets = [2, 0], sizes = [1, 128], strides = [1, 1]} : vector<8x128xf32> to vector<1x128xf32>
    %1111 = tpu.reciprocal %1108 {approx = true} : vector<1x128xf32> -> vector<1x128xf32>
    %1112 = arith.subf %1108, %1110 : vector<1x128xf32>
    %1113 = vector.broadcast %0 : f32 to vector<1x128xf32>
    %1114 = arith.mulf %1113, %1111 : vector<1x128xf32>
    %1115 = arith.mulf %1108, %1111 : vector<1x128xf32>
    %cst_223 = arith.constant 2.000000e+00 : f32
    %1116 = vector.broadcast %cst_223 : f32 to vector<1x128xf32>
    %1117 = arith.subf %1116, %1115 : vector<1x128xf32>
    %1118 = arith.mulf %1114, %1117 : vector<1x128xf32>
    %1119 = arith.addf %1112, %1118 : vector<1x128xf32>
    %c98 = arith.constant 98 : index
    %c0_224 = arith.constant 0 : index
    %1120 = vector.load %arg8[%c98, %c0_224] : memref<128x128xf32, #tpu.memory_space<vmem>>, vector<1x128xf32>
    tpu.vector_store %arg8[%c98, %c0_224], %1119 {strides = array<i32>} : memref<128x128xf32, #tpu.memory_space<vmem>>, vector<1x128xf32>,
    %1121 = vector.extract_strided_slice %1087 {offsets = [3, 0], sizes = [1, 128], strides = [1, 1]} : vector<8x128xf32> to vector<1x128xf32>
    %1122 = tpu.reciprocal %1119 {approx = true} : vector<1x128xf32> -> vector<1x128xf32>
    %1123 = arith.subf %1119, %1121 : vector<1x128xf32>
    %1124 = vector.broadcast %0 : f32 to vector<1x128xf32>
    %1125 = arith.mulf %1124, %1122 : vector<1x128xf32>
    %1126 = arith.mulf %1119, %1122 : vector<1x128xf32>
    %cst_225 = arith.constant 2.000000e+00 : f32
    %1127 = vector.broadcast %cst_225 : f32 to vector<1x128xf32>
    %1128 = arith.subf %1127, %1126 : vector<1x128xf32>
    %1129 = arith.mulf %1125, %1128 : vector<1x128xf32>
    %1130 = arith.addf %1123, %1129 : vector<1x128xf32>
    %c99 = arith.constant 99 : index
    %c0_226 = arith.constant 0 : index
    %1131 = vector.load %arg8[%c99, %c0_226] : memref<128x128xf32, #tpu.memory_space<vmem>>, vector<1x128xf32>
    tpu.vector_store %arg8[%c99, %c0_226], %1130 {strides = array<i32>} : memref<128x128xf32, #tpu.memory_space<vmem>>, vector<1x128xf32>,
    %1132 = vector.extract_strided_slice %1087 {offsets = [4, 0], sizes = [1, 128], strides = [1, 1]} : vector<8x128xf32> to vector<1x128xf32>
    %1133 = tpu.reciprocal %1130 {approx = true} : vector<1x128xf32> -> vector<1x128xf32>
    %1134 = arith.subf %1130, %1132 : vector<1x128xf32>
    %1135 = vector.broadcast %0 : f32 to vector<1x128xf32>
    %1136 = arith.mulf %1135, %1133 : vector<1x128xf32>
    %1137 = arith.mulf %1130, %1133 : vector<1x128xf32>
    %cst_227 = arith.constant 2.000000e+00 : f32
    %1138 = vector.broadcast %cst_227 : f32 to vector<1x128xf32>
    %1139 = arith.subf %1138, %1137 : vector<1x128xf32>
    %1140 = arith.mulf %1136, %1139 : vector<1x128xf32>
    %1141 = arith.addf %1134, %1140 : vector<1x128xf32>
    %c100 = arith.constant 100 : index
    %c0_228 = arith.constant 0 : index
    %1142 = vector.load %arg8[%c100, %c0_228] : memref<128x128xf32, #tpu.memory_space<vmem>>, vector<1x128xf32>
    tpu.vector_store %arg8[%c100, %c0_228], %1141 {strides = array<i32>} : memref<128x128xf32, #tpu.memory_space<vmem>>, vector<1x128xf32>,
    %1143 = vector.extract_strided_slice %1087 {offsets = [5, 0], sizes = [1, 128], strides = [1, 1]} : vector<8x128xf32> to vector<1x128xf32>
    %1144 = tpu.reciprocal %1141 {approx = true} : vector<1x128xf32> -> vector<1x128xf32>
    %1145 = arith.subf %1141, %1143 : vector<1x128xf32>
    %1146 = vector.broadcast %0 : f32 to vector<1x128xf32>
    %1147 = arith.mulf %1146, %1144 : vector<1x128xf32>
    %1148 = arith.mulf %1141, %1144 : vector<1x128xf32>
    %cst_229 = arith.constant 2.000000e+00 : f32
    %1149 = vector.broadcast %cst_229 : f32 to vector<1x128xf32>
    %1150 = arith.subf %1149, %1148 : vector<1x128xf32>
    %1151 = arith.mulf %1147, %1150 : vector<1x128xf32>
    %1152 = arith.addf %1145, %1151 : vector<1x128xf32>
    %c101 = arith.constant 101 : index
    %c0_230 = arith.constant 0 : index
    %1153 = vector.load %arg8[%c101, %c0_230] : memref<128x128xf32, #tpu.memory_space<vmem>>, vector<1x128xf32>
    tpu.vector_store %arg8[%c101, %c0_230], %1152 {strides = array<i32>} : memref<128x128xf32, #tpu.memory_space<vmem>>, vector<1x128xf32>,
    %1154 = vector.extract_strided_slice %1087 {offsets = [6, 0], sizes = [1, 128], strides = [1, 1]} : vector<8x128xf32> to vector<1x128xf32>
    %1155 = tpu.reciprocal %1152 {approx = true} : vector<1x128xf32> -> vector<1x128xf32>
    %1156 = arith.subf %1152, %1154 : vector<1x128xf32>
    %1157 = vector.broadcast %0 : f32 to vector<1x128xf32>
    %1158 = arith.mulf %1157, %1155 : vector<1x128xf32>
    %1159 = arith.mulf %1152, %1155 : vector<1x128xf32>
    %cst_231 = arith.constant 2.000000e+00 : f32
    %1160 = vector.broadcast %cst_231 : f32 to vector<1x128xf32>
    %1161 = arith.subf %1160, %1159 : vector<1x128xf32>
    %1162 = arith.mulf %1158, %1161 : vector<1x128xf32>
    %1163 = arith.addf %1156, %1162 : vector<1x128xf32>
    %c102 = arith.constant 102 : index
    %c0_232 = arith.constant 0 : index
    %1164 = vector.load %arg8[%c102, %c0_232] : memref<128x128xf32, #tpu.memory_space<vmem>>, vector<1x128xf32>
    tpu.vector_store %arg8[%c102, %c0_232], %1163 {strides = array<i32>} : memref<128x128xf32, #tpu.memory_space<vmem>>, vector<1x128xf32>,
    %1165 = vector.extract_strided_slice %1087 {offsets = [7, 0], sizes = [1, 128], strides = [1, 1]} : vector<8x128xf32> to vector<1x128xf32>
    %1166 = tpu.reciprocal %1163 {approx = true} : vector<1x128xf32> -> vector<1x128xf32>
    %1167 = arith.subf %1163, %1165 : vector<1x128xf32>
    %1168 = vector.broadcast %0 : f32 to vector<1x128xf32>
    %1169 = arith.mulf %1168, %1166 : vector<1x128xf32>
    %1170 = arith.mulf %1163, %1166 : vector<1x128xf32>
    %cst_233 = arith.constant 2.000000e+00 : f32
    %1171 = vector.broadcast %cst_233 : f32 to vector<1x128xf32>
    %1172 = arith.subf %1171, %1170 : vector<1x128xf32>
    %1173 = arith.mulf %1169, %1172 : vector<1x128xf32>
    %1174 = arith.addf %1167, %1173 : vector<1x128xf32>
    %c103 = arith.constant 103 : index
    %c0_234 = arith.constant 0 : index
    %1175 = vector.load %arg8[%c103, %c0_234] : memref<128x128xf32, #tpu.memory_space<vmem>>, vector<1x128xf32>
    tpu.vector_store %arg8[%c103, %c0_234], %1174 {strides = array<i32>} : memref<128x128xf32, #tpu.memory_space<vmem>>, vector<1x128xf32>,
    %c104 = arith.constant 104 : index
    %c0_235 = arith.constant 0 : index
    %1176 = vector.load %arg2[%c104, %c0_235] : memref<128x128xf32, #tpu.memory_space<vmem>>, vector<8x128xf32>
    %1177 = vector.broadcast %1 : f32 to vector<8x128xf32>
    %1178 = arith.mulf %1177, %1176 : vector<8x128xf32>
    %1179 = vector.extract_strided_slice %1178 {offsets = [0, 0], sizes = [1, 128], strides = [1, 1]} : vector<8x128xf32> to vector<1x128xf32>
    %1180 = tpu.reciprocal %1174 {approx = true} : vector<1x128xf32> -> vector<1x128xf32>
    %1181 = arith.subf %1174, %1179 : vector<1x128xf32>
    %1182 = vector.broadcast %0 : f32 to vector<1x128xf32>
    %1183 = arith.mulf %1182, %1180 : vector<1x128xf32>
    %1184 = arith.mulf %1174, %1180 : vector<1x128xf32>
    %cst_236 = arith.constant 2.000000e+00 : f32
    %1185 = vector.broadcast %cst_236 : f32 to vector<1x128xf32>
    %1186 = arith.subf %1185, %1184 : vector<1x128xf32>
    %1187 = arith.mulf %1183, %1186 : vector<1x128xf32>
    %1188 = arith.addf %1181, %1187 : vector<1x128xf32>
    %c104_237 = arith.constant 104 : index
    %c0_238 = arith.constant 0 : index
    %1189 = vector.load %arg8[%c104_237, %c0_238] : memref<128x128xf32, #tpu.memory_space<vmem>>, vector<1x128xf32>
    tpu.vector_store %arg8[%c104_237, %c0_238], %1188 {strides = array<i32>} : memref<128x128xf32, #tpu.memory_space<vmem>>, vector<1x128xf32>,
    %1190 = vector.extract_strided_slice %1178 {offsets = [1, 0], sizes = [1, 128], strides = [1, 1]} : vector<8x128xf32> to vector<1x128xf32>
    %1191 = tpu.reciprocal %1188 {approx = true} : vector<1x128xf32> -> vector<1x128xf32>
    %1192 = arith.subf %1188, %1190 : vector<1x128xf32>
    %1193 = vector.broadcast %0 : f32 to vector<1x128xf32>
    %1194 = arith.mulf %1193, %1191 : vector<1x128xf32>
    %1195 = arith.mulf %1188, %1191 : vector<1x128xf32>
    %cst_239 = arith.constant 2.000000e+00 : f32
    %1196 = vector.broadcast %cst_239 : f32 to vector<1x128xf32>
    %1197 = arith.subf %1196, %1195 : vector<1x128xf32>
    %1198 = arith.mulf %1194, %1197 : vector<1x128xf32>
    %1199 = arith.addf %1192, %1198 : vector<1x128xf32>
    %c105 = arith.constant 105 : index
    %c0_240 = arith.constant 0 : index
    %1200 = vector.load %arg8[%c105, %c0_240] : memref<128x128xf32, #tpu.memory_space<vmem>>, vector<1x128xf32>
    tpu.vector_store %arg8[%c105, %c0_240], %1199 {strides = array<i32>} : memref<128x128xf32, #tpu.memory_space<vmem>>, vector<1x128xf32>,
    %1201 = vector.extract_strided_slice %1178 {offsets = [2, 0], sizes = [1, 128], strides = [1, 1]} : vector<8x128xf32> to vector<1x128xf32>
    %1202 = tpu.reciprocal %1199 {approx = true} : vector<1x128xf32> -> vector<1x128xf32>
    %1203 = arith.subf %1199, %1201 : vector<1x128xf32>
    %1204 = vector.broadcast %0 : f32 to vector<1x128xf32>
    %1205 = arith.mulf %1204, %1202 : vector<1x128xf32>
    %1206 = arith.mulf %1199, %1202 : vector<1x128xf32>
    %cst_241 = arith.constant 2.000000e+00 : f32
    %1207 = vector.broadcast %cst_241 : f32 to vector<1x128xf32>
    %1208 = arith.subf %1207, %1206 : vector<1x128xf32>
    %1209 = arith.mulf %1205, %1208 : vector<1x128xf32>
    %1210 = arith.addf %1203, %1209 : vector<1x128xf32>
    %c106 = arith.constant 106 : index
    %c0_242 = arith.constant 0 : index
    %1211 = vector.load %arg8[%c106, %c0_242] : memref<128x128xf32, #tpu.memory_space<vmem>>, vector<1x128xf32>
    tpu.vector_store %arg8[%c106, %c0_242], %1210 {strides = array<i32>} : memref<128x128xf32, #tpu.memory_space<vmem>>, vector<1x128xf32>,
    %1212 = vector.extract_strided_slice %1178 {offsets = [3, 0], sizes = [1, 128], strides = [1, 1]} : vector<8x128xf32> to vector<1x128xf32>
    %1213 = tpu.reciprocal %1210 {approx = true} : vector<1x128xf32> -> vector<1x128xf32>
    %1214 = arith.subf %1210, %1212 : vector<1x128xf32>
    %1215 = vector.broadcast %0 : f32 to vector<1x128xf32>
    %1216 = arith.mulf %1215, %1213 : vector<1x128xf32>
    %1217 = arith.mulf %1210, %1213 : vector<1x128xf32>
    %cst_243 = arith.constant 2.000000e+00 : f32
    %1218 = vector.broadcast %cst_243 : f32 to vector<1x128xf32>
    %1219 = arith.subf %1218, %1217 : vector<1x128xf32>
    %1220 = arith.mulf %1216, %1219 : vector<1x128xf32>
    %1221 = arith.addf %1214, %1220 : vector<1x128xf32>
    %c107 = arith.constant 107 : index
    %c0_244 = arith.constant 0 : index
    %1222 = vector.load %arg8[%c107, %c0_244] : memref<128x128xf32, #tpu.memory_space<vmem>>, vector<1x128xf32>
    tpu.vector_store %arg8[%c107, %c0_244], %1221 {strides = array<i32>} : memref<128x128xf32, #tpu.memory_space<vmem>>, vector<1x128xf32>,
    %1223 = vector.extract_strided_slice %1178 {offsets = [4, 0], sizes = [1, 128], strides = [1, 1]} : vector<8x128xf32> to vector<1x128xf32>
    %1224 = tpu.reciprocal %1221 {approx = true} : vector<1x128xf32> -> vector<1x128xf32>
    %1225 = arith.subf %1221, %1223 : vector<1x128xf32>
    %1226 = vector.broadcast %0 : f32 to vector<1x128xf32>
    %1227 = arith.mulf %1226, %1224 : vector<1x128xf32>
    %1228 = arith.mulf %1221, %1224 : vector<1x128xf32>
    %cst_245 = arith.constant 2.000000e+00 : f32
    %1229 = vector.broadcast %cst_245 : f32 to vector<1x128xf32>
    %1230 = arith.subf %1229, %1228 : vector<1x128xf32>
    %1231 = arith.mulf %1227, %1230 : vector<1x128xf32>
    %1232 = arith.addf %1225, %1231 : vector<1x128xf32>
    %c108 = arith.constant 108 : index
    %c0_246 = arith.constant 0 : index
    %1233 = vector.load %arg8[%c108, %c0_246] : memref<128x128xf32, #tpu.memory_space<vmem>>, vector<1x128xf32>
    tpu.vector_store %arg8[%c108, %c0_246], %1232 {strides = array<i32>} : memref<128x128xf32, #tpu.memory_space<vmem>>, vector<1x128xf32>,
    %1234 = vector.extract_strided_slice %1178 {offsets = [5, 0], sizes = [1, 128], strides = [1, 1]} : vector<8x128xf32> to vector<1x128xf32>
    %1235 = tpu.reciprocal %1232 {approx = true} : vector<1x128xf32> -> vector<1x128xf32>
    %1236 = arith.subf %1232, %1234 : vector<1x128xf32>
    %1237 = vector.broadcast %0 : f32 to vector<1x128xf32>
    %1238 = arith.mulf %1237, %1235 : vector<1x128xf32>
    %1239 = arith.mulf %1232, %1235 : vector<1x128xf32>
    %cst_247 = arith.constant 2.000000e+00 : f32
    %1240 = vector.broadcast %cst_247 : f32 to vector<1x128xf32>
    %1241 = arith.subf %1240, %1239 : vector<1x128xf32>
    %1242 = arith.mulf %1238, %1241 : vector<1x128xf32>
    %1243 = arith.addf %1236, %1242 : vector<1x128xf32>
    %c109 = arith.constant 109 : index
    %c0_248 = arith.constant 0 : index
    %1244 = vector.load %arg8[%c109, %c0_248] : memref<128x128xf32, #tpu.memory_space<vmem>>, vector<1x128xf32>
    tpu.vector_store %arg8[%c109, %c0_248], %1243 {strides = array<i32>} : memref<128x128xf32, #tpu.memory_space<vmem>>, vector<1x128xf32>,
    %1245 = vector.extract_strided_slice %1178 {offsets = [6, 0], sizes = [1, 128], strides = [1, 1]} : vector<8x128xf32> to vector<1x128xf32>
    %1246 = tpu.reciprocal %1243 {approx = true} : vector<1x128xf32> -> vector<1x128xf32>
    %1247 = arith.subf %1243, %1245 : vector<1x128xf32>
    %1248 = vector.broadcast %0 : f32 to vector<1x128xf32>
    %1249 = arith.mulf %1248, %1246 : vector<1x128xf32>
    %1250 = arith.mulf %1243, %1246 : vector<1x128xf32>
    %cst_249 = arith.constant 2.000000e+00 : f32
    %1251 = vector.broadcast %cst_249 : f32 to vector<1x128xf32>
    %1252 = arith.subf %1251, %1250 : vector<1x128xf32>
    %1253 = arith.mulf %1249, %1252 : vector<1x128xf32>
    %1254 = arith.addf %1247, %1253 : vector<1x128xf32>
    %c110 = arith.constant 110 : index
    %c0_250 = arith.constant 0 : index
    %1255 = vector.load %arg8[%c110, %c0_250] : memref<128x128xf32, #tpu.memory_space<vmem>>, vector<1x128xf32>
    tpu.vector_store %arg8[%c110, %c0_250], %1254 {strides = array<i32>} : memref<128x128xf32, #tpu.memory_space<vmem>>, vector<1x128xf32>,
    %1256 = vector.extract_strided_slice %1178 {offsets = [7, 0], sizes = [1, 128], strides = [1, 1]} : vector<8x128xf32> to vector<1x128xf32>
    %1257 = tpu.reciprocal %1254 {approx = true} : vector<1x128xf32> -> vector<1x128xf32>
    %1258 = arith.subf %1254, %1256 : vector<1x128xf32>
    %1259 = vector.broadcast %0 : f32 to vector<1x128xf32>
    %1260 = arith.mulf %1259, %1257 : vector<1x128xf32>
    %1261 = arith.mulf %1254, %1257 : vector<1x128xf32>
    %cst_251 = arith.constant 2.000000e+00 : f32
    %1262 = vector.broadcast %cst_251 : f32 to vector<1x128xf32>
    %1263 = arith.subf %1262, %1261 : vector<1x128xf32>
    %1264 = arith.mulf %1260, %1263 : vector<1x128xf32>
    %1265 = arith.addf %1258, %1264 : vector<1x128xf32>
    %c111 = arith.constant 111 : index
    %c0_252 = arith.constant 0 : index
    %1266 = vector.load %arg8[%c111, %c0_252] : memref<128x128xf32, #tpu.memory_space<vmem>>, vector<1x128xf32>
    tpu.vector_store %arg8[%c111, %c0_252], %1265 {strides = array<i32>} : memref<128x128xf32, #tpu.memory_space<vmem>>, vector<1x128xf32>,
    %c112 = arith.constant 112 : index
    %c0_253 = arith.constant 0 : index
    %1267 = vector.load %arg2[%c112, %c0_253] : memref<128x128xf32, #tpu.memory_space<vmem>>, vector<8x128xf32>
    %1268 = vector.broadcast %1 : f32 to vector<8x128xf32>
    %1269 = arith.mulf %1268, %1267 : vector<8x128xf32>
    %1270 = vector.extract_strided_slice %1269 {offsets = [0, 0], sizes = [1, 128], strides = [1, 1]} : vector<8x128xf32> to vector<1x128xf32>
    %1271 = tpu.reciprocal %1265 {approx = true} : vector<1x128xf32> -> vector<1x128xf32>
    %1272 = arith.subf %1265, %1270 : vector<1x128xf32>
    %1273 = vector.broadcast %0 : f32 to vector<1x128xf32>
    %1274 = arith.mulf %1273, %1271 : vector<1x128xf32>
    %1275 = arith.mulf %1265, %1271 : vector<1x128xf32>
    %cst_254 = arith.constant 2.000000e+00 : f32
    %1276 = vector.broadcast %cst_254 : f32 to vector<1x128xf32>
    %1277 = arith.subf %1276, %1275 : vector<1x128xf32>
    %1278 = arith.mulf %1274, %1277 : vector<1x128xf32>
    %1279 = arith.addf %1272, %1278 : vector<1x128xf32>
    %c112_255 = arith.constant 112 : index
    %c0_256 = arith.constant 0 : index
    %1280 = vector.load %arg8[%c112_255, %c0_256] : memref<128x128xf32, #tpu.memory_space<vmem>>, vector<1x128xf32>
    tpu.vector_store %arg8[%c112_255, %c0_256], %1279 {strides = array<i32>} : memref<128x128xf32, #tpu.memory_space<vmem>>, vector<1x128xf32>,
    %1281 = vector.extract_strided_slice %1269 {offsets = [1, 0], sizes = [1, 128], strides = [1, 1]} : vector<8x128xf32> to vector<1x128xf32>
    %1282 = tpu.reciprocal %1279 {approx = true} : vector<1x128xf32> -> vector<1x128xf32>
    %1283 = arith.subf %1279, %1281 : vector<1x128xf32>
    %1284 = vector.broadcast %0 : f32 to vector<1x128xf32>
    %1285 = arith.mulf %1284, %1282 : vector<1x128xf32>
    %1286 = arith.mulf %1279, %1282 : vector<1x128xf32>
    %cst_257 = arith.constant 2.000000e+00 : f32
    %1287 = vector.broadcast %cst_257 : f32 to vector<1x128xf32>
    %1288 = arith.subf %1287, %1286 : vector<1x128xf32>
    %1289 = arith.mulf %1285, %1288 : vector<1x128xf32>
    %1290 = arith.addf %1283, %1289 : vector<1x128xf32>
    %c113 = arith.constant 113 : index
    %c0_258 = arith.constant 0 : index
    %1291 = vector.load %arg8[%c113, %c0_258] : memref<128x128xf32, #tpu.memory_space<vmem>>, vector<1x128xf32>
    tpu.vector_store %arg8[%c113, %c0_258], %1290 {strides = array<i32>} : memref<128x128xf32, #tpu.memory_space<vmem>>, vector<1x128xf32>,
    %1292 = vector.extract_strided_slice %1269 {offsets = [2, 0], sizes = [1, 128], strides = [1, 1]} : vector<8x128xf32> to vector<1x128xf32>
    %1293 = tpu.reciprocal %1290 {approx = true} : vector<1x128xf32> -> vector<1x128xf32>
    %1294 = arith.subf %1290, %1292 : vector<1x128xf32>
    %1295 = vector.broadcast %0 : f32 to vector<1x128xf32>
    %1296 = arith.mulf %1295, %1293 : vector<1x128xf32>
    %1297 = arith.mulf %1290, %1293 : vector<1x128xf32>
    %cst_259 = arith.constant 2.000000e+00 : f32
    %1298 = vector.broadcast %cst_259 : f32 to vector<1x128xf32>
    %1299 = arith.subf %1298, %1297 : vector<1x128xf32>
    %1300 = arith.mulf %1296, %1299 : vector<1x128xf32>
    %1301 = arith.addf %1294, %1300 : vector<1x128xf32>
    %c114 = arith.constant 114 : index
    %c0_260 = arith.constant 0 : index
    %1302 = vector.load %arg8[%c114, %c0_260] : memref<128x128xf32, #tpu.memory_space<vmem>>, vector<1x128xf32>
    tpu.vector_store %arg8[%c114, %c0_260], %1301 {strides = array<i32>} : memref<128x128xf32, #tpu.memory_space<vmem>>, vector<1x128xf32>,
    %1303 = vector.extract_strided_slice %1269 {offsets = [3, 0], sizes = [1, 128], strides = [1, 1]} : vector<8x128xf32> to vector<1x128xf32>
    %1304 = tpu.reciprocal %1301 {approx = true} : vector<1x128xf32> -> vector<1x128xf32>
    %1305 = arith.subf %1301, %1303 : vector<1x128xf32>
    %1306 = vector.broadcast %0 : f32 to vector<1x128xf32>
    %1307 = arith.mulf %1306, %1304 : vector<1x128xf32>
    %1308 = arith.mulf %1301, %1304 : vector<1x128xf32>
    %cst_261 = arith.constant 2.000000e+00 : f32
    %1309 = vector.broadcast %cst_261 : f32 to vector<1x128xf32>
    %1310 = arith.subf %1309, %1308 : vector<1x128xf32>
    %1311 = arith.mulf %1307, %1310 : vector<1x128xf32>
    %1312 = arith.addf %1305, %1311 : vector<1x128xf32>
    %c115 = arith.constant 115 : index
    %c0_262 = arith.constant 0 : index
    %1313 = vector.load %arg8[%c115, %c0_262] : memref<128x128xf32, #tpu.memory_space<vmem>>, vector<1x128xf32>
    tpu.vector_store %arg8[%c115, %c0_262], %1312 {strides = array<i32>} : memref<128x128xf32, #tpu.memory_space<vmem>>, vector<1x128xf32>,
    %1314 = vector.extract_strided_slice %1269 {offsets = [4, 0], sizes = [1, 128], strides = [1, 1]} : vector<8x128xf32> to vector<1x128xf32>
    %1315 = tpu.reciprocal %1312 {approx = true} : vector<1x128xf32> -> vector<1x128xf32>
    %1316 = arith.subf %1312, %1314 : vector<1x128xf32>
    %1317 = vector.broadcast %0 : f32 to vector<1x128xf32>
    %1318 = arith.mulf %1317, %1315 : vector<1x128xf32>
    %1319 = arith.mulf %1312, %1315 : vector<1x128xf32>
    %cst_263 = arith.constant 2.000000e+00 : f32
    %1320 = vector.broadcast %cst_263 : f32 to vector<1x128xf32>
    %1321 = arith.subf %1320, %1319 : vector<1x128xf32>
    %1322 = arith.mulf %1318, %1321 : vector<1x128xf32>
    %1323 = arith.addf %1316, %1322 : vector<1x128xf32>
    %c116 = arith.constant 116 : index
    %c0_264 = arith.constant 0 : index
    %1324 = vector.load %arg8[%c116, %c0_264] : memref<128x128xf32, #tpu.memory_space<vmem>>, vector<1x128xf32>
    tpu.vector_store %arg8[%c116, %c0_264], %1323 {strides = array<i32>} : memref<128x128xf32, #tpu.memory_space<vmem>>, vector<1x128xf32>,
    %1325 = vector.extract_strided_slice %1269 {offsets = [5, 0], sizes = [1, 128], strides = [1, 1]} : vector<8x128xf32> to vector<1x128xf32>
    %1326 = tpu.reciprocal %1323 {approx = true} : vector<1x128xf32> -> vector<1x128xf32>
    %1327 = arith.subf %1323, %1325 : vector<1x128xf32>
    %1328 = vector.broadcast %0 : f32 to vector<1x128xf32>
    %1329 = arith.mulf %1328, %1326 : vector<1x128xf32>
    %1330 = arith.mulf %1323, %1326 : vector<1x128xf32>
    %cst_265 = arith.constant 2.000000e+00 : f32
    %1331 = vector.broadcast %cst_265 : f32 to vector<1x128xf32>
    %1332 = arith.subf %1331, %1330 : vector<1x128xf32>
    %1333 = arith.mulf %1329, %1332 : vector<1x128xf32>
    %1334 = arith.addf %1327, %1333 : vector<1x128xf32>
    %c117 = arith.constant 117 : index
    %c0_266 = arith.constant 0 : index
    %1335 = vector.load %arg8[%c117, %c0_266] : memref<128x128xf32, #tpu.memory_space<vmem>>, vector<1x128xf32>
    tpu.vector_store %arg8[%c117, %c0_266], %1334 {strides = array<i32>} : memref<128x128xf32, #tpu.memory_space<vmem>>, vector<1x128xf32>,
    %1336 = vector.extract_strided_slice %1269 {offsets = [6, 0], sizes = [1, 128], strides = [1, 1]} : vector<8x128xf32> to vector<1x128xf32>
    %1337 = tpu.reciprocal %1334 {approx = true} : vector<1x128xf32> -> vector<1x128xf32>
    %1338 = arith.subf %1334, %1336 : vector<1x128xf32>
    %1339 = vector.broadcast %0 : f32 to vector<1x128xf32>
    %1340 = arith.mulf %1339, %1337 : vector<1x128xf32>
    %1341 = arith.mulf %1334, %1337 : vector<1x128xf32>
    %cst_267 = arith.constant 2.000000e+00 : f32
    %1342 = vector.broadcast %cst_267 : f32 to vector<1x128xf32>
    %1343 = arith.subf %1342, %1341 : vector<1x128xf32>
    %1344 = arith.mulf %1340, %1343 : vector<1x128xf32>
    %1345 = arith.addf %1338, %1344 : vector<1x128xf32>
    %c118 = arith.constant 118 : index
    %c0_268 = arith.constant 0 : index
    %1346 = vector.load %arg8[%c118, %c0_268] : memref<128x128xf32, #tpu.memory_space<vmem>>, vector<1x128xf32>
    tpu.vector_store %arg8[%c118, %c0_268], %1345 {strides = array<i32>} : memref<128x128xf32, #tpu.memory_space<vmem>>, vector<1x128xf32>,
    %1347 = vector.extract_strided_slice %1269 {offsets = [7, 0], sizes = [1, 128], strides = [1, 1]} : vector<8x128xf32> to vector<1x128xf32>
    %1348 = tpu.reciprocal %1345 {approx = true} : vector<1x128xf32> -> vector<1x128xf32>
    %1349 = arith.subf %1345, %1347 : vector<1x128xf32>
    %1350 = vector.broadcast %0 : f32 to vector<1x128xf32>
    %1351 = arith.mulf %1350, %1348 : vector<1x128xf32>
    %1352 = arith.mulf %1345, %1348 : vector<1x128xf32>
    %cst_269 = arith.constant 2.000000e+00 : f32
    %1353 = vector.broadcast %cst_269 : f32 to vector<1x128xf32>
    %1354 = arith.subf %1353, %1352 : vector<1x128xf32>
    %1355 = arith.mulf %1351, %1354 : vector<1x128xf32>
    %1356 = arith.addf %1349, %1355 : vector<1x128xf32>
    %c119 = arith.constant 119 : index
    %c0_270 = arith.constant 0 : index
    %1357 = vector.load %arg8[%c119, %c0_270] : memref<128x128xf32, #tpu.memory_space<vmem>>, vector<1x128xf32>
    tpu.vector_store %arg8[%c119, %c0_270], %1356 {strides = array<i32>} : memref<128x128xf32, #tpu.memory_space<vmem>>, vector<1x128xf32>,
    %c120 = arith.constant 120 : index
    %c0_271 = arith.constant 0 : index
    %1358 = vector.load %arg2[%c120, %c0_271] : memref<128x128xf32, #tpu.memory_space<vmem>>, vector<8x128xf32>
    %1359 = vector.broadcast %1 : f32 to vector<8x128xf32>
    %1360 = arith.mulf %1359, %1358 : vector<8x128xf32>
    %1361 = vector.extract_strided_slice %1360 {offsets = [0, 0], sizes = [1, 128], strides = [1, 1]} : vector<8x128xf32> to vector<1x128xf32>
    %1362 = tpu.reciprocal %1356 {approx = true} : vector<1x128xf32> -> vector<1x128xf32>
    %1363 = arith.subf %1356, %1361 : vector<1x128xf32>
    %1364 = vector.broadcast %0 : f32 to vector<1x128xf32>
    %1365 = arith.mulf %1364, %1362 : vector<1x128xf32>
    %1366 = arith.mulf %1356, %1362 : vector<1x128xf32>
    %cst_272 = arith.constant 2.000000e+00 : f32
    %1367 = vector.broadcast %cst_272 : f32 to vector<1x128xf32>
    %1368 = arith.subf %1367, %1366 : vector<1x128xf32>
    %1369 = arith.mulf %1365, %1368 : vector<1x128xf32>
    %1370 = arith.addf %1363, %1369 : vector<1x128xf32>
    %c120_273 = arith.constant 120 : index
    %c0_274 = arith.constant 0 : index
    %1371 = vector.load %arg8[%c120_273, %c0_274] : memref<128x128xf32, #tpu.memory_space<vmem>>, vector<1x128xf32>
    tpu.vector_store %arg8[%c120_273, %c0_274], %1370 {strides = array<i32>} : memref<128x128xf32, #tpu.memory_space<vmem>>, vector<1x128xf32>,
    %1372 = vector.extract_strided_slice %1360 {offsets = [1, 0], sizes = [1, 128], strides = [1, 1]} : vector<8x128xf32> to vector<1x128xf32>
    %1373 = tpu.reciprocal %1370 {approx = true} : vector<1x128xf32> -> vector<1x128xf32>
    %1374 = arith.subf %1370, %1372 : vector<1x128xf32>
    %1375 = vector.broadcast %0 : f32 to vector<1x128xf32>
    %1376 = arith.mulf %1375, %1373 : vector<1x128xf32>
    %1377 = arith.mulf %1370, %1373 : vector<1x128xf32>
    %cst_275 = arith.constant 2.000000e+00 : f32
    %1378 = vector.broadcast %cst_275 : f32 to vector<1x128xf32>
    %1379 = arith.subf %1378, %1377 : vector<1x128xf32>
    %1380 = arith.mulf %1376, %1379 : vector<1x128xf32>
    %1381 = arith.addf %1374, %1380 : vector<1x128xf32>
    %c121 = arith.constant 121 : index
    %c0_276 = arith.constant 0 : index
    %1382 = vector.load %arg8[%c121, %c0_276] : memref<128x128xf32, #tpu.memory_space<vmem>>, vector<1x128xf32>
    tpu.vector_store %arg8[%c121, %c0_276], %1381 {strides = array<i32>} : memref<128x128xf32, #tpu.memory_space<vmem>>, vector<1x128xf32>,
    %1383 = vector.extract_strided_slice %1360 {offsets = [2, 0], sizes = [1, 128], strides = [1, 1]} : vector<8x128xf32> to vector<1x128xf32>
    %1384 = tpu.reciprocal %1381 {approx = true} : vector<1x128xf32> -> vector<1x128xf32>
    %1385 = arith.subf %1381, %1383 : vector<1x128xf32>
    %1386 = vector.broadcast %0 : f32 to vector<1x128xf32>
    %1387 = arith.mulf %1386, %1384 : vector<1x128xf32>
    %1388 = arith.mulf %1381, %1384 : vector<1x128xf32>
    %cst_277 = arith.constant 2.000000e+00 : f32
    %1389 = vector.broadcast %cst_277 : f32 to vector<1x128xf32>
    %1390 = arith.subf %1389, %1388 : vector<1x128xf32>
    %1391 = arith.mulf %1387, %1390 : vector<1x128xf32>
    %1392 = arith.addf %1385, %1391 : vector<1x128xf32>
    %c122 = arith.constant 122 : index
    %c0_278 = arith.constant 0 : index
    %1393 = vector.load %arg8[%c122, %c0_278] : memref<128x128xf32, #tpu.memory_space<vmem>>, vector<1x128xf32>
    tpu.vector_store %arg8[%c122, %c0_278], %1392 {strides = array<i32>} : memref<128x128xf32, #tpu.memory_space<vmem>>, vector<1x128xf32>,
    %1394 = vector.extract_strided_slice %1360 {offsets = [3, 0], sizes = [1, 128], strides = [1, 1]} : vector<8x128xf32> to vector<1x128xf32>
    %1395 = tpu.reciprocal %1392 {approx = true} : vector<1x128xf32> -> vector<1x128xf32>
    %1396 = arith.subf %1392, %1394 : vector<1x128xf32>
    %1397 = vector.broadcast %0 : f32 to vector<1x128xf32>
    %1398 = arith.mulf %1397, %1395 : vector<1x128xf32>
    %1399 = arith.mulf %1392, %1395 : vector<1x128xf32>
    %cst_279 = arith.constant 2.000000e+00 : f32
    %1400 = vector.broadcast %cst_279 : f32 to vector<1x128xf32>
    %1401 = arith.subf %1400, %1399 : vector<1x128xf32>
    %1402 = arith.mulf %1398, %1401 : vector<1x128xf32>
    %1403 = arith.addf %1396, %1402 : vector<1x128xf32>
    %c123 = arith.constant 123 : index
    %c0_280 = arith.constant 0 : index
    %1404 = vector.load %arg8[%c123, %c0_280] : memref<128x128xf32, #tpu.memory_space<vmem>>, vector<1x128xf32>
    tpu.vector_store %arg8[%c123, %c0_280], %1403 {strides = array<i32>} : memref<128x128xf32, #tpu.memory_space<vmem>>, vector<1x128xf32>,
    %1405 = vector.extract_strided_slice %1360 {offsets = [4, 0], sizes = [1, 128], strides = [1, 1]} : vector<8x128xf32> to vector<1x128xf32>
    %1406 = tpu.reciprocal %1403 {approx = true} : vector<1x128xf32> -> vector<1x128xf32>
    %1407 = arith.subf %1403, %1405 : vector<1x128xf32>
    %1408 = vector.broadcast %0 : f32 to vector<1x128xf32>
    %1409 = arith.mulf %1408, %1406 : vector<1x128xf32>
    %1410 = arith.mulf %1403, %1406 : vector<1x128xf32>
    %cst_281 = arith.constant 2.000000e+00 : f32
    %1411 = vector.broadcast %cst_281 : f32 to vector<1x128xf32>
    %1412 = arith.subf %1411, %1410 : vector<1x128xf32>
    %1413 = arith.mulf %1409, %1412 : vector<1x128xf32>
    %1414 = arith.addf %1407, %1413 : vector<1x128xf32>
    %c124 = arith.constant 124 : index
    %c0_282 = arith.constant 0 : index
    %1415 = vector.load %arg8[%c124, %c0_282] : memref<128x128xf32, #tpu.memory_space<vmem>>, vector<1x128xf32>
    tpu.vector_store %arg8[%c124, %c0_282], %1414 {strides = array<i32>} : memref<128x128xf32, #tpu.memory_space<vmem>>, vector<1x128xf32>,
    %1416 = vector.extract_strided_slice %1360 {offsets = [5, 0], sizes = [1, 128], strides = [1, 1]} : vector<8x128xf32> to vector<1x128xf32>
    %1417 = tpu.reciprocal %1414 {approx = true} : vector<1x128xf32> -> vector<1x128xf32>
    %1418 = arith.subf %1414, %1416 : vector<1x128xf32>
    %1419 = vector.broadcast %0 : f32 to vector<1x128xf32>
    %1420 = arith.mulf %1419, %1417 : vector<1x128xf32>
    %1421 = arith.mulf %1414, %1417 : vector<1x128xf32>
    %cst_283 = arith.constant 2.000000e+00 : f32
    %1422 = vector.broadcast %cst_283 : f32 to vector<1x128xf32>
    %1423 = arith.subf %1422, %1421 : vector<1x128xf32>
    %1424 = arith.mulf %1420, %1423 : vector<1x128xf32>
    %1425 = arith.addf %1418, %1424 : vector<1x128xf32>
    %c125 = arith.constant 125 : index
    %c0_284 = arith.constant 0 : index
    %1426 = vector.load %arg8[%c125, %c0_284] : memref<128x128xf32, #tpu.memory_space<vmem>>, vector<1x128xf32>
    tpu.vector_store %arg8[%c125, %c0_284], %1425 {strides = array<i32>} : memref<128x128xf32, #tpu.memory_space<vmem>>, vector<1x128xf32>,
    %1427 = vector.extract_strided_slice %1360 {offsets = [6, 0], sizes = [1, 128], strides = [1, 1]} : vector<8x128xf32> to vector<1x128xf32>
    %1428 = tpu.reciprocal %1425 {approx = true} : vector<1x128xf32> -> vector<1x128xf32>
    %1429 = arith.subf %1425, %1427 : vector<1x128xf32>
    %1430 = vector.broadcast %0 : f32 to vector<1x128xf32>
    %1431 = arith.mulf %1430, %1428 : vector<1x128xf32>
    %1432 = arith.mulf %1425, %1428 : vector<1x128xf32>
    %cst_285 = arith.constant 2.000000e+00 : f32
    %1433 = vector.broadcast %cst_285 : f32 to vector<1x128xf32>
    %1434 = arith.subf %1433, %1432 : vector<1x128xf32>
    %1435 = arith.mulf %1431, %1434 : vector<1x128xf32>
    %1436 = arith.addf %1429, %1435 : vector<1x128xf32>
    %c126 = arith.constant 126 : index
    %c0_286 = arith.constant 0 : index
    %1437 = vector.load %arg8[%c126, %c0_286] : memref<128x128xf32, #tpu.memory_space<vmem>>, vector<1x128xf32>
    tpu.vector_store %arg8[%c126, %c0_286], %1436 {strides = array<i32>} : memref<128x128xf32, #tpu.memory_space<vmem>>, vector<1x128xf32>,
    %1438 = vector.extract_strided_slice %1360 {offsets = [7, 0], sizes = [1, 128], strides = [1, 1]} : vector<8x128xf32> to vector<1x128xf32>
    %1439 = tpu.reciprocal %1436 {approx = true} : vector<1x128xf32> -> vector<1x128xf32>
    %1440 = arith.subf %1436, %1438 : vector<1x128xf32>
    %1441 = vector.broadcast %0 : f32 to vector<1x128xf32>
    %1442 = arith.mulf %1441, %1439 : vector<1x128xf32>
    %1443 = arith.mulf %1436, %1439 : vector<1x128xf32>
    %cst_287 = arith.constant 2.000000e+00 : f32
    %1444 = vector.broadcast %cst_287 : f32 to vector<1x128xf32>
    %1445 = arith.subf %1444, %1443 : vector<1x128xf32>
    %1446 = arith.mulf %1442, %1445 : vector<1x128xf32>
    %1447 = arith.addf %1440, %1446 : vector<1x128xf32>
    %c127 = arith.constant 127 : index
    %c0_288 = arith.constant 0 : index
    %1448 = vector.load %arg8[%c127, %c0_288] : memref<128x128xf32, #tpu.memory_space<vmem>>, vector<1x128xf32>
    tpu.vector_store %arg8[%c127, %c0_288], %1447 {strides = array<i32>} : memref<128x128xf32, #tpu.memory_space<vmem>>, vector<1x128xf32>,
    %c0_289 = arith.constant 0 : index
    %c0_290 = arith.constant 0 : index
    %1449 = vector.load %arg3[%c0_289, %c0_290] : memref<16x128xf32, #tpu.memory_space<vmem>>, vector<16x128xf32>
    %c0_291 = arith.constant 0 : index
    %c0_292 = arith.constant 0 : index
    %1450 = vector.load %arg8[%c0_291, %c0_292] : memref<128x128xf32, #tpu.memory_space<vmem>>, vector<128x128xf32>
    %cst_293 = arith.constant dense<0.000000e+00> : vector<16x128xf32>
    %1451 = tpu.matmul %1449, %1450, %cst_293 {dimension_numbers = #tpu.dot_dimension_numbers<[1], [0], [0], [1], [0, 0, 1, 1], [], []>} : vector<16x128xf32>, vector<128x128xf32>, vector<16x128xf32> -> vector<16x128xf32>
    %c0_294 = arith.constant 0 : index
    %c0_295 = arith.constant 0 : index
    %1452 = vector.load %arg4[%c0_294, %c0_295] : memref<16x1xf32, #tpu.memory_space<vmem>>, vector<16x1xf32>
    %1453 = vector.broadcast %1452 : vector<16x1xf32> to vector<16x128xf32>
    %1454 = arith.addf %1451, %1453 : vector<16x128xf32>
    %1455 = arith.negf %1454 : vector<16x128xf32>
    %1456 = math.exp %1455 : vector<16x128xf32>
    %cst_296 = arith.constant 1.000000e+00 : f32
    %1457 = vector.broadcast %cst_296 : f32 to vector<16x128xf32>
    %1458 = arith.addf %1457, %1456 : vector<16x128xf32>
    %1459 = arith.divf %1457, %1458 : vector<16x128xf32>
    %c0_297 = arith.constant 0 : index
    %c0_298 = arith.constant 0 : index
    %1460 = vector.load %arg5[%c0_297, %c0_298] : memref<4x16xf32, #tpu.memory_space<vmem>>, vector<4x16xf32>
    %cst_299 = arith.constant dense<0.000000e+00> : vector<4x128xf32>
    %1461 = tpu.matmul %1460, %1459, %cst_299 {dimension_numbers = #tpu.dot_dimension_numbers<[1], [0], [0], [1], [0, 0, 1, 1], [], []>} : vector<4x16xf32>, vector<16x128xf32>, vector<4x128xf32> -> vector<4x128xf32>
    %c0_300 = arith.constant 0 : index
    %c0_301 = arith.constant 0 : index
    %1462 = vector.load %arg6[%c0_300, %c0_301] : memref<4x1xf32, #tpu.memory_space<vmem>>, vector<4x1xf32>
    %1463 = vector.broadcast %1462 : vector<4x1xf32> to vector<4x128xf32>
    %1464 = arith.addf %1461, %1463 : vector<4x128xf32>
    %c0_302 = arith.constant 0 : index
    %c0_303 = arith.constant 0 : index
    %1465 = vector.load %arg7[%c0_302, %c0_303] : memref<4x128xf32, #tpu.memory_space<vmem>>, vector<4x128xf32>
    tpu.vector_store %arg7[%c0_302, %c0_303], %1464 {strides = array<i32>} : memref<4x128xf32, #tpu.memory_space<vmem>>, vector<4x128xf32>,
    return
  }
  func.func @transform_0(%arg0: i32) -> i32 {
    %c0_i32 = arith.constant 0 : i32
    %c0_i32_0 = arith.constant 0 : i32
    return %c0_i32 : i32
  }
  func.func @transform_1(%arg0: i32) -> (i32, i32) {
    %c0_i32 = arith.constant 0 : i32
    %c0_i32_0 = arith.constant 0 : i32
    return %c0_i32, %arg0 : i32, i32
  }
  func.func @transform_2(%arg0: i32) -> (i32, i32) {
    %c0_i32 = arith.constant 0 : i32
    %c0_i32_0 = arith.constant 0 : i32
    %c0_i32_1 = arith.constant 0 : i32
    return %c0_i32, %c0_i32_0 : i32, i32
  }
  func.func @transform_3(%arg0: i32) -> (i32, i32) {
    %c0_i32 = arith.constant 0 : i32
    %c0_i32_0 = arith.constant 0 : i32
    %c0_i32_1 = arith.constant 0 : i32
    return %c0_i32, %c0_i32_0 : i32, i32
  }
  func.func @transform_4(%arg0: i32) -> (i32, i32) {
    %c0_i32 = arith.constant 0 : i32
    %c0_i32_0 = arith.constant 0 : i32
    %c0_i32_1 = arith.constant 0 : i32
    return %c0_i32, %c0_i32_0 : i32, i32
  }
  func.func @transform_5(%arg0: i32) -> (i32, i32) {
    %c0_i32 = arith.constant 0 : i32
    %c0_i32_0 = arith.constant 0 : i32
    %c0_i32_1 = arith.constant 0 : i32
    return %c0_i32, %c0_i32_0 : i32, i32
  }
  func.func @transform_6(%arg0: i32) -> (i32, i32) {
    %c0_i32 = arith.constant 0 : i32
    %c0_i32_0 = arith.constant 0 : i32
    return %c0_i32, %arg0 : i32, i32
  }
}

</mosaic_0001>

<llo_original>
// kernel: net_forward.1
$region0: #{net_forward.1}
  #allocation0 [shape = 'u32[]', space=smem, size = 0x4, offset = 0x4, fixed_abs, tag = 'smem constant byte address 0x4 - core index']
  #allocation1 [shape = 'u32[72,128]{1,0:T(1,128)}', space=vmem, size = 0x9000, scoped, tag = 'internal scratch']
  #allocation2 [shape = 'f32[128,128]{1,0:T(8,128)}', space=vmem, size = 0x10000, scoped, tag = 'scratch operand']
  %s0 = inlined_call_operand.vmem [shape: f32[2], index: 0, kind: input, shape index: {}]
  %s1 = inlined_call_operand.vmem [shape: f32[128,128], index: 1, kind: input, shape index: {}]
  %s2 = inlined_call_operand.vmem [shape: f32[16,128], index: 2, kind: input, shape index: {}]
  %s3 = inlined_call_operand.vmem [shape: f32[16,1], index: 3, kind: input, shape index: {}]
  %s4 = inlined_call_operand.vmem [shape: f32[4,16], index: 4, kind: input, shape index: {}]
  %s5 = inlined_call_operand.vmem [shape: f32[4,1], index: 5, kind: input, shape index: {}]
  %s6 = inlined_call_operand.vmem [shape: f32[4,128], index: 6, kind: output, shape index: {}]
  %s7 = sld [smem:[#allocation0]]
  $region38: #{net_forward.1} parent=0
    _
  %s9 = ssub.s32 1, %s7
  %s10 = scalar_select 0, %s9, %s7
  $region1: #{net_forward.1} parent=0
    #allocation3 [shape = 'u8[512]{0}', space=smem, size = 0x200, scoped, tag = 'input window, operand 0, single buffered']
    #allocation4 [shape = 's32[1]{0}', space=sflag, size = 0x4, scoped, tag = 'scoped memory for net_forward.1']
    %11 = vsyncpa [#allocation4], 0
    // Predicated region
    $region2: #{net_forward.1} parent=1 // pred_check
      _
    $region3: #{net_forward.1} parent=1 // pred_check_branch
      %13 = sbr.rel (0) target = $region5
    $region4: #{net_forward.1} parent=1 // pred_region
      %15 = vsyncadd [#allocation4], 0
      %s17 = sshll.u32 %s0, 4
      %s18 = int_to_ptr.vmem [resolvable:$true] %s17
      %20 = dma.vmem_to_smem %s18, 16, [#allocation3], [#allocation4]
    $region5: #{net_forward.1} parent=1 // pred_fallthru
      _
    // Predicated region
    $region6: #{net_forward.1} parent=1 // pred_check
      _
    $region7: #{net_forward.1} parent=1 // pred_check_branch
      %22 = sbr.rel (0) target = $region9
    $region8: #{net_forward.1} parent=1 // pred_region
      _
    $region9: #{net_forward.1} parent=1 // pred_fallthru
      _
    // Predicated region
    $region10: #{net_forward.1} parent=1 // pred_check
      _
    $region11: #{net_forward.1} parent=1 // pred_check_branch
      %24 = sbr.rel (0) target = $region13
    $region12: #{net_forward.1} parent=1 // pred_region
      _
    $region13: #{net_forward.1} parent=1 // pred_fallthru
      _
    // Predicated region
    $region14: #{net_forward.1} parent=1 // pred_check
      _
    $region15: #{net_forward.1} parent=1 // pred_check_branch
      %26 = sbr.rel (0) target = $region17
    $region16: #{net_forward.1} parent=1 // pred_region
      _
    $region17: #{net_forward.1} parent=1 // pred_fallthru
      _
    // Predicated region
    $region18: #{net_forward.1} parent=1 // pred_check
      _
    $region19: #{net_forward.1} parent=1 // pred_check_branch
      %28 = sbr.rel (0) target = $region21
    $region20: #{net_forward.1} parent=1 // pred_region
      _
    $region21: #{net_forward.1} parent=1 // pred_fallthru
      _
    // Predicated region
    $region22: #{net_forward.1} parent=1 // pred_check
      _
    $region23: #{net_forward.1} parent=1 // pred_check_branch
      %30 = sbr.rel (0) target = $region25
    $region24: #{net_forward.1} parent=1 // pred_region
      _
    $region25: #{net_forward.1} parent=1 // pred_fallthru
      _
    // Predicated region
    $region26: #{net_forward.1} parent=1 // pred_check
      _
    $region27: #{net_forward.1} parent=1 // pred_check_branch
      %32 = sbr.rel (0) target = $region29
    $region28: #{net_forward.1} parent=1 // pred_region
      %34 = dma.done [#allocation4], 16
    $region29: #{net_forward.1} parent=1 // pred_fallthru
      _
    %35 = sfence
    %s36 = sld [smem:[#allocation3]]
    %s37 = sld [smem:[#allocation3 + $0x1]]
    %38 = vst [vmem:[#allocation2] sm:$0x1] 1.0
    %v39 = vld [vmem:[%s1] sm:$0xff]
    %v40 = vstv %s37
    %v41 = vmul.f32 %v40, %v39
    %v42 = vrcp.pop 1.0
    %v43 = vsub.f32 1.0, %v41
    %v44 = vstv %s36
    %v45 = vmul.f32 %v44, %v42
    %v46 = vsub.f32 2.0, %v42
    %v47 = vmul.f32 %v45, %v46
    %v48 = vadd.f32 %v43, %v47
    %49 = vst [vmem:[#allocation2] sm:$0x2] %v48
    %v50 = vrcp.pop %v48
    %v52 = vrot.slane %v41, 1
    %v54 = vsub.f32 %v48, %v52
    %v55 = vmul.f32 %v44, %v50
    %v56 = vmul.f32 %v48, %v50
    %v57 = vsub.f32 2.0, %v56
    %v58 = vmul.f32 %v55, %v57
    %v59 = vadd.f32 %v54, %v58
    %60 = vst [vmem:[#allocation2 + $0x1] sm:$0x2] %v59
    %v61 = vrcp.pop %v59
    %v62 = vrot.slane %v41, 2
    %v64 = vsub.f32 %v59, %v62
    %v65 = vmul.f32 %v44, %v61
    %v66 = vmul.f32 %v59, %v61
    %v67 = vsub.f32 2.0, %v66
    %v68 = vmul.f32 %v65, %v67
    %v69 = vadd.f32 %v64, %v68
    %70 = vst [vmem:[#allocation2 + $0x2] sm:$0x2] %v69
    %v71 = vrcp.pop %v69
    %v72 = vrot.slane %v41, 3
    %v74 = vsub.f32 %v69, %v72
    %v75 = vmul.f32 %v44, %v71
    %v76 = vmul.f32 %v69, %v71
    %v77 = vsub.f32 2.0, %v76
    %v78 = vmul.f32 %v75, %v77
    %v79 = vadd.f32 %v74, %v78
    %80 = vst [vmem:[#allocation2 + $0x3] sm:$0x2] %v79
    %v81 = vrcp.pop %v79
    %v82 = vrot.slane %v41, 4
    %v84 = vsub.f32 %v79, %v82
    %v85 = vmul.f32 %v44, %v81
    %v86 = vmul.f32 %v79, %v81
    %v87 = vsub.f32 2.0, %v86
    %v88 = vmul.f32 %v85, %v87
    %v89 = vadd.f32 %v84, %v88
    %90 = vst [vmem:[#allocation2 + $0x4] sm:$0x2] %v89
    %v91 = vrcp.pop %v89
    %v92 = vrot.slane %v41, 5
    %v94 = vsub.f32 %v89, %v92
    %v95 = vmul.f32 %v44, %v91
    %v96 = vmul.f32 %v89, %v91
    %v97 = vsub.f32 2.0, %v96
    %v98 = vmul.f32 %v95, %v97
    %v99 = vadd.f32 %v94, %v98
    %100 = vst [vmem:[#allocation2 + $0x5] sm:$0x2] %v99
    %v101 = vrcp.pop %v99
    %v102 = vrot.slane %v41, 6
    %v104 = vsub.f32 %v99, %v102
    %v105 = vmul.f32 %v44, %v101
    %v106 = vmul.f32 %v99, %v101
    %v107 = vsub.f32 2.0, %v106
    %v108 = vmul.f32 %v105, %v107
    %v109 = vadd.f32 %v104, %v108
    %110 = vst [vmem:[#allocation2 + $0x6] sm:$0x2] %v109
    %v111 = vld [vmem:[%s1 + $0x8] sm:$0xff]
    %v112 = vmul.f32 %v40, %v111
    %v113 = vrcp.pop %v109
    %v115 = vrot.slane %v112, 7
    %v117 = vsub.f32 %v109, %v115
    %v118 = vmul.f32 %v44, %v113
    %v119 = vmul.f32 %v109, %v113
    %v120 = vsub.f32 2.0, %v119
    %v121 = vmul.f32 %v118, %v120
    %v122 = vadd.f32 %v117, %v121
    %123 = vst [vmem:[#allocation2 + $0x7] sm:$0x2] %v122
    %v124 = vrcp.pop %v122
    %v125 = vsub.f32 %v122, %v112
    %v126 = vmul.f32 %v44, %v124
    %v127 = vmul.f32 %v122, %v124
    %v128 = vsub.f32 2.0, %v127
    %v129 = vmul.f32 %v126, %v128
    %v130 = vadd.f32 %v125, %v129
    %131 = vst [vmem:[#allocation2 + $0x8] sm:$0x2] %v130
    %v132 = vrcp.pop %v130
    %v133 = vrot.slane %v112, 1
    %v135 = vsub.f32 %v130, %v133
    %v136 = vmul.f32 %v44, %v132
    %v137 = vmul.f32 %v130, %v132
    %v138 = vsub.f32 2.0, %v137
    %v139 = vmul.f32 %v136, %v138
    %v140 = vadd.f32 %v135, %v139
    %141 = vst [vmem:[#allocation2 + $0x9] sm:$0x2] %v140
    %v142 = vrcp.pop %v140
    %v143 = vrot.slane %v112, 2
    %v145 = vsub.f32 %v140, %v143
    %v146 = vmul.f32 %v44, %v142
    %v147 = vmul.f32 %v140, %v142
    %v148 = vsub.f32 2.0, %v147
    %v149 = vmul.f32 %v146, %v148
    %v150 = vadd.f32 %v145, %v149
    %151 = vst [vmem:[#allocation2 + $0xa] sm:$0x2] %v150
    %v152 = vrcp.pop %v150
    %v153 = vrot.slane %v112, 3
    %v155 = vsub.f32 %v150, %v153
    %v156 = vmul.f32 %v44, %v152
    %v157 = vmul.f32 %v150, %v152
    %v158 = vsub.f32 2.0, %v157
    %v159 = vmul.f32 %v156, %v158
    %v160 = vadd.f32 %v155, %v159
    %161 = vst [vmem:[#allocation2 + $0xb] sm:$0x2] %v160
    %v162 = vrcp.pop %v160
    %v163 = vrot.slane %v112, 4
    %v165 = vsub.f32 %v160, %v163
    %v166 = vmul.f32 %v44, %v162
    %v167 = vmul.f32 %v160, %v162
    %v168 = vsub.f32 2.0, %v167
    %v169 = vmul.f32 %v166, %v168
    %v170 = vadd.f32 %v165, %v169
    %171 = vst [vmem:[#allocation2 + $0xc] sm:$0x2] %v170
    %v172 = vrcp.pop %v170
    %v173 = vrot.slane %v112, 5
    %v175 = vsub.f32 %v170, %v173
    %v176 = vmul.f32 %v44, %v172
    %v177 = vmul.f32 %v170, %v172
    %v178 = vsub.f32 2.0, %v177
    %v179 = vmul.f32 %v176, %v178
    %v180 = vadd.f32 %v175, %v179
    %181 = vst [vmem:[#allocation2 + $0xd] sm:$0x2] %v180
    %v182 = vrcp.pop %v180
    %v183 = vrot.slane %v112, 6
    %v185 = vsub.f32 %v180, %v183
    %v186 = vmul.f32 %v44, %v182
    %v187 = vmul.f32 %v180, %v182
    %v188 = vsub.f32 2.0, %v187
    %v189 = vmul.f32 %v186, %v188
    %v190 = vadd.f32 %v185, %v189
    %191 = vst [vmem:[#allocation2 + $0xe] sm:$0x2] %v190
    %v192 = vld [vmem:[%s1 + $0x10] sm:$0xff]
    %v193 = vmul.f32 %v40, %v192
    %v194 = vrcp.pop %v190
    %v196 = vrot.slane %v193, 7
    %v198 = vsub.f32 %v190, %v196
    %v199 = vmul.f32 %v44, %v194
    %v200 = vmul.f32 %v190, %v194
    %v201 = vsub.f32 2.0, %v200
    %v202 = vmul.f32 %v199, %v201
    %v203 = vadd.f32 %v198, %v202
    %204 = vst [vmem:[#allocation2 + $0xf] sm:$0x2] %v203
    %v205 = vrcp.pop %v203
    %v206 = vsub.f32 %v203, %v193
    %v207 = vmul.f32 %v44, %v205
    %v208 = vmul.f32 %v203, %v205
    %v209 = vsub.f32 2.0, %v208
    %v210 = vmul.f32 %v207, %v209
    %v211 = vadd.f32 %v206, %v210
    %212 = vst [vmem:[#allocation2 + $0x10] sm:$0x2] %v211
    %v213 = vrcp.pop %v211
    %v214 = vrot.slane %v193, 1
    %v216 = vsub.f32 %v211, %v214
    %v217 = vmul.f32 %v44, %v213
    %v218 = vmul.f32 %v211, %v213
    %v219 = vsub.f32 2.0, %v218
    %v220 = vmul.f32 %v217, %v219
    %v221 = vadd.f32 %v216, %v220
    %222 = vst [vmem:[#allocation2 + $0x11] sm:$0x2] %v221
    %v223 = vrcp.pop %v221
    %v224 = vrot.slane %v193, 2
    %v226 = vsub.f32 %v221, %v224
    %v227 = vmul.f32 %v44, %v223
    %v228 = vmul.f32 %v221, %v223
    %v229 = vsub.f32 2.0, %v228
    %v230 = vmul.f32 %v227, %v229
    %v231 = vadd.f32 %v226, %v230
    %232 = vst [vmem:[#allocation2 + $0x12] sm:$0x2] %v231
    %v233 = vrcp.pop %v231
    %v234 = vrot.slane %v193, 3
    %v236 = vsub.f32 %v231, %v234
    %v237 = vmul.f32 %v44, %v233
    %v238 = vmul.f32 %v231, %v233
    %v239 = vsub.f32 2.0, %v238
    %v240 = vmul.f32 %v237, %v239
    %v241 = vadd.f32 %v236, %v240
    %242 = vst [vmem:[#allocation2 + $0x13] sm:$0x2] %v241
    %v243 = vrcp.pop %v241
    %v244 = vrot.slane %v193, 4
    %v246 = vsub.f32 %v241, %v244
    %v247 = vmul.f32 %v44, %v243
    %v248 = vmul.f32 %v241, %v243
    %v249 = vsub.f32 2.0, %v248
    %v250 = vmul.f32 %v247, %v249
    %v251 = vadd.f32 %v246, %v250
    %252 = vst [vmem:[#allocation2 + $0x14] sm:$0x2] %v251
    %v253 = vrcp.pop %v251
    %v254 = vrot.slane %v193, 5
    %v256 = vsub.f32 %v251, %v254
    %v257 = vmul.f32 %v44, %v253
    %v258 = vmul.f32 %v251, %v253
    %v259 = vsub.f32 2.0, %v258
    %v260 = vmul.f32 %v257, %v259
    %v261 = vadd.f32 %v256, %v260
    %262 = vst [vmem:[#allocation2 + $0x15] sm:$0x2] %v261
    %v263 = vrcp.pop %v261
    %v264 = vrot.slane %v193, 6
    %v266 = vsub.f32 %v261, %v264
    %v267 = vmul.f32 %v44, %v263
    %v268 = vmul.f32 %v261, %v263
    %v269 = vsub.f32 2.0, %v268
    %v270 = vmul.f32 %v267, %v269
    %v271 = vadd.f32 %v266, %v270
    %272 = vst [vmem:[#allocation2 + $0x16] sm:$0x2] %v271
    %v273 = vld [vmem:[%s1 + $0x18] sm:$0xff]
    %v274 = vmul.f32 %v40, %v273
    %v275 = vrcp.pop %v271
    %v277 = vrot.slane %v274, 7
    %v279 = vsub.f32 %v271, %v277
    %v280 = vmul.f32 %v44, %v275
    %v281 = vmul.f32 %v271, %v275
    %v282 = vsub.f32 2.0, %v281
    %v283 = vmul.f32 %v280, %v282
    %v284 = vadd.f32 %v279, %v283
    %285 = vst [vmem:[#allocation2 + $0x17] sm:$0x2] %v284
    %v286 = vrcp.pop %v284
    %v287 = vsub.f32 %v284, %v274
    %v288 = vmul.f32 %v44, %v286
    %v289 = vmul.f32 %v284, %v286
    %v290 = vsub.f32 2.0, %v289
    %v291 = vmul.f32 %v288, %v290
    %v292 = vadd.f32 %v287, %v291
    %293 = vst [vmem:[#allocation2 + $0x18] sm:$0x2] %v292
    %v294 = vrcp.pop %v292
    %v295 = vrot.slane %v274, 1
    %v297 = vsub.f32 %v292, %v295
    %v298 = vmul.f32 %v44, %v294
    %v299 = vmul.f32 %v292, %v294
    %v300 = vsub.f32 2.0, %v299
    %v301 = vmul.f32 %v298, %v300
    %v302 = vadd.f32 %v297, %v301
    %303 = vst [vmem:[#allocation2 + $0x19] sm:$0x2] %v302
    %v304 = vrcp.pop %v302
    %v305 = vrot.slane %v274, 2
    %v307 = vsub.f32 %v302, %v305
    %v308 = vmul.f32 %v44, %v304
    %v309 = vmul.f32 %v302, %v304
    %v310 = vsub.f32 2.0, %v309
    %v311 = vmul.f32 %v308, %v310
    %v312 = vadd.f32 %v307, %v311
    %313 = vst [vmem:[#allocation2 + $0x1a] sm:$0x2] %v312
    %v314 = vrcp.pop %v312
    %v315 = vrot.slane %v274, 3
    %v317 = vsub.f32 %v312, %v315
    %v318 = vmul.f32 %v44, %v314
    %v319 = vmul.f32 %v312, %v314
    %v320 = vsub.f32 2.0, %v319
    %v321 = vmul.f32 %v318, %v320
    %v322 = vadd.f32 %v317, %v321
    %323 = vst [vmem:[#allocation2 + $0x1b] sm:$0x2] %v322
    %v324 = vrcp.pop %v322
    %v325 = vrot.slane %v274, 4
    %v327 = vsub.f32 %v322, %v325
    %v328 = vmul.f32 %v44, %v324
    %v329 = vmul.f32 %v322, %v324
    %v330 = vsub.f32 2.0, %v329
    %v331 = vmul.f32 %v328, %v330
    %v332 = vadd.f32 %v327, %v331
    %333 = vst [vmem:[#allocation2 + $0x1c] sm:$0x2] %v332
    %v334 = vrcp.pop %v332
    %v335 = vrot.slane %v274, 5
    %v337 = vsub.f32 %v332, %v335
    %v338 = vmul.f32 %v44, %v334
    %v339 = vmul.f32 %v332, %v334
    %v340 = vsub.f32 2.0, %v339
    %v341 = vmul.f32 %v338, %v340
    %v342 = vadd.f32 %v337, %v341
    %343 = vst [vmem:[#allocation2 + $0x1d] sm:$0x2] %v342
    %v344 = vrcp.pop %v342
    %v345 = vrot.slane %v274, 6
    %v347 = vsub.f32 %v342, %v345
    %v348 = vmul.f32 %v44, %v344
    %v349 = vmul.f32 %v342, %v344
    %v350 = vsub.f32 2.0, %v349
    %v351 = vmul.f32 %v348, %v350
    %v352 = vadd.f32 %v347, %v351
    %353 = vst [vmem:[#allocation2 + $0x1e] sm:$0x2] %v352
    %v354 = vld [vmem:[%s1 + $0x20] sm:$0xff]
    %v355 = vmul.f32 %v40, %v354
    %v356 = vrcp.pop %v352
    %v358 = vrot.slane %v355, 7
    %v360 = vsub.f32 %v352, %v358
    %v361 = vmul.f32 %v44, %v356
    %v362 = vmul.f32 %v352, %v356
    %v363 = vsub.f32 2.0, %v362
    %v364 = vmul.f32 %v361, %v363
    %v365 = vadd.f32 %v360, %v364
    %366 = vst [vmem:[#allocation2 + $0x1f] sm:$0x2] %v365
    %v367 = vrcp.pop %v365
    %v368 = vsub.f32 %v365, %v355
    %v369 = vmul.f32 %v44, %v367
    %v370 = vmul.f32 %v365, %v367
    %v371 = vsub.f32 2.0, %v370
    %v372 = vmul.f32 %v369, %v371
    %v373 = vadd.f32 %v368, %v372
    %374 = vst [vmem:[#allocation2 + $0x20] sm:$0x2] %v373
    %v375 = vrcp.pop %v373
    %v376 = vrot.slane %v355, 1
    %v378 = vsub.f32 %v373, %v376
    %v379 = vmul.f32 %v44, %v375
    %v380 = vmul.f32 %v373, %v375
    %v381 = vsub.f32 2.0, %v380
    %v382 = vmul.f32 %v379, %v381
    %v383 = vadd.f32 %v378, %v382
    %384 = vst [vmem:[#allocation2 + $0x21] sm:$0x2] %v383
    %v385 = vrcp.pop %v383
    %v386 = vrot.slane %v355, 2
    %v388 = vsub.f32 %v383, %v386
    %v389 = vmul.f32 %v44, %v385
    %v390 = vmul.f32 %v383, %v385
    %v391 = vsub.f32 2.0, %v390
    %v392 = vmul.f32 %v389, %v391
    %v393 = vadd.f32 %v388, %v392
    %394 = vst [vmem:[#allocation2 + $0x22] sm:$0x2] %v393
    %v395 = vrcp.pop %v393
    %v396 = vrot.slane %v355, 3
    %v398 = vsub.f32 %v393, %v396
    %v399 = vmul.f32 %v44, %v395
    %v400 = vmul.f32 %v393, %v395
    %v401 = vsub.f32 2.0, %v400
    %v402 = vmul.f32 %v399, %v401
    %v403 = vadd.f32 %v398, %v402
    %404 = vst [vmem:[#allocation2 + $0x23] sm:$0x2] %v403
    %v405 = vrcp.pop %v403
    %v406 = vrot.slane %v355, 4
    %v408 = vsub.f32 %v403, %v406
    %v409 = vmul.f32 %v44, %v405
    %v410 = vmul.f32 %v403, %v405
    %v411 = vsub.f32 2.0, %v410
    %v412 = vmul.f32 %v409, %v411
    %v413 = vadd.f32 %v408, %v412
    %414 = vst [vmem:[#allocation2 + $0x24] sm:$0x2] %v413
    %v415 = vrcp.pop %v413
    %v416 = vrot.slane %v355, 5
    %v418 = vsub.f32 %v413, %v416
    %v419 = vmul.f32 %v44, %v415
    %v420 = vmul.f32 %v413, %v415
    %v421 = vsub.f32 2.0, %v420
    %v422 = vmul.f32 %v419, %v421
    %v423 = vadd.f32 %v418, %v422
    %424 = vst [vmem:[#allocation2 + $0x25] sm:$0x2] %v423
    %v425 = vrcp.pop %v423
    %v426 = vrot.slane %v355, 6
    %v428 = vsub.f32 %v423, %v426
    %v429 = vmul.f32 %v44, %v425
    %v430 = vmul.f32 %v423, %v425
    %v431 = vsub.f32 2.0, %v430
    %v432 = vmul.f32 %v429, %v431
    %v433 = vadd.f32 %v428, %v432
    %434 = vst [vmem:[#allocation2 + $0x26] sm:$0x2] %v433
    %v435 = vld [vmem:[%s1 + $0x28] sm:$0xff]
    %v436 = vmul.f32 %v40, %v435
    %v437 = vrcp.pop %v433
    %v439 = vrot.slane %v436, 7
    %v441 = vsub.f32 %v433, %v439
    %v442 = vmul.f32 %v44, %v437
    %v443 = vmul.f32 %v433, %v437
    %v444 = vsub.f32 2.0, %v443
    %v445 = vmul.f32 %v442, %v444
    %v446 = vadd.f32 %v441, %v445
    %447 = vst [vmem:[#allocation2 + $0x27] sm:$0x2] %v446
    %v448 = vrcp.pop %v446
    %v449 = vsub.f32 %v446, %v436
    %v450 = vmul.f32 %v44, %v448
    %v451 = vmul.f32 %v446, %v448
    %v452 = vsub.f32 2.0, %v451
    %v453 = vmul.f32 %v450, %v452
    %v454 = vadd.f32 %v449, %v453
    %455 = vst [vmem:[#allocation2 + $0x28] sm:$0x2] %v454
    %v456 = vrcp.pop %v454
    %v457 = vrot.slane %v436, 1
    %v459 = vsub.f32 %v454, %v457
    %v460 = vmul.f32 %v44, %v456
    %v461 = vmul.f32 %v454, %v456
    %v462 = vsub.f32 2.0, %v461
    %v463 = vmul.f32 %v460, %v462
    %v464 = vadd.f32 %v459, %v463
    %465 = vst [vmem:[#allocation2 + $0x29] sm:$0x2] %v464
    %v466 = vrcp.pop %v464
    %v467 = vrot.slane %v436, 2
    %v469 = vsub.f32 %v464, %v467
    %v470 = vmul.f32 %v44, %v466
    %v471 = vmul.f32 %v464, %v466
    %v472 = vsub.f32 2.0, %v471
    %v473 = vmul.f32 %v470, %v472
    %v474 = vadd.f32 %v469, %v473
    %475 = vst [vmem:[#allocation2 + $0x2a] sm:$0x2] %v474
    %v476 = vrcp.pop %v474
    %v477 = vrot.slane %v436, 3
    %v479 = vsub.f32 %v474, %v477
    %v480 = vmul.f32 %v44, %v476
    %v481 = vmul.f32 %v474, %v476
    %v482 = vsub.f32 2.0, %v481
    %v483 = vmul.f32 %v480, %v482
    %v484 = vadd.f32 %v479, %v483
    %485 = vst [vmem:[#allocation2 + $0x2b] sm:$0x2] %v484
    %v486 = vrcp.pop %v484
    %v487 = vrot.slane %v436, 4
    %v489 = vsub.f32 %v484, %v487
    %v490 = vmul.f32 %v44, %v486
    %v491 = vmul.f32 %v484, %v486
    %v492 = vsub.f32 2.0, %v491
    %v493 = vmul.f32 %v490, %v492
    %v494 = vadd.f32 %v489, %v493
    %495 = vst [vmem:[#allocation2 + $0x2c] sm:$0x2] %v494
    %v496 = vrcp.pop %v494
    %v497 = vrot.slane %v436, 5
    %v499 = vsub.f32 %v494, %v497
    %v500 = vmul.f32 %v44, %v496
    %v501 = vmul.f32 %v494, %v496
    %v502 = vsub.f32 2.0, %v501
    %v503 = vmul.f32 %v500, %v502
    %v504 = vadd.f32 %v499, %v503
    %505 = vst [vmem:[#allocation2 + $0x2d] sm:$0x2] %v504
    %v506 = vrcp.pop %v504
    %v507 = vrot.slane %v436, 6
    %v509 = vsub.f32 %v504, %v507
    %v510 = vmul.f32 %v44, %v506
    %v511 = vmul.f32 %v504, %v506
    %v512 = vsub.f32 2.0, %v511
    %v513 = vmul.f32 %v510, %v512
    %v514 = vadd.f32 %v509, %v513
    %515 = vst [vmem:[#allocation2 + $0x2e] sm:$0x2] %v514
    %v516 = vld [vmem:[%s1 + $0x30] sm:$0xff]
    %v517 = vmul.f32 %v40, %v516
    %v518 = vrcp.pop %v514
    %v520 = vrot.slane %v517, 7
    %v522 = vsub.f32 %v514, %v520
    %v523 = vmul.f32 %v44, %v518
    %v524 = vmul.f32 %v514, %v518
    %v525 = vsub.f32 2.0, %v524
    %v526 = vmul.f32 %v523, %v525
    %v527 = vadd.f32 %v522, %v526
    %528 = vst [vmem:[#allocation2 + $0x2f] sm:$0x2] %v527
    %v529 = vrcp.pop %v527
    %v530 = vsub.f32 %v527, %v517
    %v531 = vmul.f32 %v44, %v529
    %v532 = vmul.f32 %v527, %v529
    %v533 = vsub.f32 2.0, %v532
    %v534 = vmul.f32 %v531, %v533
    %v535 = vadd.f32 %v530, %v534
    %536 = vst [vmem:[#allocation2 + $0x30] sm:$0x2] %v535
    %v537 = vrcp.pop %v535
    %v538 = vrot.slane %v517, 1
    %v540 = vsub.f32 %v535, %v538
    %v541 = vmul.f32 %v44, %v537
    %v542 = vmul.f32 %v535, %v537
    %v543 = vsub.f32 2.0, %v542
    %v544 = vmul.f32 %v541, %v543
    %v545 = vadd.f32 %v540, %v544
    %546 = vst [vmem:[#allocation2 + $0x31] sm:$0x2] %v545
    %v547 = vrcp.pop %v545
    %v548 = vrot.slane %v517, 2
    %v550 = vsub.f32 %v545, %v548
    %v551 = vmul.f32 %v44, %v547
    %v552 = vmul.f32 %v545, %v547
    %v553 = vsub.f32 2.0, %v552
    %v554 = vmul.f32 %v551, %v553
    %v555 = vadd.f32 %v550, %v554
    %556 = vst [vmem:[#allocation2 + $0x32] sm:$0x2] %v555
    %v557 = vrcp.pop %v555
    %v558 = vrot.slane %v517, 3
    %v560 = vsub.f32 %v555, %v558
    %v561 = vmul.f32 %v44, %v557
    %v562 = vmul.f32 %v555, %v557
    %v563 = vsub.f32 2.0, %v562
    %v564 = vmul.f32 %v561, %v563
    %v565 = vadd.f32 %v560, %v564
    %566 = vst [vmem:[#allocation2 + $0x33] sm:$0x2] %v565
    %v567 = vrcp.pop %v565
    %v568 = vrot.slane %v517, 4
    %v570 = vsub.f32 %v565, %v568
    %v571 = vmul.f32 %v44, %v567
    %v572 = vmul.f32 %v565, %v567
    %v573 = vsub.f32 2.0, %v572
    %v574 = vmul.f32 %v571, %v573
    %v575 = vadd.f32 %v570, %v574
    %576 = vst [vmem:[#allocation2 + $0x34] sm:$0x2] %v575
    %v577 = vrcp.pop %v575
    %v578 = vrot.slane %v517, 5
    %v580 = vsub.f32 %v575, %v578
    %v581 = vmul.f32 %v44, %v577
    %v582 = vmul.f32 %v575, %v577
    %v583 = vsub.f32 2.0, %v582
    %v584 = vmul.f32 %v581, %v583
    %v585 = vadd.f32 %v580, %v584
    %586 = vst [vmem:[#allocation2 + $0x35] sm:$0x2] %v585
    %v587 = vrcp.pop %v585
    %v588 = vrot.slane %v517, 6
    %v590 = vsub.f32 %v585, %v588
    %v591 = vmul.f32 %v44, %v587
    %v592 = vmul.f32 %v585, %v587
    %v593 = vsub.f32 2.0, %v592
    %v594 = vmul.f32 %v591, %v593
    %v595 = vadd.f32 %v590, %v594
    %596 = vst [vmem:[#allocation2 + $0x36] sm:$0x2] %v595
    %v597 = vld [vmem:[%s1 + $0x38] sm:$0xff]
    %v598 = vmul.f32 %v40, %v597
    %v599 = vrcp.pop %v595
    %v601 = vrot.slane %v598, 7
    %v603 = vsub.f32 %v595, %v601
    %v604 = vmul.f32 %v44, %v599
    %v605 = vmul.f32 %v595, %v599
    %v606 = vsub.f32 2.0, %v605
    %v607 = vmul.f32 %v604, %v606
    %v608 = vadd.f32 %v603, %v607
    %609 = vst [vmem:[#allocation2 + $0x37] sm:$0x2] %v608
    %v610 = vrcp.pop %v608
    %v611 = vsub.f32 %v608, %v598
    %v612 = vmul.f32 %v44, %v610
    %v613 = vmul.f32 %v608, %v610
    %v614 = vsub.f32 2.0, %v613
    %v615 = vmul.f32 %v612, %v614
    %v616 = vadd.f32 %v611, %v615
    %617 = vst [vmem:[#allocation2 + $0x38] sm:$0x2] %v616
    %v618 = vrcp.pop %v616
    %v619 = vrot.slane %v598, 1
    %v621 = vsub.f32 %v616, %v619
    %v622 = vmul.f32 %v44, %v618
    %v623 = vmul.f32 %v616, %v618
    %v624 = vsub.f32 2.0, %v623
    %v625 = vmul.f32 %v622, %v624
    %v626 = vadd.f32 %v621, %v625
    %627 = vst [vmem:[#allocation2 + $0x39] sm:$0x2] %v626
    %v628 = vrcp.pop %v626
    %v629 = vrot.slane %v598, 2
    %v631 = vsub.f32 %v626, %v629
    %v632 = vmul.f32 %v44, %v628
    %v633 = vmul.f32 %v626, %v628
    %v634 = vsub.f32 2.0, %v633
    %v635 = vmul.f32 %v632, %v634
    %v636 = vadd.f32 %v631, %v635
    %637 = vst [vmem:[#allocation2 + $0x3a] sm:$0x2] %v636
    %v638 = vrcp.pop %v636
    %v639 = vrot.slane %v598, 3
    %v641 = vsub.f32 %v636, %v639
    %v642 = vmul.f32 %v44, %v638
    %v643 = vmul.f32 %v636, %v638
    %v644 = vsub.f32 2.0, %v643
    %v645 = vmul.f32 %v642, %v644
    %v646 = vadd.f32 %v641, %v645
    %647 = vst [vmem:[#allocation2 + $0x3b] sm:$0x2] %v646
    %v648 = vrcp.pop %v646
    %v649 = vrot.slane %v598, 4
    %v651 = vsub.f32 %v646, %v649
    %v652 = vmul.f32 %v44, %v648
    %v653 = vmul.f32 %v646, %v648
    %v654 = vsub.f32 2.0, %v653
    %v655 = vmul.f32 %v652, %v654
    %v656 = vadd.f32 %v651, %v655
    %657 = vst [vmem:[#allocation2 + $0x3c] sm:$0x2] %v656
    %v658 = vrcp.pop %v656
    %v659 = vrot.slane %v598, 5
    %v661 = vsub.f32 %v656, %v659
    %v662 = vmul.f32 %v44, %v658
    %v663 = vmul.f32 %v656, %v658
    %v664 = vsub.f32 2.0, %v663
    %v665 = vmul.f32 %v662, %v664
    %v666 = vadd.f32 %v661, %v665
    %667 = vst [vmem:[#allocation2 + $0x3d] sm:$0x2] %v666
    %v668 = vrcp.pop %v666
    %v669 = vrot.slane %v598, 6
    %v671 = vsub.f32 %v666, %v669
    %v672 = vmul.f32 %v44, %v668
    %v673 = vmul.f32 %v666, %v668
    %v674 = vsub.f32 2.0, %v673
    %v675 = vmul.f32 %v672, %v674
    %v676 = vadd.f32 %v671, %v675
    %677 = vst [vmem:[#allocation2 + $0x3e] sm:$0x2] %v676
    %v678 = vld [vmem:[%s1 + $0x40] sm:$0xff]
    %v679 = vmul.f32 %v40, %v678
    %v680 = vrcp.pop %v676
    %v682 = vrot.slane %v679, 7
    %v684 = vsub.f32 %v676, %v682
    %v685 = vmul.f32 %v44, %v680
    %v686 = vmul.f32 %v676, %v680
    %v687 = vsub.f32 2.0, %v686
    %v688 = vmul.f32 %v685, %v687
    %v689 = vadd.f32 %v684, %v688
    %690 = vst [vmem:[#allocation2 + $0x3f] sm:$0x2] %v689
    %v691 = vrcp.pop %v689
    %v692 = vsub.f32 %v689, %v679
    %v693 = vmul.f32 %v44, %v691
    %v694 = vmul.f32 %v689, %v691
    %v695 = vsub.f32 2.0, %v694
    %v696 = vmul.f32 %v693, %v695
    %v697 = vadd.f32 %v692, %v696
    %698 = vst [vmem:[#allocation2 + $0x40] sm:$0x2] %v697
    %v699 = vrcp.pop %v697
    %v700 = vrot.slane %v679, 1
    %v702 = vsub.f32 %v697, %v700
    %v703 = vmul.f32 %v44, %v699
    %v704 = vmul.f32 %v697, %v699
    %v705 = vsub.f32 2.0, %v704
    %v706 = vmul.f32 %v703, %v705
    %v707 = vadd.f32 %v702, %v706
    %708 = vst [vmem:[#allocation2 + $0x41] sm:$0x2] %v707
    %v709 = vrcp.pop %v707
    %v710 = vrot.slane %v679, 2
    %v712 = vsub.f32 %v707, %v710
    %v713 = vmul.f32 %v44, %v709
    %v714 = vmul.f32 %v707, %v709
    %v715 = vsub.f32 2.0, %v714
    %v716 = vmul.f32 %v713, %v715
    %v717 = vadd.f32 %v712, %v716
    %718 = vst [vmem:[#allocation2 + $0x42] sm:$0x2] %v717
    %v719 = vrcp.pop %v717
    %v720 = vrot.slane %v679, 3
    %v722 = vsub.f32 %v717, %v720
    %v723 = vmul.f32 %v44, %v719
    %v724 = vmul.f32 %v717, %v719
    %v725 = vsub.f32 2.0, %v724
    %v726 = vmul.f32 %v723, %v725
    %v727 = vadd.f32 %v722, %v726
    %728 = vst [vmem:[#allocation2 + $0x43] sm:$0x2] %v727
    %v729 = vrcp.pop %v727
    %v730 = vrot.slane %v679, 4
    %v732 = vsub.f32 %v727, %v730
    %v733 = vmul.f32 %v44, %v729
    %v734 = vmul.f32 %v727, %v729
    %v735 = vsub.f32 2.0, %v734
    %v736 = vmul.f32 %v733, %v735
    %v737 = vadd.f32 %v732, %v736
    %738 = vst [vmem:[#allocation2 + $0x44] sm:$0x2] %v737
    %v739 = vrcp.pop %v737
    %v740 = vrot.slane %v679, 5
    %v742 = vsub.f32 %v737, %v740
    %v743 = vmul.f32 %v44, %v739
    %v744 = vmul.f32 %v737, %v739
    %v745 = vsub.f32 2.0, %v744
    %v746 = vmul.f32 %v743, %v745
    %v747 = vadd.f32 %v742, %v746
    %748 = vst [vmem:[#allocation2 + $0x45] sm:$0x2] %v747
    %v749 = vrcp.pop %v747
    %v750 = vrot.slane %v679, 6
    %v752 = vsub.f32 %v747, %v750
    %v753 = vmul.f32 %v44, %v749
    %v754 = vmul.f32 %v747, %v749
    %v755 = vsub.f32 2.0, %v754
    %v756 = vmul.f32 %v753, %v755
    %v757 = vadd.f32 %v752, %v756
    %758 = vst [vmem:[#allocation2 + $0x46] sm:$0x2] %v757
    %v759 = vld [vmem:[%s1 + $0x48] sm:$0xff]
    %v760 = vmul.f32 %v40, %v759
    %v761 = vrcp.pop %v757
    %v763 = vrot.slane %v760, 7
    %v765 = vsub.f32 %v757, %v763
    %v766 = vmul.f32 %v44, %v761
    %v767 = vmul.f32 %v757, %v761
    %v768 = vsub.f32 2.0, %v767
    %v769 = vmul.f32 %v766, %v768
    %v770 = vadd.f32 %v765, %v769
    %771 = vst [vmem:[#allocation2 + $0x47] sm:$0x2] %v770
    %v772 = vrcp.pop %v770
    %v773 = vsub.f32 %v770, %v760
    %v774 = vmul.f32 %v44, %v772
    %v775 = vmul.f32 %v770, %v772
    %v776 = vsub.f32 2.0, %v775
    %v777 = vmul.f32 %v774, %v776
    %v778 = vadd.f32 %v773, %v777
    %779 = vst [vmem:[#allocation2 + $0x48] sm:$0x2] %v778
    %v780 = vrcp.pop %v778
    %v781 = vrot.slane %v760, 1
    %v783 = vsub.f32 %v778, %v781
    %v784 = vmul.f32 %v44, %v780
    %v785 = vmul.f32 %v778, %v780
    %v786 = vsub.f32 2.0, %v785
    %v787 = vmul.f32 %v784, %v786
    %v788 = vadd.f32 %v783, %v787
    %789 = vst [vmem:[#allocation2 + $0x49] sm:$0x2] %v788
    %v790 = vrcp.pop %v788
    %v791 = vrot.slane %v760, 2
    %v793 = vsub.f32 %v788, %v791
    %v794 = vmul.f32 %v44, %v790
    %v795 = vmul.f32 %v788, %v790
    %v796 = vsub.f32 2.0, %v795
    %v797 = vmul.f32 %v794, %v796
    %v798 = vadd.f32 %v793, %v797
    %799 = vst [vmem:[#allocation2 + $0x4a] sm:$0x2] %v798
    %v800 = vrcp.pop %v798
    %v801 = vrot.slane %v760, 3
    %v803 = vsub.f32 %v798, %v801
    %v804 = vmul.f32 %v44, %v800
    %v805 = vmul.f32 %v798, %v800
    %v806 = vsub.f32 2.0, %v805
    %v807 = vmul.f32 %v804, %v806
    %v808 = vadd.f32 %v803, %v807
    %809 = vst [vmem:[#allocation2 + $0x4b] sm:$0x2] %v808
    %v810 = vrcp.pop %v808
    %v811 = vrot.slane %v760, 4
    %v813 = vsub.f32 %v808, %v811
    %v814 = vmul.f32 %v44, %v810
    %v815 = vmul.f32 %v808, %v810
    %v816 = vsub.f32 2.0, %v815
    %v817 = vmul.f32 %v814, %v816
    %v818 = vadd.f32 %v813, %v817
    %819 = vst [vmem:[#allocation2 + $0x4c] sm:$0x2] %v818
    %v820 = vrcp.pop %v818
    %v821 = vrot.slane %v760, 5
    %v823 = vsub.f32 %v818, %v821
    %v824 = vmul.f32 %v44, %v820
    %v825 = vmul.f32 %v818, %v820
    %v826 = vsub.f32 2.0, %v825
    %v827 = vmul.f32 %v824, %v826
    %v828 = vadd.f32 %v823, %v827
    %829 = vst [vmem:[#allocation2 + $0x4d] sm:$0x2] %v828
    %v830 = vrcp.pop %v828
    %v831 = vrot.slane %v760, 6
    %v833 = vsub.f32 %v828, %v831
    %v834 = vmul.f32 %v44, %v830
    %v835 = vmul.f32 %v828, %v830
    %v836 = vsub.f32 2.0, %v835
    %v837 = vmul.f32 %v834, %v836
    %v838 = vadd.f32 %v833, %v837
    %839 = vst [vmem:[#allocation2 + $0x4e] sm:$0x2] %v838
    %v840 = vld [vmem:[%s1 + $0x50] sm:$0xff]
    %v841 = vmul.f32 %v40, %v840
    %v842 = vrcp.pop %v838
    %v844 = vrot.slane %v841, 7
    %v846 = vsub.f32 %v838, %v844
    %v847 = vmul.f32 %v44, %v842
    %v848 = vmul.f32 %v838, %v842
    %v849 = vsub.f32 2.0, %v848
    %v850 = vmul.f32 %v847, %v849
    %v851 = vadd.f32 %v846, %v850
    %852 = vst [vmem:[#allocation2 + $0x4f] sm:$0x2] %v851
    %v853 = vrcp.pop %v851
    %v854 = vsub.f32 %v851, %v841
    %v855 = vmul.f32 %v44, %v853
    %v856 = vmul.f32 %v851, %v853
    %v857 = vsub.f32 2.0, %v856
    %v858 = vmul.f32 %v855, %v857
    %v859 = vadd.f32 %v854, %v858
    %860 = vst [vmem:[#allocation2 + $0x50] sm:$0x2] %v859
    %v861 = vrcp.pop %v859
    %v862 = vrot.slane %v841, 1
    %v864 = vsub.f32 %v859, %v862
    %v865 = vmul.f32 %v44, %v861
    %v866 = vmul.f32 %v859, %v861
    %v867 = vsub.f32 2.0, %v866
    %v868 = vmul.f32 %v865, %v867
    %v869 = vadd.f32 %v864, %v868
    %870 = vst [vmem:[#allocation2 + $0x51] sm:$0x2] %v869
    %v871 = vrcp.pop %v869
    %v872 = vrot.slane %v841, 2
    %v874 = vsub.f32 %v869, %v872
    %v875 = vmul.f32 %v44, %v871
    %v876 = vmul.f32 %v869, %v871
    %v877 = vsub.f32 2.0, %v876
    %v878 = vmul.f32 %v875, %v877
    %v879 = vadd.f32 %v874, %v878
    %880 = vst [vmem:[#allocation2 + $0x52] sm:$0x2] %v879
    %v881 = vrcp.pop %v879
    %v882 = vrot.slane %v841, 3
    %v884 = vsub.f32 %v879, %v882
    %v885 = vmul.f32 %v44, %v881
    %v886 = vmul.f32 %v879, %v881
    %v887 = vsub.f32 2.0, %v886
    %v888 = vmul.f32 %v885, %v887
    %v889 = vadd.f32 %v884, %v888
    %890 = vst [vmem:[#allocation2 + $0x53] sm:$0x2] %v889
    %v891 = vrcp.pop %v889
    %v892 = vrot.slane %v841, 4
    %v894 = vsub.f32 %v889, %v892
    %v895 = vmul.f32 %v44, %v891
    %v896 = vmul.f32 %v889, %v891
    %v897 = vsub.f32 2.0, %v896
    %v898 = vmul.f32 %v895, %v897
    %v899 = vadd.f32 %v894, %v898
    %900 = vst [vmem:[#allocation2 + $0x54] sm:$0x2] %v899
    %v901 = vrcp.pop %v899
    %v902 = vrot.slane %v841, 5
    %v904 = vsub.f32 %v899, %v902
    %v905 = vmul.f32 %v44, %v901
    %v906 = vmul.f32 %v899, %v901
    %v907 = vsub.f32 2.0, %v906
    %v908 = vmul.f32 %v905, %v907
    %v909 = vadd.f32 %v904, %v908
    %910 = vst [vmem:[#allocation2 + $0x55] sm:$0x2] %v909
    %v911 = vrcp.pop %v909
    %v912 = vrot.slane %v841, 6
    %v914 = vsub.f32 %v909, %v912
    %v915 = vmul.f32 %v44, %v911
    %v916 = vmul.f32 %v909, %v911
    %v917 = vsub.f32 2.0, %v916
    %v918 = vmul.f32 %v915, %v917
    %v919 = vadd.f32 %v914, %v918
    %920 = vst [vmem:[#allocation2 + $0x56] sm:$0x2] %v919
    %v921 = vld [vmem:[%s1 + $0x58] sm:$0xff]
    %v922 = vmul.f32 %v40, %v921
    %v923 = vrcp.pop %v919
    %v925 = vrot.slane %v922, 7
    %v927 = vsub.f32 %v919, %v925
    %v928 = vmul.f32 %v44, %v923
    %v929 = vmul.f32 %v919, %v923
    %v930 = vsub.f32 2.0, %v929
    %v931 = vmul.f32 %v928, %v930
    %v932 = vadd.f32 %v927, %v931
    %933 = vst [vmem:[#allocation2 + $0x57] sm:$0x2] %v932
    %v934 = vrcp.pop %v932
    %v935 = vsub.f32 %v932, %v922
    %v936 = vmul.f32 %v44, %v934
    %v937 = vmul.f32 %v932, %v934
    %v938 = vsub.f32 2.0, %v937
    %v939 = vmul.f32 %v936, %v938
    %v940 = vadd.f32 %v935, %v939
    %941 = vst [vmem:[#allocation2 + $0x58] sm:$0x2] %v940
    %v942 = vrcp.pop %v940
    %v943 = vrot.slane %v922, 1
    %v945 = vsub.f32 %v940, %v943
    %v946 = vmul.f32 %v44, %v942
    %v947 = vmul.f32 %v940, %v942
    %v948 = vsub.f32 2.0, %v947
    %v949 = vmul.f32 %v946, %v948
    %v950 = vadd.f32 %v945, %v949
    %951 = vst [vmem:[#allocation2 + $0x59] sm:$0x2] %v950
    %v952 = vrcp.pop %v950
    %v953 = vrot.slane %v922, 2
    %v955 = vsub.f32 %v950, %v953
    %v956 = vmul.f32 %v44, %v952
    %v957 = vmul.f32 %v950, %v952
    %v958 = vsub.f32 2.0, %v957
    %v959 = vmul.f32 %v956, %v958
    %v960 = vadd.f32 %v955, %v959
    %961 = vst [vmem:[#allocation2 + $0x5a] sm:$0x2] %v960
    %v962 = vrcp.pop %v960
    %v963 = vrot.slane %v922, 3
    %v965 = vsub.f32 %v960, %v963
    %v966 = vmul.f32 %v44, %v962
    %v967 = vmul.f32 %v960, %v962
    %v968 = vsub.f32 2.0, %v967
    %v969 = vmul.f32 %v966, %v968
    %v970 = vadd.f32 %v965, %v969
    %971 = vst [vmem:[#allocation2 + $0x5b] sm:$0x2] %v970
    %v972 = vrcp.pop %v970
    %v973 = vrot.slane %v922, 4
    %v975 = vsub.f32 %v970, %v973
    %v976 = vmul.f32 %v44, %v972
    %v977 = vmul.f32 %v970, %v972
    %v978 = vsub.f32 2.0, %v977
    %v979 = vmul.f32 %v976, %v978
    %v980 = vadd.f32 %v975, %v979
    %981 = vst [vmem:[#allocation2 + $0x5c] sm:$0x2] %v980
    %v982 = vrcp.pop %v980
    %v983 = vrot.slane %v922, 5
    %v985 = vsub.f32 %v980, %v983
    %v986 = vmul.f32 %v44, %v982
    %v987 = vmul.f32 %v980, %v982
    %v988 = vsub.f32 2.0, %v987
    %v989 = vmul.f32 %v986, %v988
    %v990 = vadd.f32 %v985, %v989
    %991 = vst [vmem:[#allocation2 + $0x5d] sm:$0x2] %v990
    %v992 = vrcp.pop %v990
    %v993 = vrot.slane %v922, 6
    %v995 = vsub.f32 %v990, %v993
    %v996 = vmul.f32 %v44, %v992
    %v997 = vmul.f32 %v990, %v992
    %v998 = vsub.f32 2.0, %v997
    %v999 = vmul.f32 %v996, %v998
    %v1000 = vadd.f32 %v995, %v999
    %1001 = vst [vmem:[#allocation2 + $0x5e] sm:$0x2] %v1000
    %v1002 = vld [vmem:[%s1 + $0x60] sm:$0xff]
    %v1003 = vmul.f32 %v40, %v1002
    %v1004 = vrcp.pop %v1000
    %v1006 = vrot.slane %v1003, 7
    %v1008 = vsub.f32 %v1000, %v1006
    %v1009 = vmul.f32 %v44, %v1004
    %v1010 = vmul.f32 %v1000, %v1004
    %v1011 = vsub.f32 2.0, %v1010
    %v1012 = vmul.f32 %v1009, %v1011
    %v1013 = vadd.f32 %v1008, %v1012
    %1014 = vst [vmem:[#allocation2 + $0x5f] sm:$0x2] %v1013
    %v1015 = vrcp.pop %v1013
    %v1016 = vsub.f32 %v1013, %v1003
    %v1017 = vmul.f32 %v44, %v1015
    %v1018 = vmul.f32 %v1013, %v1015
    %v1019 = vsub.f32 2.0, %v1018
    %v1020 = vmul.f32 %v1017, %v1019
    %v1021 = vadd.f32 %v1016, %v1020
    %1022 = vst [vmem:[#allocation2 + $0x60] sm:$0x2] %v1021
    %v1023 = vrcp.pop %v1021
    %v1024 = vrot.slane %v1003, 1
    %v1026 = vsub.f32 %v1021, %v1024
    %v1027 = vmul.f32 %v44, %v1023
    %v1028 = vmul.f32 %v1021, %v1023
    %v1029 = vsub.f32 2.0, %v1028
    %v1030 = vmul.f32 %v1027, %v1029
    %v1031 = vadd.f32 %v1026, %v1030
    %1032 = vst [vmem:[#allocation2 + $0x61] sm:$0x2] %v1031
    %v1033 = vrcp.pop %v1031
    %v1034 = vrot.slane %v1003, 2
    %v1036 = vsub.f32 %v1031, %v1034
    %v1037 = vmul.f32 %v44, %v1033
    %v1038 = vmul.f32 %v1031, %v1033
    %v1039 = vsub.f32 2.0, %v1038
    %v1040 = vmul.f32 %v1037, %v1039
    %v1041 = vadd.f32 %v1036, %v1040
    %1042 = vst [vmem:[#allocation2 + $0x62] sm:$0x2] %v1041
    %v1043 = vrcp.pop %v1041
    %v1044 = vrot.slane %v1003, 3
    %v1046 = vsub.f32 %v1041, %v1044
    %v1047 = vmul.f32 %v44, %v1043
    %v1048 = vmul.f32 %v1041, %v1043
    %v1049 = vsub.f32 2.0, %v1048
    %v1050 = vmul.f32 %v1047, %v1049
    %v1051 = vadd.f32 %v1046, %v1050
    %1052 = vst [vmem:[#allocation2 + $0x63] sm:$0x2] %v1051
    %v1053 = vrcp.pop %v1051
    %v1054 = vrot.slane %v1003, 4
    %v1056 = vsub.f32 %v1051, %v1054
    %v1057 = vmul.f32 %v44, %v1053
    %v1058 = vmul.f32 %v1051, %v1053
    %v1059 = vsub.f32 2.0, %v1058
    %v1060 = vmul.f32 %v1057, %v1059
    %v1061 = vadd.f32 %v1056, %v1060
    %1062 = vst [vmem:[#allocation2 + $0x64] sm:$0x2] %v1061
    %v1063 = vrcp.pop %v1061
    %v1064 = vrot.slane %v1003, 5
    %v1066 = vsub.f32 %v1061, %v1064
    %v1067 = vmul.f32 %v44, %v1063
    %v1068 = vmul.f32 %v1061, %v1063
    %v1069 = vsub.f32 2.0, %v1068
    %v1070 = vmul.f32 %v1067, %v1069
    %v1071 = vadd.f32 %v1066, %v1070
    %1072 = vst [vmem:[#allocation2 + $0x65] sm:$0x2] %v1071
    %v1073 = vrcp.pop %v1071
    %v1074 = vrot.slane %v1003, 6
    %v1076 = vsub.f32 %v1071, %v1074
    %v1077 = vmul.f32 %v44, %v1073
    %v1078 = vmul.f32 %v1071, %v1073
    %v1079 = vsub.f32 2.0, %v1078
    %v1080 = vmul.f32 %v1077, %v1079
    %v1081 = vadd.f32 %v1076, %v1080
    %1082 = vst [vmem:[#allocation2 + $0x66] sm:$0x2] %v1081
    %v1083 = vld [vmem:[%s1 + $0x68] sm:$0xff]
    %v1084 = vmul.f32 %v40, %v1083
    %v1085 = vrcp.pop %v1081
    %v1087 = vrot.slane %v1084, 7
    %v1089 = vsub.f32 %v1081, %v1087
    %v1090 = vmul.f32 %v44, %v1085
    %v1091 = vmul.f32 %v1081, %v1085
    %v1092 = vsub.f32 2.0, %v1091
    %v1093 = vmul.f32 %v1090, %v1092
    %v1094 = vadd.f32 %v1089, %v1093
    %1095 = vst [vmem:[#allocation2 + $0x67] sm:$0x2] %v1094
    %v1096 = vrcp.pop %v1094
    %v1097 = vsub.f32 %v1094, %v1084
    %v1098 = vmul.f32 %v44, %v1096
    %v1099 = vmul.f32 %v1094, %v1096
    %v1100 = vsub.f32 2.0, %v1099
    %v1101 = vmul.f32 %v1098, %v1100
    %v1102 = vadd.f32 %v1097, %v1101
    %1103 = vst [vmem:[#allocation2 + $0x68] sm:$0x2] %v1102
    %v1104 = vrcp.pop %v1102
    %v1105 = vrot.slane %v1084, 1
    %v1107 = vsub.f32 %v1102, %v1105
    %v1108 = vmul.f32 %v44, %v1104
    %v1109 = vmul.f32 %v1102, %v1104
    %v1110 = vsub.f32 2.0, %v1109
    %v1111 = vmul.f32 %v1108, %v1110
    %v1112 = vadd.f32 %v1107, %v1111
    %1113 = vst [vmem:[#allocation2 + $0x69] sm:$0x2] %v1112
    %v1114 = vrcp.pop %v1112
    %v1115 = vrot.slane %v1084, 2
    %v1117 = vsub.f32 %v1112, %v1115
    %v1118 = vmul.f32 %v44, %v1114
    %v1119 = vmul.f32 %v1112, %v1114
    %v1120 = vsub.f32 2.0, %v1119
    %v1121 = vmul.f32 %v1118, %v1120
    %v1122 = vadd.f32 %v1117, %v1121
    %1123 = vst [vmem:[#allocation2 + $0x6a] sm:$0x2] %v1122
    %v1124 = vrcp.pop %v1122
    %v1125 = vrot.slane %v1084, 3
    %v1127 = vsub.f32 %v1122, %v1125
    %v1128 = vmul.f32 %v44, %v1124
    %v1129 = vmul.f32 %v1122, %v1124
    %v1130 = vsub.f32 2.0, %v1129
    %v1131 = vmul.f32 %v1128, %v1130
    %v1132 = vadd.f32 %v1127, %v1131
    %1133 = vst [vmem:[#allocation2 + $0x6b] sm:$0x2] %v1132
    %v1134 = vrcp.pop %v1132
    %v1135 = vrot.slane %v1084, 4
    %v1137 = vsub.f32 %v1132, %v1135
    %v1138 = vmul.f32 %v44, %v1134
    %v1139 = vmul.f32 %v1132, %v1134
    %v1140 = vsub.f32 2.0, %v1139
    %v1141 = vmul.f32 %v1138, %v1140
    %v1142 = vadd.f32 %v1137, %v1141
    %1143 = vst [vmem:[#allocation2 + $0x6c] sm:$0x2] %v1142
    %v1144 = vrcp.pop %v1142
    %v1145 = vrot.slane %v1084, 5
    %v1147 = vsub.f32 %v1142, %v1145
    %v1148 = vmul.f32 %v44, %v1144
    %v1149 = vmul.f32 %v1142, %v1144
    %v1150 = vsub.f32 2.0, %v1149
    %v1151 = vmul.f32 %v1148, %v1150
    %v1152 = vadd.f32 %v1147, %v1151
    %1153 = vst [vmem:[#allocation2 + $0x6d] sm:$0x2] %v1152
    %v1154 = vrcp.pop %v1152
    %v1155 = vrot.slane %v1084, 6
    %v1157 = vsub.f32 %v1152, %v1155
    %v1158 = vmul.f32 %v44, %v1154
    %v1159 = vmul.f32 %v1152, %v1154
    %v1160 = vsub.f32 2.0, %v1159
    %v1161 = vmul.f32 %v1158, %v1160
    %v1162 = vadd.f32 %v1157, %v1161
    %1163 = vst [vmem:[#allocation2 + $0x6e] sm:$0x2] %v1162
    %v1164 = vld [vmem:[%s1 + $0x70] sm:$0xff]
    %v1165 = vmul.f32 %v40, %v1164
    %v1166 = vrcp.pop %v1162
    %v1168 = vrot.slane %v1165, 7
    %v1170 = vsub.f32 %v1162, %v1168
    %v1171 = vmul.f32 %v44, %v1166
    %v1172 = vmul.f32 %v1162, %v1166
    %v1173 = vsub.f32 2.0, %v1172
    %v1174 = vmul.f32 %v1171, %v1173
    %v1175 = vadd.f32 %v1170, %v1174
    %1176 = vst [vmem:[#allocation2 + $0x6f] sm:$0x2] %v1175
    %v1177 = vrcp.pop %v1175
    %v1178 = vsub.f32 %v1175, %v1165
    %v1179 = vmul.f32 %v44, %v1177
    %v1180 = vmul.f32 %v1175, %v1177
    %v1181 = vsub.f32 2.0, %v1180
    %v1182 = vmul.f32 %v1179, %v1181
    %v1183 = vadd.f32 %v1178, %v1182
    %1184 = vst [vmem:[#allocation2 + $0x70] sm:$0x2] %v1183
    %v1185 = vrcp.pop %v1183
    %v1186 = vrot.slane %v1165, 1
    %v1188 = vsub.f32 %v1183, %v1186
    %v1189 = vmul.f32 %v44, %v1185
    %v1190 = vmul.f32 %v1183, %v1185
    %v1191 = vsub.f32 2.0, %v1190
    %v1192 = vmul.f32 %v1189, %v1191
    %v1193 = vadd.f32 %v1188, %v1192
    %1194 = vst [vmem:[#allocation2 + $0x71] sm:$0x2] %v1193
    %v1195 = vrcp.pop %v1193
    %v1196 = vrot.slane %v1165, 2
    %v1198 = vsub.f32 %v1193, %v1196
    %v1199 = vmul.f32 %v44, %v1195
    %v1200 = vmul.f32 %v1193, %v1195
    %v1201 = vsub.f32 2.0, %v1200
    %v1202 = vmul.f32 %v1199, %v1201
    %v1203 = vadd.f32 %v1198, %v1202
    %1204 = vst [vmem:[#allocation2 + $0x72] sm:$0x2] %v1203
    %v1205 = vrcp.pop %v1203
    %v1206 = vrot.slane %v1165, 3
    %v1208 = vsub.f32 %v1203, %v1206
    %v1209 = vmul.f32 %v44, %v1205
    %v1210 = vmul.f32 %v1203, %v1205
    %v1211 = vsub.f32 2.0, %v1210
    %v1212 = vmul.f32 %v1209, %v1211
    %v1213 = vadd.f32 %v1208, %v1212
    %1214 = vst [vmem:[#allocation2 + $0x73] sm:$0x2] %v1213
    %v1215 = vrcp.pop %v1213
    %v1216 = vrot.slane %v1165, 4
    %v1218 = vsub.f32 %v1213, %v1216
    %v1219 = vmul.f32 %v44, %v1215
    %v1220 = vmul.f32 %v1213, %v1215
    %v1221 = vsub.f32 2.0, %v1220
    %v1222 = vmul.f32 %v1219, %v1221
    %v1223 = vadd.f32 %v1218, %v1222
    %1224 = vst [vmem:[#allocation2 + $0x74] sm:$0x2] %v1223
    %v1225 = vrcp.pop %v1223
    %v1226 = vrot.slane %v1165, 5
    %v1228 = vsub.f32 %v1223, %v1226
    %v1229 = vmul.f32 %v44, %v1225
    %v1230 = vmul.f32 %v1223, %v1225
    %v1231 = vsub.f32 2.0, %v1230
    %v1232 = vmul.f32 %v1229, %v1231
    %v1233 = vadd.f32 %v1228, %v1232
    %1234 = vst [vmem:[#allocation2 + $0x75] sm:$0x2] %v1233
    %v1235 = vrcp.pop %v1233
    %v1236 = vrot.slane %v1165, 6
    %v1238 = vsub.f32 %v1233, %v1236
    %v1239 = vmul.f32 %v44, %v1235
    %v1240 = vmul.f32 %v1233, %v1235
    %v1241 = vsub.f32 2.0, %v1240
    %v1242 = vmul.f32 %v1239, %v1241
    %v1243 = vadd.f32 %v1238, %v1242
    %1244 = vst [vmem:[#allocation2 + $0x76] sm:$0x2] %v1243
    %v1245 = vld [vmem:[%s1 + $0x78] sm:$0xff]
    %v1246 = vmul.f32 %v40, %v1245
    %v1247 = vrcp.pop %v1243
    %v1249 = vrot.slane %v1246, 7
    %v1251 = vsub.f32 %v1243, %v1249
    %v1252 = vmul.f32 %v44, %v1247
    %v1253 = vmul.f32 %v1243, %v1247
    %v1254 = vsub.f32 2.0, %v1253
    %v1255 = vmul.f32 %v1252, %v1254
    %v1256 = vadd.f32 %v1251, %v1255
    %1257 = vst [vmem:[#allocation2 + $0x77] sm:$0x2] %v1256
    %v1258 = vrcp.pop %v1256
    %v1259 = vsub.f32 %v1256, %v1246
    %v1260 = vmul.f32 %v44, %v1258
    %v1261 = vmul.f32 %v1256, %v1258
    %v1262 = vsub.f32 2.0, %v1261
    %v1263 = vmul.f32 %v1260, %v1262
    %v1264 = vadd.f32 %v1259, %v1263
    %1265 = vst [vmem:[#allocation2 + $0x78] sm:$0x2] %v1264
    %v1266 = vrcp.pop %v1264
    %v1267 = vrot.slane %v1246, 1
    %v1269 = vsub.f32 %v1264, %v1267
    %v1270 = vmul.f32 %v44, %v1266
    %v1271 = vmul.f32 %v1264, %v1266
    %v1272 = vsub.f32 2.0, %v1271
    %v1273 = vmul.f32 %v1270, %v1272
    %v1274 = vadd.f32 %v1269, %v1273
    %1275 = vst [vmem:[#allocation2 + $0x79] sm:$0x2] %v1274
    %v1276 = vrcp.pop %v1274
    %v1277 = vrot.slane %v1246, 2
    %v1279 = vsub.f32 %v1274, %v1277
    %v1280 = vmul.f32 %v44, %v1276
    %v1281 = vmul.f32 %v1274, %v1276
    %v1282 = vsub.f32 2.0, %v1281
    %v1283 = vmul.f32 %v1280, %v1282
    %v1284 = vadd.f32 %v1279, %v1283
    %1285 = vst [vmem:[#allocation2 + $0x7a] sm:$0x2] %v1284
    %v1286 = vrcp.pop %v1284
    %v1287 = vrot.slane %v1246, 3
    %v1289 = vsub.f32 %v1284, %v1287
    %v1290 = vmul.f32 %v44, %v1286
    %v1291 = vmul.f32 %v1284, %v1286
    %v1292 = vsub.f32 2.0, %v1291
    %v1293 = vmul.f32 %v1290, %v1292
    %v1294 = vadd.f32 %v1289, %v1293
    %1295 = vst [vmem:[#allocation2 + $0x7b] sm:$0x2] %v1294
    %v1296 = vrcp.pop %v1294
    %v1297 = vrot.slane %v1246, 4
    %v1299 = vsub.f32 %v1294, %v1297
    %v1300 = vmul.f32 %v44, %v1296
    %v1301 = vmul.f32 %v1294, %v1296
    %v1302 = vsub.f32 2.0, %v1301
    %v1303 = vmul.f32 %v1300, %v1302
    %v1304 = vadd.f32 %v1299, %v1303
    %1305 = vst [vmem:[#allocation2 + $0x7c] sm:$0x2] %v1304
    %v1306 = vrcp.pop %v1304
    %v1307 = vrot.slane %v1246, 5
    %v1309 = vsub.f32 %v1304, %v1307
    %v1310 = vmul.f32 %v44, %v1306
    %v1311 = vmul.f32 %v1304, %v1306
    %v1312 = vsub.f32 2.0, %v1311
    %v1313 = vmul.f32 %v1310, %v1312
    %v1314 = vadd.f32 %v1309, %v1313
    %1315 = vst [vmem:[#allocation2 + $0x7d] sm:$0x2] %v1314
    %v1316 = vrcp.pop %v1314
    %v1317 = vrot.slane %v1246, 6
    %v1319 = vsub.f32 %v1314, %v1317
    %v1320 = vmul.f32 %v44, %v1316
    %v1321 = vmul.f32 %v1314, %v1316
    %v1322 = vsub.f32 2.0, %v1321
    %v1323 = vmul.f32 %v1320, %v1322
    %v1324 = vadd.f32 %v1319, %v1323
    %1325 = vst [vmem:[#allocation2 + $0x7e] sm:$0x2] %v1324
    %v1326 = vld [vmem:[%s2] sm:$0xff]
    %v1327 = vld [vmem:[%s2 + $0x8] sm:$0xff]
    %v1328 = vld [vmem:[#allocation2] sm:$0xff]
    %v1329 = vld [vmem:[#allocation2 + $0x8] sm:$0xff]
    %v1330 = vld [vmem:[#allocation2 + $0x10] sm:$0xff]
    %v1331 = vld [vmem:[#allocation2 + $0x18] sm:$0xff]
    %v1332 = vld [vmem:[#allocation2 + $0x20] sm:$0xff]
    %v1333 = vld [vmem:[#allocation2 + $0x28] sm:$0xff]
    %v1334 = vld [vmem:[#allocation2 + $0x30] sm:$0xff]
    %v1335 = vld [vmem:[#allocation2 + $0x38] sm:$0xff]
    %v1336 = vld [vmem:[#allocation2 + $0x40] sm:$0xff]
    %v1337 = vld [vmem:[#allocation2 + $0x48] sm:$0xff]
    %v1338 = vld [vmem:[#allocation2 + $0x50] sm:$0xff]
    %v1339 = vld [vmem:[#allocation2 + $0x58] sm:$0xff]
    %v1340 = vld [vmem:[#allocation2 + $0x60] sm:$0xff]
    %v1341 = vld [vmem:[#allocation2 + $0x68] sm:$0xff]
    %v1342 = vld [vmem:[#allocation2 + $0x70] sm:$0xff]
    %v1343 = vld [vmem:[#allocation2 + $0x78] sm:$0xff]
    %v1344 = vld [vmem:[%s3] sm:$0xff]
    %v1345 = vld [vmem:[%s3 + $0x8] sm:$0xff]
    %1347 = vset.pattern.permute.xlu0 0
    %1348 = vperm.xlu0 %1347, %v1344
    %v1349 = vpop.permute.xlu0 %1348
    %1352 = vset.pattern.permute.xlu0 0
    %1353 = vperm.xlu0 %1352, %v1345
    %v1354 = vpop.permute.xlu0 %1353
    %1356 = vmatpush.msra.mxu0 %v1343
    %1357 = vmatpush.msra.mxu0 %v1342
    %1358 = vmatpush.msra.mxu0 %v1341
    %1359 = vmatpush.msra.mxu0 %v1340
    %1360 = vmatpush.msra.mxu0 %v1339
    %1361 = vmatpush.msra.mxu0 %v1338
    %1362 = vmatpush.msra.mxu0 %v1337
    %1363 = vmatpush.msra.mxu0 %v1336
    %1364 = vmatpush.msra.mxu0 %v1335
    %1365 = vmatpush.msra.mxu0 %v1334
    %1366 = vmatpush.msra.mxu0 %v1333
    %1367 = vmatpush.msra.mxu0 %v1332
    %1368 = vmatpush.msra.mxu0 %v1331
    %1369 = vmatpush.msra.mxu0 %v1330
    %1370 = vmatpush.msra.mxu0 %v1329
    %1371 = vmatpush.msra.mxu0 %v1328
    %1372 = vmatmul.f32.gmra.mxu0 %v1326
    %v1373 = vpop.f32.mrf.mxu0
    %v1374 = vadd.f32 %v1349, %v1373
    %1375 = vmatmul.f32.gmra.mxu0 %v1327
    %v1376 = vpop.f32.mrf.mxu0
    %v1377 = vadd.f32 %v1354, %v1376
    %1378 = vdwg.mxu0
    %v1379 = vxor.u32 %v1374, 2147483648
    %v1380 = vxor.u32 %v1377, 2147483648
    %v1381 = vmul.f32 %v1379, 1.442695
    %v1382 = vpow.pop %v1381
    %v1383 = vmul.f32 %v1380, 1.442695
    %v1384 = vpow.pop %v1383
    %v1385 = vadd.f32 %v1382, 1.0
    %v1386 = vadd.f32 %v1384, 1.0
    %v1387 = vrcp.pop %v1385
    %v1388 = vmul.f32 %v1385, %v1387
    %v1389 = vsub.f32 1.0, %v1388
    %v1390 = vmul.f32 %v1387, %v1389
    %v1391 = vadd.f32 %v1387, %v1390
    %vm1392 = vweird.f32 %v1385
    %vm1393 = vweird.f32 %v1387
    %vm1394 = vmor %vm1392, %vm1393
    %v1395 = vsel %vm1394, %v1387, %v1391
    %v1396 = vand.u32 2147483647, %v1385
    %vm1397 = vcmp.eq.f32.partialorder %v1396, 8.507059e+37
    %v1398 = vand.u32 %v1385, 2147483648
    %v1399 = vor.u32 1.1754944e-38, %v1398
    %v1400 = vsel %vm1397, %v1399, %v1395
    %v1401 = vmul.f32 1.0, %v1400
    %v1402 = vrcp.pop %v1386
    %v1403 = vmul.f32 %v1386, %v1402
    %v1404 = vsub.f32 1.0, %v1403
    %v1405 = vmul.f32 %v1402, %v1404
    %v1406 = vadd.f32 %v1402, %v1405
    %vm1407 = vweird.f32 %v1386
    %vm1408 = vweird.f32 %v1402
    %vm1409 = vmor %vm1407, %vm1408
    %v1410 = vsel %vm1409, %v1402, %v1406
    %v1411 = vand.u32 2147483647, %v1386
    %vm1412 = vcmp.eq.f32.partialorder %v1411, 8.507059e+37
    %v1413 = vand.u32 %v1386, 2147483648
    %v1414 = vor.u32 1.1754944e-38, %v1413
    %v1415 = vsel %vm1412, %v1414, %v1410
    %v1416 = vmul.f32 1.0, %v1415
    %v1417 = vld [vmem:[%s4] sm:$0xf]
    %v1418 = vld [vmem:[%s5] sm:$0xf]
    %1420 = vset.pattern.permute.xlu0 0
    %1421 = vperm.xlu0 %1420, %v1418
    %v1422 = vpop.permute.xlu0 %1421
    %vm1424 = vcmask 130048
    %v1426 = vsel %vm1424, %v1417, 0
    %1428 = vmatpush.msra.mxu0 0.0
    %1429 = vmatpush.msra.mxu0 0.0
    %1430 = vmatpush.msra.mxu0 0.0
    %1431 = vmatpush.msra.mxu0 0.0
    %1432 = vmatpush.msra.mxu0 0.0
    %1433 = vmatpush.msra.mxu0 0.0
    %1434 = vmatpush.msra.mxu0 0.0
    %1435 = vmatpush.msra.mxu0 0.0
    %1436 = vmatpush.msra.mxu0 0.0
    %1437 = vmatpush.msra.mxu0 0.0
    %1438 = vmatpush.msra.mxu0 0.0
    %1439 = vmatpush.msra.mxu0 0.0
    %1440 = vmatpush.msra.mxu0 0.0
    %1441 = vmatpush.msra.mxu0 0.0
    %1442 = vmatpush.msra.mxu0 %v1416
    %1443 = vmatpush.msra.mxu0 %v1401
    %1444 = vmatmul.f32.gmra.mxu0 %v1426
    %v1445 = vpop.f32.mrf.mxu0
    %v1446 = vadd.f32 %v1422, %v1445
    %1447 = vdwg.mxu0
    %1448 = vst [vmem:[%s6] sm:$0xf] %v1446
    // Predicated region
    $region30: #{net_forward.1} parent=1 // pred_check
      _
    $region31: #{net_forward.1} parent=1 // pred_check_branch
      %1450 = sbr.rel (0) target = $region33
    $region32: #{net_forward.1} parent=1 // pred_region
      _
    $region33: #{net_forward.1} parent=1 // pred_fallthru
      _
    // Predicated region
    $region34: #{net_forward.1} parent=1 // pred_check
      _
    $region35: #{net_forward.1} parent=1 // pred_check_branch
      %1452 = sbr.rel (0) target = $region37
    $region36: #{net_forward.1} parent=1 // pred_region
      _
    $region37: #{net_forward.1} parent=1 // pred_fallthru
      _
    %1453 = vsyncpa [#allocation4], 1

</llo_original>
